<compile_context>
chip_gen: v7x
topology: tpu7x:2x2x1
jax: 0.10.0
libtpu: 0.0.40
codegen_flags: <defaults>
</compile_context>

<pallas_src>
import functools
import math

import jax
import jax.numpy as jnp
from jax.experimental import pallas as pl
from jax.experimental.pallas import tpu as pltpu

_LANE = 128
_SUBLANE = 8
_H1 = 512   # fixed by the module definition
_H2 = 256   # fixed by the module definition
_HA = _H1 + _H2  # 768: fused stage-A width


def _round_up(n, m):
    return ((n + m - 1) // m) * m


def _cdiv(a, b):
    return -(-a // b)


def _gelu_erf(x):
    # PyTorch nn.GELU() default (exact, erf-based).
    return 0.5 * x * (1.0 + jax.lax.erf(x * (1.0 / math.sqrt(2.0))))


_GELU_C = math.sqrt(2.0 / math.pi)


def _gelu_tanh(x):
    # tanh approximation -> transcendental on the EUP slot.
    return 0.5 * x * (1.0 + jnp.tanh(_GELU_C * (x + 0.044715 * x * x * x)))


_GELU_FNS = {"tanh": _gelu_tanh, "erf": _gelu_erf}


# -----------------------------------------------------------------------------
# Kernel
# -----------------------------------------------------------------------------
def _head_kernel(
    x_ref,                     # [tb, tk]      (compute dtype)
    wa_ref, ba_ref,            # [tk, 768]     fused W1(BN-folded)|Wo1 ; bias [1,768] f32
    wb_ref, bb_ref,            # [512, 256]    W2(BN-folded)          ; bias [1,256] f32
    wcg_ref, wco_ref, bc_ref,  # [256, 128]x2  final projections      ; bias [1,128] f32
    out_ref,                   # [tb, 128] f32 packed logits|ordinal
    acc_ref,                   # [tb, 768] f32 stage-A accumulator (VMEM scratch)
    *, gelu,
):
    k = pl.program_id(1)

    @pl.when(k == 0)
    def _init():
        acc_ref[...] = jnp.zeros_like(acc_ref)

    # Stage A: one wide MXU contraction for both x-consuming layers,
    # streamed over the feature (K) axis, f32 accumulation.
    acc_ref[...] += jnp.dot(x_ref[...], wa_ref[...],
                            preferred_element_type=jnp.float32)

    @pl.when(k == pl.num_programs(1) - 1)
    def _finalize():
        a = gelu(acc_ref[...] + ba_ref[...])         # Dropout = identity in eval
        h1 = a[:, :_H1].astype(wb_ref.dtype)         # grade-branch hidden (512)
        o1 = a[:, _H1:].astype(wco_ref.dtype)        # ordinal-branch hidden (256)

        # Stage B: grade branch second layer (BN2 already folded).
        h2 = gelu(jnp.dot(h1, wb_ref[...], preferred_element_type=jnp.float32)
                  + bb_ref[...])
        h2 = h2.astype(wcg_ref.dtype)

        # Stage C: block-diagonal final projection as two dots summed
        # (no [tb,512] concat materialized in VMEM).
        out_ref[...] = (
            jnp.dot(h2, wcg_ref[...], preferred_element_type=jnp.float32)
            + jnp.dot(o1, wco_ref[...], preferred_element_type=jnp.float32)
            + bc_ref[...]
        )


# -----------------------------------------------------------------------------
# One-time weight pre-packing (hoisted out of the per-call path)
# -----------------------------------------------------------------------------
def prepack_params(params, num_grades=5, compute_dtype=jnp.bfloat16, eps=1e-5):
    ng = num_grades
    out_cols = ng + (ng - 1)
    assert out_cols <= _LANE, (
        f"packed output supports num_grades + num_grades-1 <= {_LANE} lanes "
        f"(num_grades <= 64); got num_grades={ng}")

    def bn_fold(gamma, beta, mean, var):
        s = gamma / jnp.sqrt(var + eps)
        return s, beta - mean * s

    s1, t1 = bn_fold(params["bn1_g"], params["bn1_b"], params["bn1_m"], params["bn1_v"])
    s2, t2 = bn_fold(params["bn2_g"], params["bn2_b"], params["bn2_m"], params["bn2_v"])

    w1f = params["w1"] * s1[None, :]
    b1f = params["b1"] * s1 + t1
    w2f = params["w2"] * s2[None, :]
    b2f = params["b2"] * s2 + t2

    F = params["w1"].shape[0]
    Fp = _round_up(F, _LANE)

    # Fused first layer for both branches: [F, 768]; zero-pad feature rows.
    wa = jnp.concatenate([w1f, params["wo1"]], axis=1)
    if Fp != F:
        wa = jnp.pad(wa, ((0, Fp - F), (0, 0)))
    ba = jnp.concatenate([b1f, params["bo1"]])[None, :].astype(jnp.float32)

    # Block-diagonal, lane-padded final projection split at the 256 boundary.
    wcg = jnp.zeros((_H2, _LANE), jnp.float32).at[:, :ng].set(params["w3"])
    wco = jnp.zeros((_H2, _LANE), jnp.float32).at[:, ng:out_cols].set(params["wo2"])
    bc = jnp.zeros((_LANE,), jnp.float32)
    bc = bc.at[:ng].set(params["b3"]).at[ng:out_cols].set(params["bo2"])[None, :]

    return {
        "wa": wa.astype(compute_dtype),
        "ba": ba,                                   # biases stay f32 (added post-accum)
        "wb": w2f.astype(compute_dtype),
        "bb": b2f[None, :].astype(jnp.float32),
        "wcg": wcg.astype(compute_dtype),
        "wco": wco.astype(compute_dtype),
        "bc": bc,
        "F": int(F),
        "Fp": int(Fp),
        "num_grades": int(ng),
        "dtype": compute_dtype,
    }


# -----------------------------------------------------------------------------
# Tiling heuristics
# -----------------------------------------------------------------------------
def _pick_tb(Bp):
    if Bp <= _SUBLANE:
        return _SUBLANE
    if Bp <= 512:
        # keep >=2 grid steps so both v7x TensorCores get work
        return max(_SUBLANE, _round_up(_cdiv(Bp, 2), _SUBLANE))
    # large batches: 256-row tiles amortize grid-step overhead / MXU fill-drain
    return 256


def _pick_tk(Fp):
    if Fp <= 1024:
        return Fp
    # largest multiple of 128 that divides Fp and is <= 1024 (128 always works)
    return max(t for t in range(_LANE, 1024 + 1, _LANE) if Fp % t == 0)


def _vmem_limit_bytes(tb, tk, k_tiles, itemsize):
    f32 = 4
    x_b = 2 * tb * tk * itemsize
    wa_b = (2 if k_tiles > 1 else 1) * tk * _HA * itemsize
    wres_b = 2 * (_H1 * _H2 + 2 * _H2 * _LANE) * itemsize   # x2 covers fallback 2-buf
    bias_b = (_HA + _H2 + _LANE) * f32
    out_b = 2 * tb * _LANE * f32
    acc_b = tb * _HA * f32
    need = x_b + wa_b + wres_b + bias_b + out_b + acc_b
    limit = int(need * 1.5) + 8 * 1024 * 1024
    try:
        cap = int(getattr(pltpu.get_tpu_info(), "vmem_capacity_bytes") * 3 // 4)
    except Exception:
        cap = 48 * 1024 * 1024                                # safe on every gen
    return max(16 * 1024 * 1024, min(limit, cap))


# -----------------------------------------------------------------------------
# Forward wrapper
# -----------------------------------------------------------------------------
def grade_consistency_head(x, packed, *, tb=None, gelu="tanh",
                           single_buffer_weights=True):
    """x: [B, F] float32.  packed: output of prepack_params (call once)."""
    B, F = x.shape
    assert F == packed["F"], f"feature dim mismatch: {F} vs {packed['F']}"
    ng = packed["num_grades"]
    out_cols = ng + (ng - 1)
    Fp = packed["Fp"]
    dt = packed["dtype"]
    gelu_fn = _GELU_FNS[gelu]

    tk = _pick_tk(Fp)
    k_tiles = Fp // tk

    # Pad batch only to a sublane multiple; ragged last tile is handled by the
    # grid (rows are independent, OOB output rows are discarded).
    Bp = _round_up(B, _SUBLANE)
    if tb is None:
        tb = _pick_tb(Bp)
    tb = max(_SUBLANE, _round_up(min(tb, Bp), _SUBLANE))
    grid_b = _cdiv(Bp, tb)

    x_p = x.astype(dt)
    if Fp != F or Bp != B:
        x_p = jnp.pad(x_p, ((0, Bp - B), (0, Fp - F)))

    wa, ba, wb, bb = packed["wa"], packed["ba"], packed["wb"], packed["bb"]
    wcg, wco, bc = packed["wcg"], packed["wco"], packed["bc"]

    kernel = functools.partial(_head_kernel, gelu=gelu_fn)
    out_shape = jax.ShapeDtypeStruct((Bp, _LANE), jnp.float32)
    vmem_limit = _vmem_limit_bytes(tb, tk, k_tiles, jnp.dtype(dt).itemsize)

    def _run(use_single_buffer):
        def resident(shape):
            # Constant block index across the whole grid -> 1 buffer is enough.
            if use_single_buffer:
                return pl.BlockSpec(shape, lambda i, k: (0, 0),
                                    pipeline_mode=pl.Buffered(1))
            return pl.BlockSpec(shape, lambda i, k: (0, 0))

        if k_tiles == 1 and use_single_buffer:
            wa_spec = pl.BlockSpec((tk, _HA), lambda i, k: (k, 0),
                                   pipeline_mode=pl.Buffered(1))
        else:
            wa_spec = pl.BlockSpec((tk, _HA), lambda i, k: (k, 0))

        in_specs = [
            pl.BlockSpec((tb, tk), lambda i, k: (i, k)),   # x: batch x K tiles
            wa_spec,
            resident((1, _HA)),
            resident((_H1, _H2)),
            resident((1, _H2)),
            resident((_H2, _LANE)),
            resident((_H2, _LANE)),
            resident((1, _LANE)),
        ]
        out_specs = pl.BlockSpec((tb, _LANE), lambda i, k: (i, 0))

        return pl.pallas_call(
            kernel,
            out_shape=out_shape,
            grid_spec=pltpu.PrefetchScalarGridSpec(
                num_scalar_prefetch=0,
                grid=(grid_b, k_tiles),
                in_specs=in_specs,
                out_specs=out_specs,
                scratch_shapes=[pltpu.VMEM((tb, _HA), jnp.float32)],
            ),
            compiler_params=pltpu.CompilerParams(
                dimension_semantics=("parallel", "arbitrary"),
                vmem_limit_bytes=vmem_limit,
            ),
        )(x_p, wa, ba, wb, bb, wcg, wco, bc)

    use_sb = single_buffer_weights and hasattr(pl, "Buffered")
    if use_sb:
        try:
            out = _run(True)
        except Exception:
            out = _run(False)   # older jax without pipeline_mode / Buffered(1)
    else:
        out = _run(False)

    logits = out[:B, :ng]
    ordinal = out[:B, ng:out_cols]
    return logits, ordinal


# -----------------------------------------------------------------------------
# Synthetic parameters + pure-JAX reference
# -----------------------------------------------------------------------------
def init_params(key, feature_dim, num_grades=5):
    """Deterministic synthetic parameters (PyTorch-like uniform fan-in init)."""
    ks = jax.random.split(key, 16)

    def lin(kw, kb, fan_in, fan_out):
        bound = 1.0 / math.sqrt(fan_in)
        w = jax.random.uniform(kw, (fan_in, fan_out), jnp.float32, -bound, bound)
        b = jax.random.uniform(kb, (fan_out,), jnp.float32, -bound, bound)
        return w, b

    p = {}
    p["w1"], p["b1"] = lin(ks[0], ks[1], feature_dim, _H1)
    p["w2"], p["b2"] = lin(ks[2], ks[3], _H1, _H2)
    p["w3"], p["b3"] = lin(ks[4], ks[5], _H2, num_grades)
    p["wo1"], p["bo1"] = lin(ks[6], ks[7], feature_dim, _H2)
    p["wo2"], p["bo2"] = lin(ks[8], ks[9], _H2, num_grades - 1)

    p["bn1_g"] = 1.0 + 0.1 * jax.random.normal(ks[10], (_H1,), jnp.float32)
    p["bn1_b"] = 0.1 * jax.random.normal(ks[11], (_H1,), jnp.float32)
    p["bn1_m"] = 0.05 * jax.random.normal(ks[12], (_H1,), jnp.float32)
    p["bn1_v"] = jnp.abs(1.0 + 0.1 * jax.random.normal(ks[13], (_H1,), jnp.float32))
    p["bn2_g"] = 1.0 + 0.1 * jax.random.normal(ks[14], (_H2,), jnp.float32)
    p["bn2_b"] = 0.1 * jax.random.normal(ks[15], (_H2,), jnp.float32)
    p["bn2_m"] = jnp.zeros((_H2,), jnp.float32)
    p["bn2_v"] = jnp.ones((_H2,), jnp.float32)
    return p


def _reference(x, params, num_grades=5, gelu=_gelu_erf, eps=1e-5):
    """Pure-JAX reference mirroring PyTorch eval-mode forward."""
    def bn(h, g, b, m, v):
        return (h - m) / jnp.sqrt(v + eps) * g + b

    h = x @ params["w1"] + params["b1"]
    h = bn(h, params["bn1_g"], params["bn1_b"], params["bn1_m"], params["bn1_v"])
    h = gelu(h)
    h = h @ params["w2"] + params["b2"]
    h = bn(h, params["bn2_g"], params["bn2_b"], params["bn2_m"], params["bn2_v"])
    h = gelu(h)
    logits = h @ params["w3"] + params["b3"]

    o = gelu(x @ params["wo1"] + params["bo1"])
    ordinal = o @ params["wo2"] + params["bo2"]
    return logits, ordinal


if __name__ == "__main__":
    B, F, NG = 16, 32, 5
    key = jax.random.PRNGKey(0)
    kx, kp = jax.random.split(key)
    x = jax.random.normal(kx, (B, F), jnp.float32)
    params = init_params(kp, F, NG)

    # 1) Structural check: f32 operands, tanh GELU both sides -> tight tolerance.
    packed_f32 = prepack_params(params, NG, compute_dtype=jnp.float32)
    l32, o32 = grade_consistency_head(x, packed_f32)
    (l32, o32) = jax.block_until_ready((l32, o32))
    ref_l_t, ref_o_t = _reference(x, params, NG, gelu=_gelu_tanh)
    assert l32.shape == (B, NG) and o32.shape == (B, NG - 1)
    assert jnp.allclose(l32, ref_l_t, atol=1e-4, rtol=1e-4)
    assert jnp.allclose(o32, ref_o_t, atol=1e-4, rtol=1e-4)

    # 2) Fast path: bf16 operands (f32 accumulation) + tanh GELU vs the
    #    PyTorch-exact (erf GELU) reference, with the documented looser tolerance.
    packed_bf16 = prepack_params(params, NG, compute_dtype=jnp.bfloat16)
    logits, ordinal = grade_consistency_head(x, packed_bf16)
    (logits, ordinal) = jax.block_until_ready((logits, ordinal))
    ref_l, ref_o = _reference(x, params, NG, gelu=_gelu_erf)
    assert logits.shape == (B, NG) and ordinal.shape == (B, NG - 1)
    assert jnp.allclose(logits, ref_l, atol=5e-2, rtol=5e-2)
    assert jnp.allclose(ordinal, ref_o, atol=5e-2, rtol=5e-2)

    print("KERNEL_OK")
</pallas_src>

<mosaic_0001>
module attributes {stable_mosaic.version = 11 : i64} {
  func.func @_head_kernel(%arg0: i32, %arg1: i32, %arg2: memref<8x128xf32, #tpu.memory_space<vmem>>, %arg3: memref<128x768xf32, #tpu.memory_space<vmem>>, %arg4: memref<1x768xf32, #tpu.memory_space<vmem>>, %arg5: memref<512x256xf32, #tpu.memory_space<vmem>>, %arg6: memref<1x256xf32, #tpu.memory_space<vmem>>, %arg7: memref<256x128xf32, #tpu.memory_space<vmem>>, %arg8: memref<256x128xf32, #tpu.memory_space<vmem>>, %arg9: memref<1x128xf32, #tpu.memory_space<vmem>>, %arg10: memref<8x128xf32, #tpu.memory_space<vmem>>, %arg11: memref<8x768xf32, #tpu.memory_space<vmem>>) attributes {dimension_semantics = [#tpu.dimension_semantics<parallel>, #tpu.dimension_semantics<arbitrary>], iteration_bounds = array<i64: 2, 1>, scalar_prefetch = 0 : i64, scratch_operands = 1 : i64, tpu.core_type = #tpu.core_type<tc>, window_params = [{transform_indices = @transform_0, window_bounds = array<i64: 8, 128>}, {pipeline_mode = #tpu.pipeline_mode<synchronous>, transform_indices = @transform_1, window_bounds = array<i64: 128, 768>}, {pipeline_mode = #tpu.pipeline_mode<synchronous>, transform_indices = @transform_2, window_bounds = array<i64: 1, 768>}, {pipeline_mode = #tpu.pipeline_mode<synchronous>, transform_indices = @transform_3, window_bounds = array<i64: 512, 256>}, {pipeline_mode = #tpu.pipeline_mode<synchronous>, transform_indices = @transform_4, window_bounds = array<i64: 1, 256>}, {pipeline_mode = #tpu.pipeline_mode<synchronous>, transform_indices = @transform_5, window_bounds = array<i64: 256, 128>}, {pipeline_mode = #tpu.pipeline_mode<synchronous>, transform_indices = @transform_6, window_bounds = array<i64: 256, 128>}, {pipeline_mode = #tpu.pipeline_mode<synchronous>, transform_indices = @transform_7, window_bounds = array<i64: 1, 128>}, {transform_indices = @transform_8, window_bounds = array<i64: 8, 128>}]} {
    %c0_i32 = arith.constant 0 : i32
    %0 = arith.cmpi eq, %arg1, %c0_i32 : i32
    %1 = arith.extui %0 : i1 to i32
    %c0_i32_0 = arith.constant 0 : i32
    %2 = arith.cmpi ne, %1, %c0_i32_0 : i32
    scf.if %2 {
      %cst_10 = arith.constant 0.000000e+00 : f32
      %12 = vector.broadcast %cst_10 : f32 to vector<8x768xf32>
      %c0_11 = arith.constant 0 : index
      %c0_12 = arith.constant 0 : index
      %13 = vector.load %arg11[%c0_11, %c0_12] : memref<8x768xf32, #tpu.memory_space<vmem>>, vector<8x768xf32>
      tpu.vector_store %arg11[%c0_11, %c0_12], %12 {strides = array<i32>} : memref<8x768xf32, #tpu.memory_space<vmem>>, vector<8x768xf32>,
    } else {
    }
    %c0 = arith.constant 0 : index
    %c0_1 = arith.constant 0 : index
    %3 = vector.load %arg11[%c0, %c0_1] : memref<8x768xf32, #tpu.memory_space<vmem>>, vector<8x768xf32>
    %c0_2 = arith.constant 0 : index
    %c0_3 = arith.constant 0 : index
    %4 = vector.load %arg2[%c0_2, %c0_3] : memref<8x128xf32, #tpu.memory_space<vmem>>, vector<8x128xf32>
    %c0_4 = arith.constant 0 : index
    %c0_5 = arith.constant 0 : index
    %5 = vector.load %arg3[%c0_4, %c0_5] : memref<128x768xf32, #tpu.memory_space<vmem>>, vector<128x768xf32>
    %cst = arith.constant dense<0.000000e+00> : vector<8x768xf32>
    %6 = tpu.matmul %4, %5, %cst {dimension_numbers = #tpu.dot_dimension_numbers<[1], [0], [0], [1], [0, 0, 1, 1], [], []>} : vector<8x128xf32>, vector<128x768xf32>, vector<8x768xf32> -> vector<8x768xf32>
    %7 = arith.addf %3, %6 : vector<8x768xf32>
    %c0_6 = arith.constant 0 : index
    %c0_7 = arith.constant 0 : index
    %8 = vector.load %arg11[%c0_6, %c0_7] : memref<8x768xf32, #tpu.memory_space<vmem>>, vector<8x768xf32>
    tpu.vector_store %arg11[%c0_6, %c0_7], %7 {strides = array<i32>} : memref<8x768xf32, #tpu.memory_space<vmem>>, vector<8x768xf32>,
    %c0_i32_8 = arith.constant 0 : i32
    %9 = arith.cmpi eq, %arg1, %c0_i32_8 : i32
    %10 = arith.extui %9 : i1 to i32
    %c0_i32_9 = arith.constant 0 : i32
    %11 = arith.cmpi ne, %10, %c0_i32_9 : i32
    scf.if %11 {
      %c0_10 = arith.constant 0 : index
      %c0_11 = arith.constant 0 : index
      %12 = vector.load %arg11[%c0_10, %c0_11] : memref<8x768xf32, #tpu.memory_space<vmem>>, vector<8x768xf32>
      %c0_12 = arith.constant 0 : index
      %c0_13 = arith.constant 0 : index
      %13 = vector.load %arg4[%c0_12, %c0_13] : memref<1x768xf32, #tpu.memory_space<vmem>>, vector<1x768xf32>
      %14 = vector.broadcast %13 : vector<1x768xf32> to vector<8x768xf32>
      %15 = arith.addf %12, %14 : vector<8x768xf32>
      %cst_14 = arith.constant 5.000000e-01 : f32
      %16 = vector.broadcast %cst_14 : f32 to vector<8x768xf32>
      %17 = arith.mulf %16, %15 : vector<8x768xf32>
      %cst_15 = arith.constant 4.471500e-02 : f32
      %18 = vector.broadcast %cst_15 : f32 to vector<8x768xf32>
      %19 = arith.mulf %18, %15 : vector<8x768xf32>
      %20 = arith.mulf %19, %15 : vector<8x768xf32>
      %21 = arith.mulf %20, %15 : vector<8x768xf32>
      %22 = arith.addf %15, %21 : vector<8x768xf32>
      %cst_16 = arith.constant 0.797884583 : f32
      %23 = vector.broadcast %cst_16 : f32 to vector<8x768xf32>
      %24 = arith.mulf %23, %22 : vector<8x768xf32>
      %25 = math.tanh %24 : vector<8x768xf32>
      %cst_17 = arith.constant 1.000000e+00 : f32
      %26 = vector.broadcast %cst_17 : f32 to vector<8x768xf32>
      %27 = arith.addf %26, %25 : vector<8x768xf32>
      %28 = arith.mulf %17, %27 : vector<8x768xf32>
      %29 = vector.extract_strided_slice %28 {offsets = [0, 0], sizes = [8, 512], strides = [1, 1]} : vector<8x768xf32> to vector<8x512xf32>
      %30 = vector.extract_strided_slice %28 {offsets = [0, 512], sizes = [8, 256], strides = [1, 1]} : vector<8x768xf32> to vector<8x256xf32>
      %c0_18 = arith.constant 0 : index
      %c0_19 = arith.constant 0 : index
      %31 = vector.load %arg5[%c0_18, %c0_19] : memref<512x256xf32, #tpu.memory_space<vmem>>, vector<512x256xf32>
      %cst_20 = arith.constant dense<0.000000e+00> : vector<8x256xf32>
      %32 = tpu.matmul %29, %31, %cst_20 {dimension_numbers = #tpu.dot_dimension_numbers<[1], [0], [0], [1], [0, 0, 1, 1], [], []>} : vector<8x512xf32>, vector<512x256xf32>, vector<8x256xf32> -> vector<8x256xf32>
      %c0_21 = arith.constant 0 : index
      %c0_22 = arith.constant 0 : index
      %33 = vector.load %arg6[%c0_21, %c0_22] : memref<1x256xf32, #tpu.memory_space<vmem>>, vector<1x256xf32>
      %34 = vector.broadcast %33 : vector<1x256xf32> to vector<8x256xf32>
      %35 = arith.addf %32, %34 : vector<8x256xf32>
      %cst_23 = arith.constant 5.000000e-01 : f32
      %36 = vector.broadcast %cst_23 : f32 to vector<8x256xf32>
      %37 = arith.mulf %36, %35 : vector<8x256xf32>
      %cst_24 = arith.constant 4.471500e-02 : f32
      %38 = vector.broadcast %cst_24 : f32 to vector<8x256xf32>
      %39 = arith.mulf %38, %35 : vector<8x256xf32>
      %40 = arith.mulf %39, %35 : vector<8x256xf32>
      %41 = arith.mulf %40, %35 : vector<8x256xf32>
      %42 = arith.addf %35, %41 : vector<8x256xf32>
      %cst_25 = arith.constant 0.797884583 : f32
      %43 = vector.broadcast %cst_25 : f32 to vector<8x256xf32>
      %44 = arith.mulf %43, %42 : vector<8x256xf32>
      %45 = math.tanh %44 : vector<8x256xf32>
      %cst_26 = arith.constant 1.000000e+00 : f32
      %46 = vector.broadcast %cst_26 : f32 to vector<8x256xf32>
      %47 = arith.addf %46, %45 : vector<8x256xf32>
      %48 = arith.mulf %37, %47 : vector<8x256xf32>
      %c0_27 = arith.constant 0 : index
      %c0_28 = arith.constant 0 : index
      %49 = vector.load %arg7[%c0_27, %c0_28] : memref<256x128xf32, #tpu.memory_space<vmem>>, vector<256x128xf32>
      %cst_29 = arith.constant dense<0.000000e+00> : vector<8x128xf32>
      %50 = tpu.matmul %48, %49, %cst_29 {dimension_numbers = #tpu.dot_dimension_numbers<[1], [0], [0], [1], [0, 0, 1, 1], [], []>} : vector<8x256xf32>, vector<256x128xf32>, vector<8x128xf32> -> vector<8x128xf32>
      %c0_30 = arith.constant 0 : index
      %c0_31 = arith.constant 0 : index
      %51 = vector.load %arg8[%c0_30, %c0_31] : memref<256x128xf32, #tpu.memory_space<vmem>>, vector<256x128xf32>
      %cst_32 = arith.constant dense<0.000000e+00> : vector<8x128xf32>
      %52 = tpu.matmul %30, %51, %cst_32 {dimension_numbers = #tpu.dot_dimension_numbers<[1], [0], [0], [1], [0, 0, 1, 1], [], []>} : vector<8x256xf32>, vector<256x128xf32>, vector<8x128xf32> -> vector<8x128xf32>
      %53 = arith.addf %50, %52 : vector<8x128xf32>
      %c0_33 = arith.constant 0 : index
      %c0_34 = arith.constant 0 : index
      %54 = vector.load %arg9[%c0_33, %c0_34] : memref<1x128xf32, #tpu.memory_space<vmem>>, vector<1x128xf32>
      %55 = vector.broadcast %54 : vector<1x128xf32> to vector<8x128xf32>
      %56 = arith.addf %53, %55 : vector<8x128xf32>
      %c0_35 = arith.constant 0 : index
      %c0_36 = arith.constant 0 : index
      %57 = vector.load %arg10[%c0_35, %c0_36] : memref<8x128xf32, #tpu.memory_space<vmem>>, vector<8x128xf32>
      tpu.vector_store %arg10[%c0_35, %c0_36], %56 {strides = array<i32>} : memref<8x128xf32, #tpu.memory_space<vmem>>, vector<8x128xf32>,
    } else {
    }
    return
  }
  func.func @transform_0(%arg0: i32, %arg1: i32) -> (i32, i32) {
    %c0_i32 = arith.constant 0 : i32
    return %arg0, %arg1 : i32, i32
  }
  func.func @transform_1(%arg0: i32, %arg1: i32) -> (i32, i32) {
    %c0_i32 = arith.constant 0 : i32
    %c0_i32_0 = arith.constant 0 : i32
    return %arg1, %c0_i32 : i32, i32
  }
  func.func @transform_2(%arg0: i32, %arg1: i32) -> (i32, i32) {
    %c0_i32 = arith.constant 0 : i32
    %c0_i32_0 = arith.constant 0 : i32
    %c0_i32_1 = arith.constant 0 : i32
    return %c0_i32, %c0_i32_0 : i32, i32
  }
  func.func @transform_3(%arg0: i32, %arg1: i32) -> (i32, i32) {
    %c0_i32 = arith.constant 0 : i32
    %c0_i32_0 = arith.constant 0 : i32
    %c0_i32_1 = arith.constant 0 : i32
    return %c0_i32, %c0_i32_0 : i32, i32
  }
  func.func @transform_4(%arg0: i32, %arg1: i32) -> (i32, i32) {
    %c0_i32 = arith.constant 0 : i32
    %c0_i32_0 = arith.constant 0 : i32
    %c0_i32_1 = arith.constant 0 : i32
    return %c0_i32, %c0_i32_0 : i32, i32
  }
  func.func @transform_5(%arg0: i32, %arg1: i32) -> (i32, i32) {
    %c0_i32 = arith.constant 0 : i32
    %c0_i32_0 = arith.constant 0 : i32
    %c0_i32_1 = arith.constant 0 : i32
    return %c0_i32, %c0_i32_0 : i32, i32
  }
  func.func @transform_6(%arg0: i32, %arg1: i32) -> (i32, i32) {
    %c0_i32 = arith.constant 0 : i32
    %c0_i32_0 = arith.constant 0 : i32
    %c0_i32_1 = arith.constant 0 : i32
    return %c0_i32, %c0_i32_0 : i32, i32
  }
  func.func @transform_7(%arg0: i32, %arg1: i32) -> (i32, i32) {
    %c0_i32 = arith.constant 0 : i32
    %c0_i32_0 = arith.constant 0 : i32
    %c0_i32_1 = arith.constant 0 : i32
    return %c0_i32, %c0_i32_0 : i32, i32
  }
  func.func @transform_8(%arg0: i32, %arg1: i32) -> (i32, i32) {
    %c0_i32 = arith.constant 0 : i32
    %c0_i32_0 = arith.constant 0 : i32
    return %arg0, %c0_i32 : i32, i32
  }
}

module attributes {stable_mosaic.version = 11 : i64} {
  func.func @_head_kernel(%arg0: i32, %arg1: i32, %arg2: memref<8x128xf32, #tpu.memory_space<vmem>>, %arg3: memref<128x768xf32, #tpu.memory_space<vmem>>, %arg4: memref<1x768xf32, #tpu.memory_space<vmem>>, %arg5: memref<512x256xf32, #tpu.memory_space<vmem>>, %arg6: memref<1x256xf32, #tpu.memory_space<vmem>>, %arg7: memref<256x128xf32, #tpu.memory_space<vmem>>, %arg8: memref<256x128xf32, #tpu.memory_space<vmem>>, %arg9: memref<1x128xf32, #tpu.memory_space<vmem>>, %arg10: memref<8x128xf32, #tpu.memory_space<vmem>>, %arg11: memref<8x768xf32, #tpu.memory_space<vmem>>) attributes {dimension_semantics = [#tpu.dimension_semantics<parallel>, #tpu.dimension_semantics<arbitrary>], iteration_bounds = array<i64: 2, 1>, scalar_prefetch = 0 : i64, scratch_operands = 1 : i64, tpu.core_type = #tpu.core_type<tc>, window_params = [{transform_indices = @transform_0, window_bounds = array<i64: 8, 128>}, {transform_indices = @transform_1, window_bounds = array<i64: 128, 768>}, {pipeline_mode = #tpu.pipeline_mode<synchronous>, transform_indices = @transform_2, window_bounds = array<i64: 1, 768>}, {pipeline_mode = #tpu.pipeline_mode<synchronous>, transform_indices = @transform_3, window_bounds = array<i64: 512, 256>}, {pipeline_mode = #tpu.pipeline_mode<synchronous>, transform_indices = @transform_4, window_bounds = array<i64: 1, 256>}, {pipeline_mode = #tpu.pipeline_mode<synchronous>, transform_indices = @transform_5, window_bounds = array<i64: 256, 128>}, {pipeline_mode = #tpu.pipeline_mode<synchronous>, transform_indices = @transform_6, window_bounds = array<i64: 256, 128>}, {pipeline_mode = #tpu.pipeline_mode<synchronous>, transform_indices = @transform_7, window_bounds = array<i64: 1, 128>}, {transform_indices = @transform_8, window_bounds = array<i64: 8, 128>}]} {
    %c0_i32 = arith.constant 0 : i32
    %0 = arith.cmpi eq, %arg1, %c0_i32 : i32
    %1 = arith.extui %0 : i1 to i32
    %c0_i32_0 = arith.constant 0 : i32
    %2 = arith.cmpi ne, %1, %c0_i32_0 : i32
    scf.if %2 {
      %cst_10 = arith.constant 0.000000e+00 : f32
      %12 = vector.broadcast %cst_10 : f32 to vector<8x768xf32>
      %c0_11 = arith.constant 0 : index
      %c0_12 = arith.constant 0 : index
      %13 = vector.load %arg11[%c0_11, %c0_12] : memref<8x768xf32, #tpu.memory_space<vmem>>, vector<8x768xf32>
      tpu.vector_store %arg11[%c0_11, %c0_12], %12 {strides = array<i32>} : memref<8x768xf32, #tpu.memory_space<vmem>>, vector<8x768xf32>,
    } else {
    }
    %c0 = arith.constant 0 : index
    %c0_1 = arith.constant 0 : index
    %3 = vector.load %arg11[%c0, %c0_1] : memref<8x768xf32, #tpu.memory_space<vmem>>, vector<8x768xf32>
    %c0_2 = arith.constant 0 : index
    %c0_3 = arith.constant 0 : index
    %4 = vector.load %arg2[%c0_2, %c0_3] : memref<8x128xf32, #tpu.memory_space<vmem>>, vector<8x128xf32>
    %c0_4 = arith.constant 0 : index
    %c0_5 = arith.constant 0 : index
    %5 = vector.load %arg3[%c0_4, %c0_5] : memref<128x768xf32, #tpu.memory_space<vmem>>, vector<128x768xf32>
    %cst = arith.constant dense<0.000000e+00> : vector<8x768xf32>
    %6 = tpu.matmul %4, %5, %cst {dimension_numbers = #tpu.dot_dimension_numbers<[1], [0], [0], [1], [0, 0, 1, 1], [], []>} : vector<8x128xf32>, vector<128x768xf32>, vector<8x768xf32> -> vector<8x768xf32>
    %7 = arith.addf %3, %6 : vector<8x768xf32>
    %c0_6 = arith.constant 0 : index
    %c0_7 = arith.constant 0 : index
    %8 = vector.load %arg11[%c0_6, %c0_7] : memref<8x768xf32, #tpu.memory_space<vmem>>, vector<8x768xf32>
    tpu.vector_store %arg11[%c0_6, %c0_7], %7 {strides = array<i32>} : memref<8x768xf32, #tpu.memory_space<vmem>>, vector<8x768xf32>,
    %c0_i32_8 = arith.constant 0 : i32
    %9 = arith.cmpi eq, %arg1, %c0_i32_8 : i32
    %10 = arith.extui %9 : i1 to i32
    %c0_i32_9 = arith.constant 0 : i32
    %11 = arith.cmpi ne, %10, %c0_i32_9 : i32
    scf.if %11 {
      %c0_10 = arith.constant 0 : index
      %c0_11 = arith.constant 0 : index
      %12 = vector.load %arg11[%c0_10, %c0_11] : memref<8x768xf32, #tpu.memory_space<vmem>>, vector<8x768xf32>
      %c0_12 = arith.constant 0 : index
      %c0_13 = arith.constant 0 : index
      %13 = vector.load %arg4[%c0_12, %c0_13] : memref<1x768xf32, #tpu.memory_space<vmem>>, vector<1x768xf32>
      %14 = vector.broadcast %13 : vector<1x768xf32> to vector<8x768xf32>
      %15 = arith.addf %12, %14 : vector<8x768xf32>
      %cst_14 = arith.constant 5.000000e-01 : f32
      %16 = vector.broadcast %cst_14 : f32 to vector<8x768xf32>
      %17 = arith.mulf %16, %15 : vector<8x768xf32>
      %cst_15 = arith.constant 4.471500e-02 : f32
      %18 = vector.broadcast %cst_15 : f32 to vector<8x768xf32>
      %19 = arith.mulf %18, %15 : vector<8x768xf32>
      %20 = arith.mulf %19, %15 : vector<8x768xf32>
      %21 = arith.mulf %20, %15 : vector<8x768xf32>
      %22 = arith.addf %15, %21 : vector<8x768xf32>
      %cst_16 = arith.constant 0.797884583 : f32
      %23 = vector.broadcast %cst_16 : f32 to vector<8x768xf32>
      %24 = arith.mulf %23, %22 : vector<8x768xf32>
      %25 = math.tanh %24 : vector<8x768xf32>
      %cst_17 = arith.constant 1.000000e+00 : f32
      %26 = vector.broadcast %cst_17 : f32 to vector<8x768xf32>
      %27 = arith.addf %26, %25 : vector<8x768xf32>
      %28 = arith.mulf %17, %27 : vector<8x768xf32>
      %29 = vector.extract_strided_slice %28 {offsets = [0, 0], sizes = [8, 512], strides = [1, 1]} : vector<8x768xf32> to vector<8x512xf32>
      %30 = vector.extract_strided_slice %28 {offsets = [0, 512], sizes = [8, 256], strides = [1, 1]} : vector<8x768xf32> to vector<8x256xf32>
      %c0_18 = arith.constant 0 : index
      %c0_19 = arith.constant 0 : index
      %31 = vector.load %arg5[%c0_18, %c0_19] : memref<512x256xf32, #tpu.memory_space<vmem>>, vector<512x256xf32>
      %cst_20 = arith.constant dense<0.000000e+00> : vector<8x256xf32>
      %32 = tpu.matmul %29, %31, %cst_20 {dimension_numbers = #tpu.dot_dimension_numbers<[1], [0], [0], [1], [0, 0, 1, 1], [], []>} : vector<8x512xf32>, vector<512x256xf32>, vector<8x256xf32> -> vector<8x256xf32>
      %c0_21 = arith.constant 0 : index
      %c0_22 = arith.constant 0 : index
      %33 = vector.load %arg6[%c0_21, %c0_22] : memref<1x256xf32, #tpu.memory_space<vmem>>, vector<1x256xf32>
      %34 = vector.broadcast %33 : vector<1x256xf32> to vector<8x256xf32>
      %35 = arith.addf %32, %34 : vector<8x256xf32>
      %cst_23 = arith.constant 5.000000e-01 : f32
      %36 = vector.broadcast %cst_23 : f32 to vector<8x256xf32>
      %37 = arith.mulf %36, %35 : vector<8x256xf32>
      %cst_24 = arith.constant 4.471500e-02 : f32
      %38 = vector.broadcast %cst_24 : f32 to vector<8x256xf32>
      %39 = arith.mulf %38, %35 : vector<8x256xf32>
      %40 = arith.mulf %39, %35 : vector<8x256xf32>
      %41 = arith.mulf %40, %35 : vector<8x256xf32>
      %42 = arith.addf %35, %41 : vector<8x256xf32>
      %cst_25 = arith.constant 0.797884583 : f32
      %43 = vector.broadcast %cst_25 : f32 to vector<8x256xf32>
      %44 = arith.mulf %43, %42 : vector<8x256xf32>
      %45 = math.tanh %44 : vector<8x256xf32>
      %cst_26 = arith.constant 1.000000e+00 : f32
      %46 = vector.broadcast %cst_26 : f32 to vector<8x256xf32>
      %47 = arith.addf %46, %45 : vector<8x256xf32>
      %48 = arith.mulf %37, %47 : vector<8x256xf32>
      %c0_27 = arith.constant 0 : index
      %c0_28 = arith.constant 0 : index
      %49 = vector.load %arg7[%c0_27, %c0_28] : memref<256x128xf32, #tpu.memory_space<vmem>>, vector<256x128xf32>
      %cst_29 = arith.constant dense<0.000000e+00> : vector<8x128xf32>
      %50 = tpu.matmul %48, %49, %cst_29 {dimension_numbers = #tpu.dot_dimension_numbers<[1], [0], [0], [1], [0, 0, 1, 1], [], []>} : vector<8x256xf32>, vector<256x128xf32>, vector<8x128xf32> -> vector<8x128xf32>
      %c0_30 = arith.constant 0 : index
      %c0_31 = arith.constant 0 : index
      %51 = vector.load %arg8[%c0_30, %c0_31] : memref<256x128xf32, #tpu.memory_space<vmem>>, vector<256x128xf32>
      %cst_32 = arith.constant dense<0.000000e+00> : vector<8x128xf32>
      %52 = tpu.matmul %30, %51, %cst_32 {dimension_numbers = #tpu.dot_dimension_numbers<[1], [0], [0], [1], [0, 0, 1, 1], [], []>} : vector<8x256xf32>, vector<256x128xf32>, vector<8x128xf32> -> vector<8x128xf32>
      %53 = arith.addf %50, %52 : vector<8x128xf32>
      %c0_33 = arith.constant 0 : index
      %c0_34 = arith.constant 0 : index
      %54 = vector.load %arg9[%c0_33, %c0_34] : memref<1x128xf32, #tpu.memory_space<vmem>>, vector<1x128xf32>
      %55 = vector.broadcast %54 : vector<1x128xf32> to vector<8x128xf32>
      %56 = arith.addf %53, %55 : vector<8x128xf32>
      %c0_35 = arith.constant 0 : index
      %c0_36 = arith.constant 0 : index
      %57 = vector.load %arg10[%c0_35, %c0_36] : memref<8x128xf32, #tpu.memory_space<vmem>>, vector<8x128xf32>
      tpu.vector_store %arg10[%c0_35, %c0_36], %56 {strides = array<i32>} : memref<8x128xf32, #tpu.memory_space<vmem>>, vector<8x128xf32>,
    } else {
    }
    return
  }
  func.func @transform_0(%arg0: i32, %arg1: i32) -> (i32, i32) {
    %c0_i32 = arith.constant 0 : i32
    return %arg0, %arg1 : i32, i32
  }
  func.func @transform_1(%arg0: i32, %arg1: i32) -> (i32, i32) {
    %c0_i32 = arith.constant 0 : i32
    %c0_i32_0 = arith.constant 0 : i32
    return %arg1, %c0_i32 : i32, i32
  }
  func.func @transform_2(%arg0: i32, %arg1: i32) -> (i32, i32) {
    %c0_i32 = arith.constant 0 : i32
    %c0_i32_0 = arith.constant 0 : i32
    %c0_i32_1 = arith.constant 0 : i32
    return %c0_i32, %c0_i32_0 : i32, i32
  }
  func.func @transform_3(%arg0: i32, %arg1: i32) -> (i32, i32) {
    %c0_i32 = arith.constant 0 : i32
    %c0_i32_0 = arith.constant 0 : i32
    %c0_i32_1 = arith.constant 0 : i32
    return %c0_i32, %c0_i32_0 : i32, i32
  }
  func.func @transform_4(%arg0: i32, %arg1: i32) -> (i32, i32) {
    %c0_i32 = arith.constant 0 : i32
    %c0_i32_0 = arith.constant 0 : i32
    %c0_i32_1 = arith.constant 0 : i32
    return %c0_i32, %c0_i32_0 : i32, i32
  }
  func.func @transform_5(%arg0: i32, %arg1: i32) -> (i32, i32) {
    %c0_i32 = arith.constant 0 : i32
    %c0_i32_0 = arith.constant 0 : i32
    %c0_i32_1 = arith.constant 0 : i32
    return %c0_i32, %c0_i32_0 : i32, i32
  }
  func.func @transform_6(%arg0: i32, %arg1: i32) -> (i32, i32) {
    %c0_i32 = arith.constant 0 : i32
    %c0_i32_0 = arith.constant 0 : i32
    %c0_i32_1 = arith.constant 0 : i32
    return %c0_i32, %c0_i32_0 : i32, i32
  }
  func.func @transform_7(%arg0: i32, %arg1: i32) -> (i32, i32) {
    %c0_i32 = arith.constant 0 : i32
    %c0_i32_0 = arith.constant 0 : i32
    %c0_i32_1 = arith.constant 0 : i32
    return %c0_i32, %c0_i32_0 : i32, i32
  }
  func.func @transform_8(%arg0: i32, %arg1: i32) -> (i32, i32) {
    %c0_i32 = arith.constant 0 : i32
    %c0_i32_0 = arith.constant 0 : i32
    return %arg0, %c0_i32 : i32, i32
  }
}

</mosaic_0001>

<llo_original>
// kernel: tpu_custom_call.1
$region0: #{tpu_custom_call.1}
  #allocation0 [shape = 'u32[]', space=smem, size = 0x4, offset = 0x4, fixed_abs, tag = 'smem constant byte address 0x4 - core index']
  #allocation1 [shape = 'u32[144,128]{1,0:T(1,128)}', space=vmem, size = 0x12000, scoped, tag = 'internal scratch']
  #allocation2 [shape = 'f32[8,768]{1,0:T(8,128)}', space=vmem, size = 0x6000, scoped, tag = 'scratch operand']
  %s0 = inlined_call_operand.hbm [shape: f32[16,128], index: 0, kind: input, shape index: {}]
  %s1 = inlined_call_operand.hbm [shape: f32[128,768], index: 1, kind: input, shape index: {}]
  %s2 = inlined_call_operand.vmem [shape: f32[1,768], index: 2, kind: input, shape index: {}]
  %s3 = inlined_call_operand.hbm [shape: f32[512,256], index: 3, kind: input, shape index: {}]
  %s4 = inlined_call_operand.vmem [shape: f32[1,256], index: 4, kind: input, shape index: {}]
  %s5 = inlined_call_operand.hbm [shape: f32[256,128], index: 5, kind: input, shape index: {}]
  %s6 = inlined_call_operand.hbm [shape: f32[256,128], index: 6, kind: input, shape index: {}]
  %s7 = inlined_call_operand.vmem [shape: f32[1,128], index: 7, kind: input, shape index: {}]
  %s8 = inlined_call_operand.hbm [shape: f32[16,128], index: 8, kind: output, shape index: {}]
  %s9 = sld [smem:[#allocation0]]
  $region93: #{tpu_custom_call.1} parent=0
    _
  %s11 = ssub.s32 1, %s9
  %s12 = scalar_select 0, %s11, %s9
  $region1: #{tpu_custom_call.1} parent=0
    #allocation3 [shape = 'u8[8192]{0}', space=vmem, size = 0x2000, scoped, tag = 'input window, operand 0']
    #allocation4 [shape = 's32[2]{0}', space=sflag, size = 0x8, scoped, tag = 'scoped memory for tpu_custom_call.1']
    #allocation5 [shape = 's32[2]{0}', space=sflag, size = 0x8, scoped, tag = 'scoped memory for tpu_custom_call.1']
    #allocation6 [shape = 'u8[393216]{0}', space=vmem, size = 0x60000, scoped, tag = 'input window, operand 1, single buffered']
    #allocation7 [shape = 's32[1]{0}', space=sflag, size = 0x4, scoped, tag = 'scoped memory for tpu_custom_call.1']
    #allocation8 [shape = 'u8[524288]{0}', space=vmem, size = 0x80000, scoped, tag = 'input window, operand 3, single buffered']
    #allocation9 [shape = 'u8[131072]{0}', space=vmem, size = 0x20000, scoped, tag = 'input window, operand 5, single buffered']
    #allocation10 [shape = 's32[1]{0}', space=sflag, size = 0x4, scoped, tag = 'scoped memory for tpu_custom_call.1']
    #allocation11 [shape = 'u8[131072]{0}', space=vmem, size = 0x20000, scoped, tag = 'input window, operand 6, single buffered']
    #allocation12 [shape = 'u8[8192]{0}', space=vmem, size = 0x2000, scoped, tag = 'output window, operand 0']
    %13 = vsyncpa [#allocation4], 0
    %s14 = scalar_lea.sflag [#allocation4], 1
    %15 = vsyncpa %s14, 0
    %16 = vsyncpa [#allocation7], 0
    %17 = vsyncpa [#allocation10], 0
    %18 = vsyncpa [#allocation5], 0
    %s19 = scalar_lea.sflag [#allocation5], 1
    %20 = vsyncpa %s19, 0
    loop: start=0, step=1, limit=4
    $region2: #{tpu_custom_call.1} parent=1 // loop_pre_header
      _
    $region3: #{tpu_custom_call.1} parent=1 // loop_header
      %s22 = sphi 0, %s26
      %p23 = scmp.ge.s32.totalorder %s22, 4
      %s29 = sphi 0, %s41
      %s30 = sphi 0, %s37
      %s31 = sphi 0, %s29
      %s32 = sphi 0, %s30
      %s33 = sphi 0, %s31
      %s34 = sphi 0, %s32
      %s46 = sphi 0, %s48
      %s49 = sphi 0, %s46
      %s50 = sphi 0, %s49
      %s66 = sphi 0, %s50
      %s72 = sphi 0, %s74
      %s75 = sphi 0, %s72
      %s76 = sphi 0, %s75
      %s92 = sphi 0, %s76
      %s96 = sphi 0, %s96
      %s98 = sphi 0, %s96
      %s99 = sphi 0, %s98
      %s113 = sphi 0, %s99
      %s117 = sphi 0, %s117
      %s119 = sphi 0, %s117
      %s120 = sphi 0, %s119
      %s134 = sphi 0, %s120
      %s138 = sphi 0, %s138
      %s140 = sphi 0, %s138
      %s141 = sphi 0, %s140
      %s155 = sphi 0, %s141
      %s159 = sphi 0, %s159
      %s161 = sphi 0, %s159
      %s162 = sphi 0, %s161
      %s176 = sphi 0, %s162
      %s180 = sphi 0, %s180
      %s182 = sphi 0, %s180
      %s183 = sphi 0, %s182
      %s197 = sphi 0, %s183
      %s201 = sphi 0, %s201
      %s203 = sphi 0, %s201
      %s204 = sphi 0, %s203
      %s218 = sphi 0, %s204
      %s224 = sphi 0, %s226
      %s227 = sphi 0, %s224
      %s228 = sphi 0, %s227
      %s244 = sphi 0, %s228
    $region4: #{tpu_custom_call.1} parent=1 // loop_header_branch
      %25 = sbr.rel (%p23) target = $region8
    $region5: #{tpu_custom_call.1} parent=1 // loop_body
      %s27 = ssub.s32 %s22, 1
      %s28 = ssub.s32 %s22, 2
      %s35 = sadd.s32 1, %s30
      %p36 = scmp.ge.s32.totalorder %s35, 1
      %s37 = scalar_select %p36, 0, %s35
      %s38 = sadd.s32 1, %s29
      %s39 = scalar_select %p36, %s38, %s29
      %p40 = scmp.ge.s32.totalorder %s39, 2
      %s41 = scalar_select %p40, 0, %s39
      %s42 = ssub.s32 %s29, %s41
      %s43 = ssub.s32 %s30, %s37
      %s44 = sor.u32 %s42, %s43
      %p45 = scmp.eq.s32.totalorder %s44, 0
      %s47 = sadd.s32 %s46, 1
      %s48 = scalar_select %p45, %s46, %s47
      %p51 = pneg %p45
      %p52 = scmp.eq.s32.totalorder %s22, 1
      %p53 = por %p51, %p52
      %p54 = scmp.ne.s32.totalorder %s46, %s49
      %p55 = scmp.eq.s32.totalorder %s22, 0
      %p56 = por %p54, %p55
      %p57 = scmp.ne.s32.totalorder %s46, %s49
      %p58 = scmp.eq.s32.totalorder %s27, 1
      %p59 = por %p57, %p58
      %p60 = scmp.ne.s32.totalorder %s49, %s50
      %p61 = scmp.eq.s32.totalorder %s27, 0
      %p62 = por %p60, %p61
      %p63 = scmp.ne.s32.totalorder %s49, %s50
      %p64 = scmp.eq.s32.totalorder %s28, 1
      %p65 = por %p63, %p64
      %p67 = scmp.ne.s32.totalorder %s50, %s66
      %p68 = scmp.eq.s32.totalorder %s28, 0
      %p69 = por %p67, %p68
      %s70 = ssub.s32 %s30, %s37
      %p71 = scmp.eq.s32.totalorder %s70, 0
      %s73 = sadd.s32 %s72, 1
      %s74 = scalar_select %p71, %s72, %s73
      %p77 = pneg %p71
      %p78 = scmp.eq.s32.totalorder %s22, 1
      %p79 = por %p77, %p78
      %p80 = scmp.ne.s32.totalorder %s72, %s75
      %p81 = scmp.eq.s32.totalorder %s22, 0
      %p82 = por %p80, %p81
      %p83 = scmp.ne.s32.totalorder %s72, %s75
      %p84 = scmp.eq.s32.totalorder %s27, 1
      %p85 = por %p83, %p84
      %p86 = scmp.ne.s32.totalorder %s75, %s76
      %p87 = scmp.eq.s32.totalorder %s27, 0
      %p88 = por %p86, %p87
      %p89 = scmp.ne.s32.totalorder %s75, %s76
      %p90 = scmp.eq.s32.totalorder %s28, 1
      %p91 = por %p89, %p90
      %p93 = scmp.ne.s32.totalorder %s76, %s92
      %p94 = scmp.eq.s32.totalorder %s28, 0
      %p95 = por %p93, %p94
      %s97 = sadd.s32 %s96, 1
      %p100 = scmp.eq.s32.totalorder %s22, 1
      %p101 = scmp.ne.s32.totalorder %s96, %s98
      %p102 = scmp.eq.s32.totalorder %s22, 0
      %p103 = por %p101, %p102
      %p104 = scmp.ne.s32.totalorder %s96, %s98
      %p105 = scmp.eq.s32.totalorder %s27, 1
      %p106 = por %p104, %p105
      %p107 = scmp.ne.s32.totalorder %s98, %s99
      %p108 = scmp.eq.s32.totalorder %s27, 0
      %p109 = por %p107, %p108
      %p110 = scmp.ne.s32.totalorder %s98, %s99
      %p111 = scmp.eq.s32.totalorder %s28, 1
      %p112 = por %p110, %p111
      %p114 = scmp.ne.s32.totalorder %s99, %s113
      %p115 = scmp.eq.s32.totalorder %s28, 0
      %p116 = por %p114, %p115
      %s118 = sadd.s32 %s117, 1
      %p121 = scmp.eq.s32.totalorder %s22, 1
      %p122 = scmp.ne.s32.totalorder %s117, %s119
      %p123 = scmp.eq.s32.totalorder %s22, 0
      %p124 = por %p122, %p123
      %p125 = scmp.ne.s32.totalorder %s117, %s119
      %p126 = scmp.eq.s32.totalorder %s27, 1
      %p127 = por %p125, %p126
      %p128 = scmp.ne.s32.totalorder %s119, %s120
      %p129 = scmp.eq.s32.totalorder %s27, 0
      %p130 = por %p128, %p129
      %p131 = scmp.ne.s32.totalorder %s119, %s120
      %p132 = scmp.eq.s32.totalorder %s28, 1
      %p133 = por %p131, %p132
      %p135 = scmp.ne.s32.totalorder %s120, %s134
      %p136 = scmp.eq.s32.totalorder %s28, 0
      %p137 = por %p135, %p136
      %s139 = sadd.s32 %s138, 1
      %p142 = scmp.eq.s32.totalorder %s22, 1
      %p143 = scmp.ne.s32.totalorder %s138, %s140
      %p144 = scmp.eq.s32.totalorder %s22, 0
      %p145 = por %p143, %p144
      %p146 = scmp.ne.s32.totalorder %s138, %s140
      %p147 = scmp.eq.s32.totalorder %s27, 1
      %p148 = por %p146, %p147
      %p149 = scmp.ne.s32.totalorder %s140, %s141
      %p150 = scmp.eq.s32.totalorder %s27, 0
      %p151 = por %p149, %p150
      %p152 = scmp.ne.s32.totalorder %s140, %s141
      %p153 = scmp.eq.s32.totalorder %s28, 1
      %p154 = por %p152, %p153
      %p156 = scmp.ne.s32.totalorder %s141, %s155
      %p157 = scmp.eq.s32.totalorder %s28, 0
      %p158 = por %p156, %p157
      %s160 = sadd.s32 %s159, 1
      %p163 = scmp.eq.s32.totalorder %s22, 1
      %p164 = scmp.ne.s32.totalorder %s159, %s161
      %p165 = scmp.eq.s32.totalorder %s22, 0
      %p166 = por %p164, %p165
      %p167 = scmp.ne.s32.totalorder %s159, %s161
      %p168 = scmp.eq.s32.totalorder %s27, 1
      %p169 = por %p167, %p168
      %p170 = scmp.ne.s32.totalorder %s161, %s162
      %p171 = scmp.eq.s32.totalorder %s27, 0
      %p172 = por %p170, %p171
      %p173 = scmp.ne.s32.totalorder %s161, %s162
      %p174 = scmp.eq.s32.totalorder %s28, 1
      %p175 = por %p173, %p174
      %p177 = scmp.ne.s32.totalorder %s162, %s176
      %p178 = scmp.eq.s32.totalorder %s28, 0
      %p179 = por %p177, %p178
      %s181 = sadd.s32 %s180, 1
      %p184 = scmp.eq.s32.totalorder %s22, 1
      %p185 = scmp.ne.s32.totalorder %s180, %s182
      %p186 = scmp.eq.s32.totalorder %s22, 0
      %p187 = por %p185, %p186
      %p188 = scmp.ne.s32.totalorder %s180, %s182
      %p189 = scmp.eq.s32.totalorder %s27, 1
      %p190 = por %p188, %p189
      %p191 = scmp.ne.s32.totalorder %s182, %s183
      %p192 = scmp.eq.s32.totalorder %s27, 0
      %p193 = por %p191, %p192
      %p194 = scmp.ne.s32.totalorder %s182, %s183
      %p195 = scmp.eq.s32.totalorder %s28, 1
      %p196 = por %p194, %p195
      %p198 = scmp.ne.s32.totalorder %s183, %s197
      %p199 = scmp.eq.s32.totalorder %s28, 0
      %p200 = por %p198, %p199
      %s202 = sadd.s32 %s201, 1
      %p205 = scmp.eq.s32.totalorder %s22, 1
      %p206 = scmp.ne.s32.totalorder %s201, %s203
      %p207 = scmp.eq.s32.totalorder %s22, 0
      %p208 = por %p206, %p207
      %p209 = scmp.ne.s32.totalorder %s201, %s203
      %p210 = scmp.eq.s32.totalorder %s27, 1
      %p211 = por %p209, %p210
      %p212 = scmp.ne.s32.totalorder %s203, %s204
      %p213 = scmp.eq.s32.totalorder %s27, 0
      %p214 = por %p212, %p213
      %p215 = scmp.ne.s32.totalorder %s203, %s204
      %p216 = scmp.eq.s32.totalorder %s28, 1
      %p217 = por %p215, %p216
      %p219 = scmp.ne.s32.totalorder %s204, %s218
      %p220 = scmp.eq.s32.totalorder %s28, 0
      %p221 = por %p219, %p220
      %s222 = ssub.s32 %s29, %s41
      %p223 = scmp.eq.s32.totalorder %s222, 0
      %s225 = sadd.s32 %s224, 1
      %s226 = scalar_select %p223, %s224, %s225
      %p229 = pneg %p223
      %p230 = scmp.eq.s32.totalorder %s22, 1
      %p231 = por %p229, %p230
      %p232 = scmp.ne.s32.totalorder %s224, %s227
      %p233 = scmp.eq.s32.totalorder %s22, 0
      %p234 = por %p232, %p233
      %p235 = scmp.ne.s32.totalorder %s224, %s227
      %p236 = scmp.eq.s32.totalorder %s27, 1
      %p237 = por %p235, %p236
      %p238 = scmp.ne.s32.totalorder %s227, %s228
      %p239 = scmp.eq.s32.totalorder %s27, 0
      %p240 = por %p238, %p239
      %p241 = scmp.ne.s32.totalorder %s227, %s228
      %p242 = scmp.eq.s32.totalorder %s28, 1
      %p243 = por %p241, %p242
      %p245 = scmp.ne.s32.totalorder %s228, %s244
      %p246 = scmp.eq.s32.totalorder %s28, 0
      %p247 = por %p245, %p246
      %p248 = scmp.le.s32.totalorder 1, %s22
      %p249 = scmp.lt.s32.totalorder %s22, 3
      %p250 = pnand %p248, %p249
      %p251 = pneg %p250
      // Predicated region
      $region9: #{tpu_custom_call.1} parent=5 // pred_check
        _
      $region10: #{tpu_custom_call.1} parent=5 // pred_check_branch
        %253 = sbr.rel (%p250) target = $region12
      $region11: #{tpu_custom_call.1} parent=5 // pred_region
        %s254 = ssub.s32 %s22, 1
        // Predicated region
        $region13: #{tpu_custom_call.1} parent=11 // pred_check
          %p255 = pneg %p88
        $region14: #{tpu_custom_call.1} parent=11 // pred_check_branch
          %257 = sbr.rel (%p255) target = $region16
        $region15: #{tpu_custom_call.1} parent=11 // pred_region
          %s258 = smul.u32 16, %s32
          %s260 = ssub.s32 12288, 12288
          %261 = vsyncadd [#allocation7], %s260
          %s262 = smul.addr %s258, 6
          %s263 = smul.addr %s262, 128
          %s264 = scalar_lea.hbm %s1, %s263
          %s265 = sshll.u32 [#allocation6], 4
          %s266 = int_to_ptr.vmem [resolvable:$true] %s265
          %271 = dma.hbm_to_vmem [thread:$0]  %s264, 12288, %s266, [#allocation7], 768, 768, 48
        $region16: #{tpu_custom_call.1} parent=11 // pred_fallthru
          _
        // Predicated region
        $region17: #{tpu_custom_call.1} parent=11 // pred_check
          %p272 = pneg %p109
        $region18: #{tpu_custom_call.1} parent=11 // pred_check_branch
          %274 = sbr.rel (%p272) target = $region20
        $region19: #{tpu_custom_call.1} parent=11 // pred_region
          _
        $region20: #{tpu_custom_call.1} parent=11 // pred_fallthru
          _
        // Predicated region
        $region21: #{tpu_custom_call.1} parent=11 // pred_check
          %p275 = pneg %p130
        $region22: #{tpu_custom_call.1} parent=11 // pred_check_branch
          %277 = sbr.rel (%p275) target = $region24
        $region23: #{tpu_custom_call.1} parent=11 // pred_region
          %s279 = ssub.s32 16384, 16384
          %280 = vsyncadd [#allocation7], %s279
          %s281 = sshll.u32 [#allocation8], 4
          %s282 = int_to_ptr.vmem [resolvable:$true] %s281
          %287 = dma.hbm_to_vmem [thread:$0]  %s3, 16384, %s282, [#allocation7], 256, 256, 16
        $region24: #{tpu_custom_call.1} parent=11 // pred_fallthru
          _
        // Predicated region
        $region25: #{tpu_custom_call.1} parent=11 // pred_check
          %p288 = pneg %p151
        $region26: #{tpu_custom_call.1} parent=11 // pred_check_branch
          %290 = sbr.rel (%p288) target = $region28
        $region27: #{tpu_custom_call.1} parent=11 // pred_region
          _
        $region28: #{tpu_custom_call.1} parent=11 // pred_fallthru
          _
        // Predicated region
        $region29: #{tpu_custom_call.1} parent=11 // pred_check
          %p291 = pneg %p172
        $region30: #{tpu_custom_call.1} parent=11 // pred_check_branch
          %293 = sbr.rel (%p291) target = $region32
        $region31: #{tpu_custom_call.1} parent=11 // pred_region
          %s295 = ssub.s32 4096, 4096
          %296 = vsyncadd [#allocation10], %s295
          %s297 = sshll.u32 [#allocation9], 4
          %s298 = int_to_ptr.vmem [resolvable:$true] %s297
          %303 = dma.hbm_to_vmem [thread:$0]  %s5, 4096, %s298, [#allocation10], 128, 128, 8
        $region32: #{tpu_custom_call.1} parent=11 // pred_fallthru
          _
        // Predicated region
        $region33: #{tpu_custom_call.1} parent=11 // pred_check
          %p304 = pneg %p193
        $region34: #{tpu_custom_call.1} parent=11 // pred_check_branch
          %306 = sbr.rel (%p304) target = $region36
        $region35: #{tpu_custom_call.1} parent=11 // pred_region
          %s308 = ssub.s32 4096, 4096
          %309 = vsyncadd [#allocation10], %s308
          %s310 = sshll.u32 [#allocation11], 4
          %s311 = int_to_ptr.vmem [resolvable:$true] %s310
          %316 = dma.hbm_to_vmem [thread:$0]  %s6, 4096, %s311, [#allocation10], 128, 128, 8
        $region36: #{tpu_custom_call.1} parent=11 // pred_fallthru
          _
        // Predicated region
        $region37: #{tpu_custom_call.1} parent=11 // pred_check
          %p317 = pneg %p214
        $region38: #{tpu_custom_call.1} parent=11 // pred_check_branch
          %319 = sbr.rel (%p317) target = $region40
        $region39: #{tpu_custom_call.1} parent=11 // pred_region
          _
        $region40: #{tpu_custom_call.1} parent=11 // pred_fallthru
          _
      $region12: #{tpu_custom_call.1} parent=5 // pred_fallthru
        _
      %p320 = scmp.lt.s32.totalorder %s22, 2
      // Predicated region
      $region41: #{tpu_custom_call.1} parent=5 // pred_check
        %p321 = pneg %p320
      $region42: #{tpu_custom_call.1} parent=5 // pred_check_branch
        %323 = sbr.rel (%p321) target = $region44
      $region43: #{tpu_custom_call.1} parent=5 // pred_region
        // Predicated region
        $region45: #{tpu_custom_call.1} parent=43 // pred_check
          %p324 = pneg %p56
        $region46: #{tpu_custom_call.1} parent=43 // pred_check_branch
          %326 = sbr.rel (%p324) target = $region48
        $region47: #{tpu_custom_call.1} parent=43 // pred_region
          %s327 = sand.u32 %s46, 1
          %s328 = scalar_lea.sflag [#allocation4], %s327
          %s329 = sand.u32 %s46, 1
          %s330 = smul.addr %s329, 8
          %s331 = scalar_lea.vmem [#allocation3], %s330
          %s333 = ssub.s32 128, 128
          %334 = vsyncadd %s328, %s333
          %s335 = sadd.s32 %s30, %s29
          %s336 = smul.addr %s335, 128
          %s337 = scalar_lea.hbm %s0, %s336
          %s339 = sshll.u32 %s331, 4
          %s340 = int_to_ptr.vmem [resolvable:$true] %s339
          %342 = dma.hbm_to_vmem [thread:$0]  %s337, 128, %s340, %s328
        $region48: #{tpu_custom_call.1} parent=43 // pred_fallthru
          _
      $region44: #{tpu_custom_call.1} parent=5 // pred_fallthru
        _
      %p343 = scmp.le.s32.totalorder 1, %s22
      %p344 = scmp.lt.s32.totalorder %s22, 3
      %p345 = pnand %p343, %p344
      %p346 = pneg %p345
      // Predicated region
      $region49: #{tpu_custom_call.1} parent=5 // pred_check
        _
      $region50: #{tpu_custom_call.1} parent=5 // pred_check_branch
        %348 = sbr.rel (%p345) target = $region52
      $region51: #{tpu_custom_call.1} parent=5 // pred_region
        %s349 = ssub.s32 %s22, 1
        %s350 = sand.u32 %s49, 1
        %s351 = scalar_lea.sflag [#allocation4], %s350
        %s352 = sand.u32 %s49, 1
        %s353 = smul.addr %s352, 8
        %s354 = scalar_lea.vmem [#allocation3], %s353
        // Predicated region
        $region53: #{tpu_custom_call.1} parent=51 // pred_check
          %p355 = pneg %p62
        $region54: #{tpu_custom_call.1} parent=51 // pred_check_branch
          %357 = sbr.rel (%p355) target = $region56
        $region55: #{tpu_custom_call.1} parent=51 // pred_region
          %358 = dma.done %s351, 128
        $region56: #{tpu_custom_call.1} parent=51 // pred_fallthru
          _
        // Predicated region
        $region57: #{tpu_custom_call.1} parent=51 // pred_check
          %p359 = pneg %p88
        $region58: #{tpu_custom_call.1} parent=51 // pred_check_branch
          %361 = sbr.rel (%p359) target = $region60
        $region59: #{tpu_custom_call.1} parent=51 // pred_region
          %362 = dma.done [#allocation7], 12288
        $region60: #{tpu_custom_call.1} parent=51 // pred_fallthru
          _
        // Predicated region
        $region61: #{tpu_custom_call.1} parent=51 // pred_check
          %p363 = pneg %p130
        $region62: #{tpu_custom_call.1} parent=51 // pred_check_branch
          %365 = sbr.rel (%p363) target = $region64
        $region63: #{tpu_custom_call.1} parent=51 // pred_region
          %366 = dma.done [#allocation7], 16384
        $region64: #{tpu_custom_call.1} parent=51 // pred_fallthru
          _
        // Predicated region
        $region65: #{tpu_custom_call.1} parent=51 // pred_check
          %p367 = pneg %p172
        $region66: #{tpu_custom_call.1} parent=51 // pred_check_branch
          %369 = sbr.rel (%p367) target = $region68
        $region67: #{tpu_custom_call.1} parent=51 // pred_region
          %370 = dma.done [#allocation10], 4096
        $region68: #{tpu_custom_call.1} parent=51 // pred_fallthru
          _
        // Predicated region
        $region69: #{tpu_custom_call.1} parent=51 // pred_check
          %p371 = pneg %p193
        $region70: #{tpu_custom_call.1} parent=51 // pred_check_branch
          %373 = sbr.rel (%p371) target = $region72
        $region71: #{tpu_custom_call.1} parent=51 // pred_region
          %374 = dma.done [#allocation10], 4096
        $region72: #{tpu_custom_call.1} parent=51 // pred_fallthru
          _
        %s375 = sand.u32 %s49, 1
        %s376 = scalar_lea.sflag [#allocation4], %s375
        %s377 = sand.u32 %s49, 1
        %s378 = smul.addr %s377, 8
        %s379 = scalar_lea.vmem [#allocation3], %s378
        %p380 = pneg %p62
        %p381 = pneg %p59
        %p382 = pneg %p88
        %p383 = pneg %p85
        %p384 = pneg %p109
        %p385 = pneg %p106
        %p386 = pneg %p130
        %p387 = pneg %p127
        %p388 = pneg %p151
        %p389 = pneg %p148
        %p390 = pneg %p172
        %p391 = pneg %p169
        %p392 = pneg %p193
        %p393 = pneg %p190
        %p394 = pneg %p214
        %p395 = pneg %p211
        %p396 = pneg %p240
        %p397 = pneg %p237
        %s398 = sand.u32 %s227, 1
        %s399 = scalar_lea.sflag [#allocation5], %s398
        %s400 = sand.u32 %s227, 1
        %s401 = smul.addr %s400, 8
        %s402 = scalar_lea.vmem [#allocation12], %s401
        %s403 = smul.u32 16, %s32
        %p404 = scmp.eq.s32.totalorder %s32, 0
        // Predicated region
        $region73: #{tpu_custom_call.1} parent=51 // pred_check
          %p405 = pneg %p404
        $region74: #{tpu_custom_call.1} parent=51 // pred_check_branch
          %407 = sbr.rel (%p405) target = $region76
        $region75: #{tpu_custom_call.1} parent=51 // pred_region
          %408 = vst [vmem:[#allocation2] sm:$0xff] 0.0
          %409 = vst [vmem:[#allocation2 + $0x8] sm:$0xff] 0.0
          %410 = vst [vmem:[#allocation2 + $0x10] sm:$0xff] 0.0
          %411 = vst [vmem:[#allocation2 + $0x18] sm:$0xff] 0.0
          %412 = vst [vmem:[#allocation2 + $0x20] sm:$0xff] 0.0
          %413 = vst [vmem:[#allocation2 + $0x28] sm:$0xff] 0.0
        $region76: #{tpu_custom_call.1} parent=51 // pred_fallthru
          _
        %v414 = vld [vmem:[#allocation2] sm:$0xff]
        %v415 = vld [vmem:[#allocation2 + $0x8] sm:$0xff]
        %v416 = vld [vmem:[#allocation2 + $0x10] sm:$0xff]
        %v417 = vld [vmem:[#allocation2 + $0x18] sm:$0xff]
        %v418 = vld [vmem:[#allocation2 + $0x20] sm:$0xff]
        %v419 = vld [vmem:[#allocation2 + $0x28] sm:$0xff]
        %v420 = vld [vmem:[%s354] sm:$0xff]
        %v421 = vld [vmem:[#allocation6] sm:$0xff]
        %v422 = vld [vmem:[#allocation6 + $0x8] sm:$0xff]
        %v423 = vld [vmem:[#allocation6 + $0x10] sm:$0xff]
        %v424 = vld [vmem:[#allocation6 + $0x18] sm:$0xff]
        %v425 = vld [vmem:[#allocation6 + $0x20] sm:$0xff]
        %v426 = vld [vmem:[#allocation6 + $0x28] sm:$0xff]
        %v427 = vld [vmem:[#allocation6 + $0x30] sm:$0xff]
        %v428 = vld [vmem:[#allocation6 + $0x38] sm:$0xff]
        %v429 = vld [vmem:[#allocation6 + $0x40] sm:$0xff]
        %v430 = vld [vmem:[#allocation6 + $0x48] sm:$0xff]
        %v431 = vld [vmem:[#allocation6 + $0x50] sm:$0xff]
        %v432 = vld [vmem:[#allocation6 + $0x58] sm:$0xff]
        %v433 = vld [vmem:[#allocation6 + $0x60] sm:$0xff]
        %v434 = vld [vmem:[#allocation6 + $0x68] sm:$0xff]
        %v435 = vld [vmem:[#allocation6 + $0x70] sm:$0xff]
        %v436 = vld [vmem:[#allocation6 + $0x78] sm:$0xff]
        %v437 = vld [vmem:[#allocation6 + $0x80] sm:$0xff]
        %v438 = vld [vmem:[#allocation6 + $0x88] sm:$0xff]
        %v439 = vld [vmem:[#allocation6 + $0x90] sm:$0xff]
        %v440 = vld [vmem:[#allocation6 + $0x98] sm:$0xff]
        %v441 = vld [vmem:[#allocation6 + $0xa0] sm:$0xff]
        %v442 = vld [vmem:[#allocation6 + $0xa8] sm:$0xff]
        %v443 = vld [vmem:[#allocation6 + $0xb0] sm:$0xff]
        %v444 = vld [vmem:[#allocation6 + $0xb8] sm:$0xff]
        %v445 = vld [vmem:[#allocation6 + $0xc0] sm:$0xff]
        %v446 = vld [vmem:[#allocation6 + $0xc8] sm:$0xff]
        %v447 = vld [vmem:[#allocation6 + $0xd0] sm:$0xff]
        %v448 = vld [vmem:[#allocation6 + $0xd8] sm:$0xff]
        %v449 = vld [vmem:[#allocation6 + $0xe0] sm:$0xff]
        %v450 = vld [vmem:[#allocation6 + $0xe8] sm:$0xff]
        %v451 = vld [vmem:[#allocation6 + $0xf0] sm:$0xff]
        %v452 = vld [vmem:[#allocation6 + $0xf8] sm:$0xff]
        %v453 = vld [vmem:[#allocation6 + $0x100] sm:$0xff]
        %v454 = vld [vmem:[#allocation6 + $0x108] sm:$0xff]
        %v455 = vld [vmem:[#allocation6 + $0x110] sm:$0xff]
        %v456 = vld [vmem:[#allocation6 + $0x118] sm:$0xff]
        %v457 = vld [vmem:[#allocation6 + $0x120] sm:$0xff]
        %v458 = vld [vmem:[#allocation6 + $0x128] sm:$0xff]
        %v459 = vld [vmem:[#allocation6 + $0x130] sm:$0xff]
        %v460 = vld [vmem:[#allocation6 + $0x138] sm:$0xff]
        %v461 = vld [vmem:[#allocation6 + $0x140] sm:$0xff]
        %v462 = vld [vmem:[#allocation6 + $0x148] sm:$0xff]
        %v463 = vld [vmem:[#allocation6 + $0x150] sm:$0xff]
        %v464 = vld [vmem:[#allocation6 + $0x158] sm:$0xff]
        %v465 = vld [vmem:[#allocation6 + $0x160] sm:$0xff]
        %v466 = vld [vmem:[#allocation6 + $0x168] sm:$0xff]
        %v467 = vld [vmem:[#allocation6 + $0x170] sm:$0xff]
        %v468 = vld [vmem:[#allocation6 + $0x178] sm:$0xff]
        %v469 = vld [vmem:[#allocation6 + $0x180] sm:$0xff]
        %v470 = vld [vmem:[#allocation6 + $0x188] sm:$0xff]
        %v471 = vld [vmem:[#allocation6 + $0x190] sm:$0xff]
        %v472 = vld [vmem:[#allocation6 + $0x198] sm:$0xff]
        %v473 = vld [vmem:[#allocation6 + $0x1a0] sm:$0xff]
        %v474 = vld [vmem:[#allocation6 + $0x1a8] sm:$0xff]
        %v475 = vld [vmem:[#allocation6 + $0x1b0] sm:$0xff]
        %v476 = vld [vmem:[#allocation6 + $0x1b8] sm:$0xff]
        %v477 = vld [vmem:[#allocation6 + $0x1c0] sm:$0xff]
        %v478 = vld [vmem:[#allocation6 + $0x1c8] sm:$0xff]
        %v479 = vld [vmem:[#allocation6 + $0x1d0] sm:$0xff]
        %v480 = vld [vmem:[#allocation6 + $0x1d8] sm:$0xff]
        %v481 = vld [vmem:[#allocation6 + $0x1e0] sm:$0xff]
        %v482 = vld [vmem:[#allocation6 + $0x1e8] sm:$0xff]
        %v483 = vld [vmem:[#allocation6 + $0x1f0] sm:$0xff]
        %v484 = vld [vmem:[#allocation6 + $0x1f8] sm:$0xff]
        %v485 = vld [vmem:[#allocation6 + $0x200] sm:$0xff]
        %v486 = vld [vmem:[#allocation6 + $0x208] sm:$0xff]
        %v487 = vld [vmem:[#allocation6 + $0x210] sm:$0xff]
        %v488 = vld [vmem:[#allocation6 + $0x218] sm:$0xff]
        %v489 = vld [vmem:[#allocation6 + $0x220] sm:$0xff]
        %v490 = vld [vmem:[#allocation6 + $0x228] sm:$0xff]
        %v491 = vld [vmem:[#allocation6 + $0x230] sm:$0xff]
        %v492 = vld [vmem:[#allocation6 + $0x238] sm:$0xff]
        %v493 = vld [vmem:[#allocation6 + $0x240] sm:$0xff]
        %v494 = vld [vmem:[#allocation6 + $0x248] sm:$0xff]
        %v495 = vld [vmem:[#allocation6 + $0x250] sm:$0xff]
        %v496 = vld [vmem:[#allocation6 + $0x258] sm:$0xff]
        %v497 = vld [vmem:[#allocation6 + $0x260] sm:$0xff]
        %v498 = vld [vmem:[#allocation6 + $0x268] sm:$0xff]
        %v499 = vld [vmem:[#allocation6 + $0x270] sm:$0xff]
        %v500 = vld [vmem:[#allocation6 + $0x278] sm:$0xff]
        %v501 = vld [vmem:[#allocation6 + $0x280] sm:$0xff]
        %v502 = vld [vmem:[#allocation6 + $0x288] sm:$0xff]
        %v503 = vld [vmem:[#allocation6 + $0x290] sm:$0xff]
        %v504 = vld [vmem:[#allocation6 + $0x298] sm:$0xff]
        %v505 = vld [vmem:[#allocation6 + $0x2a0] sm:$0xff]
        %v506 = vld [vmem:[#allocation6 + $0x2a8] sm:$0xff]
        %v507 = vld [vmem:[#allocation6 + $0x2b0] sm:$0xff]
        %v508 = vld [vmem:[#allocation6 + $0x2b8] sm:$0xff]
        %v509 = vld [vmem:[#allocation6 + $0x2c0] sm:$0xff]
        %v510 = vld [vmem:[#allocation6 + $0x2c8] sm:$0xff]
        %v511 = vld [vmem:[#allocation6 + $0x2d0] sm:$0xff]
        %v512 = vld [vmem:[#allocation6 + $0x2d8] sm:$0xff]
        %v513 = vld [vmem:[#allocation6 + $0x2e0] sm:$0xff]
        %v514 = vld [vmem:[#allocation6 + $0x2e8] sm:$0xff]
        %v515 = vld [vmem:[#allocation6 + $0x2f0] sm:$0xff]
        %v516 = vld [vmem:[#allocation6 + $0x2f8] sm:$0xff]
        %517 = vmatprep.subr.mxu0 %v422
        %518 = vmatpush1.msra.mxu0 %v421
        %519 = vmatprep.subr.mxu0 %v428
        %520 = vmatpush1.msra.mxu0 %v427
        %521 = vmatprep.subr.mxu0 %v434
        %522 = vmatpush1.msra.mxu0 %v433
        %523 = vmatprep.subr.mxu0 %v440
        %524 = vmatpush1.msra.mxu0 %v439
        %525 = vmatprep.subr.mxu0 %v446
        %526 = vmatpush1.msra.mxu0 %v445
        %527 = vmatprep.subr.mxu0 %v452
        %528 = vmatpush1.msra.mxu0 %v451
        %529 = vmatprep.subr.mxu0 %v458
        %530 = vmatpush1.msra.mxu0 %v457
        %531 = vmatprep.subr.mxu0 %v464
        %532 = vmatpush1.msra.mxu0 %v463
        %533 = vmatprep.subr.mxu0 %v470
        %534 = vmatpush1.msra.mxu0 %v469
        %535 = vmatprep.subr.mxu0 %v476
        %536 = vmatpush1.msra.mxu0 %v475
        %537 = vmatprep.subr.mxu0 %v482
        %538 = vmatpush1.msra.mxu0 %v481
        %539 = vmatprep.subr.mxu0 %v488
        %540 = vmatpush1.msra.mxu0 %v487
        %541 = vmatprep.subr.mxu0 %v494
        %542 = vmatpush1.msra.mxu0 %v493
        %543 = vmatprep.subr.mxu0 %v500
        %544 = vmatpush1.msra.mxu0 %v499
        %545 = vmatprep.subr.mxu0 %v506
        %546 = vmatpush1.msra.mxu0 %v505
        %547 = vmatprep.subr.mxu0 %v512
        %548 = vmatpush1.msra.mxu0 %v511
        %549 = vmatprep.subr.mxu0 0.0
        %550 = vmatpush1.msra.mxu0 0.0
        %551 = vmatprep.subr.mxu0 0.0
        %552 = vmatpush1.msra.mxu0 0.0
        %553 = vmatprep.subr.mxu0 0.0
        %554 = vmatpush1.msra.mxu0 0.0
        %555 = vmatprep.subr.mxu0 0.0
        %556 = vmatpush1.msra.mxu0 0.0
        %557 = vmatprep.subr.mxu0 0.0
        %558 = vmatpush1.msra.mxu0 0.0
        %559 = vmatprep.subr.mxu0 0.0
        %560 = vmatpush1.msra.mxu0 0.0
        %561 = vmatprep.subr.mxu0 0.0
        %562 = vmatpush1.msra.mxu0 0.0
        %563 = vmatprep.subr.mxu0 0.0
        %564 = vmatpush1.msra.mxu0 0.0
        %565 = vmatprep.subr.mxu0 0.0
        %566 = vmatpush1.msra.mxu0 0.0
        %567 = vmatprep.subr.mxu0 0.0
        %568 = vmatpush1.msra.mxu0 0.0
        %569 = vmatprep.subr.mxu0 0.0
        %570 = vmatpush1.msra.mxu0 0.0
        %571 = vmatprep.subr.mxu0 0.0
        %572 = vmatpush1.msra.mxu0 0.0
        %573 = vmatprep.subr.mxu0 0.0
        %574 = vmatpush1.msra.mxu0 0.0
        %575 = vmatprep.subr.mxu0 0.0
        %576 = vmatpush1.msra.mxu0 0.0
        %577 = vmatprep.subr.mxu0 0.0
        %578 = vmatpush1.msra.mxu0 0.0
        %579 = vmatprep.subr.mxu0 0.0
        %580 = vmatpush1.msra.mxu0 0.0
        %581 = vmatprep.mubr.f32.mxu0 0.0
        %582 = vmatmul.mubr.f32.gmra.mrb[0].mxu0 %v420
        %v583 = vpop.f32.mrb[0].mxu0
        %v584 = vadd.f32 0.0, %v583
        %v585 = vpop.f32.mrb[0].mxu0
        %v586 = vadd.f32 0.0, %v585
        %587 = vdwg.mxu0
        %588 = vmatprep.subr.mxu0 %v424
        %589 = vmatpush1.msra.mxu0 %v423
        %590 = vmatprep.subr.mxu0 %v430
        %591 = vmatpush1.msra.mxu0 %v429
        %592 = vmatprep.subr.mxu0 %v436
        %593 = vmatpush1.msra.mxu0 %v435
        %594 = vmatprep.subr.mxu0 %v442
        %595 = vmatpush1.msra.mxu0 %v441
        %596 = vmatprep.subr.mxu0 %v448
        %597 = vmatpush1.msra.mxu0 %v447
        %598 = vmatprep.subr.mxu0 %v454
        %599 = vmatpush1.msra.mxu0 %v453
        %600 = vmatprep.subr.mxu0 %v460
        %601 = vmatpush1.msra.mxu0 %v459
        %602 = vmatprep.subr.mxu0 %v466
        %603 = vmatpush1.msra.mxu0 %v465
        %604 = vmatprep.subr.mxu0 %v472
        %605 = vmatpush1.msra.mxu0 %v471
        %606 = vmatprep.subr.mxu0 %v478
        %607 = vmatpush1.msra.mxu0 %v477
        %608 = vmatprep.subr.mxu0 %v484
        %609 = vmatpush1.msra.mxu0 %v483
        %610 = vmatprep.subr.mxu0 %v490
        %611 = vmatpush1.msra.mxu0 %v489
        %612 = vmatprep.subr.mxu0 %v496
        %613 = vmatpush1.msra.mxu0 %v495
        %614 = vmatprep.subr.mxu0 %v502
        %615 = vmatpush1.msra.mxu0 %v501
        %616 = vmatprep.subr.mxu0 %v508
        %617 = vmatpush1.msra.mxu0 %v507
        %618 = vmatprep.subr.mxu0 %v514
        %619 = vmatpush1.msra.mxu0 %v513
        %620 = vmatprep.subr.mxu0 0.0
        %621 = vmatpush1.msra.mxu0 0.0
        %622 = vmatprep.subr.mxu0 0.0
        %623 = vmatpush1.msra.mxu0 0.0
        %624 = vmatprep.subr.mxu0 0.0
        %625 = vmatpush1.msra.mxu0 0.0
        %626 = vmatprep.subr.mxu0 0.0
        %627 = vmatpush1.msra.mxu0 0.0
        %628 = vmatprep.subr.mxu0 0.0
        %629 = vmatpush1.msra.mxu0 0.0
        %630 = vmatprep.subr.mxu0 0.0
        %631 = vmatpush1.msra.mxu0 0.0
        %632 = vmatprep.subr.mxu0 0.0
        %633 = vmatpush1.msra.mxu0 0.0
        %634 = vmatprep.subr.mxu0 0.0
        %635 = vmatpush1.msra.mxu0 0.0
        %636 = vmatprep.subr.mxu0 0.0
        %637 = vmatpush1.msra.mxu0 0.0
        %638 = vmatprep.subr.mxu0 0.0
        %639 = vmatpush1.msra.mxu0 0.0
        %640 = vmatprep.subr.mxu0 0.0
        %641 = vmatpush1.msra.mxu0 0.0
        %642 = vmatprep.subr.mxu0 0.0
        %643 = vmatpush1.msra.mxu0 0.0
        %644 = vmatprep.subr.mxu0 0.0
        %645 = vmatpush1.msra.mxu0 0.0
        %646 = vmatprep.subr.mxu0 0.0
        %647 = vmatpush1.msra.mxu0 0.0
        %648 = vmatprep.subr.mxu0 0.0
        %649 = vmatpush1.msra.mxu0 0.0
        %650 = vmatprep.subr.mxu0 0.0
        %651 = vmatpush1.msra.mxu0 0.0
        %652 = vmatprep.mubr.f32.mxu0 0.0
        %653 = vmatmul.mubr.f32.gmra.mrb[0].mxu0 %v420
        %v654 = vpop.f32.mrb[0].mxu0
        %v655 = vadd.f32 0.0, %v654
        %v656 = vpop.f32.mrb[0].mxu0
        %v657 = vadd.f32 0.0, %v656
        %658 = vdwg.mxu0
        %659 = vmatprep.subr.mxu0 %v426
        %660 = vmatpush1.msra.mxu0 %v425
        %661 = vmatprep.subr.mxu0 %v432
        %662 = vmatpush1.msra.mxu0 %v431
        %663 = vmatprep.subr.mxu0 %v438
        %664 = vmatpush1.msra.mxu0 %v437
        %665 = vmatprep.subr.mxu0 %v444
        %666 = vmatpush1.msra.mxu0 %v443
        %667 = vmatprep.subr.mxu0 %v450
        %668 = vmatpush1.msra.mxu0 %v449
        %669 = vmatprep.subr.mxu0 %v456
        %670 = vmatpush1.msra.mxu0 %v455
        %671 = vmatprep.subr.mxu0 %v462
        %672 = vmatpush1.msra.mxu0 %v461
        %673 = vmatprep.subr.mxu0 %v468
        %674 = vmatpush1.msra.mxu0 %v467
        %675 = vmatprep.subr.mxu0 %v474
        %676 = vmatpush1.msra.mxu0 %v473
        %677 = vmatprep.subr.mxu0 %v480
        %678 = vmatpush1.msra.mxu0 %v479
        %679 = vmatprep.subr.mxu0 %v486
        %680 = vmatpush1.msra.mxu0 %v485
        %681 = vmatprep.subr.mxu0 %v492
        %682 = vmatpush1.msra.mxu0 %v491
        %683 = vmatprep.subr.mxu0 %v498
        %684 = vmatpush1.msra.mxu0 %v497
        %685 = vmatprep.subr.mxu0 %v504
        %686 = vmatpush1.msra.mxu0 %v503
        %687 = vmatprep.subr.mxu0 %v510
        %688 = vmatpush1.msra.mxu0 %v509
        %689 = vmatprep.subr.mxu0 %v516
        %690 = vmatpush1.msra.mxu0 %v515
        %691 = vmatprep.subr.mxu0 0.0
        %692 = vmatpush1.msra.mxu0 0.0
        %693 = vmatprep.subr.mxu0 0.0
        %694 = vmatpush1.msra.mxu0 0.0
        %695 = vmatprep.subr.mxu0 0.0
        %696 = vmatpush1.msra.mxu0 0.0
        %697 = vmatprep.subr.mxu0 0.0
        %698 = vmatpush1.msra.mxu0 0.0
        %699 = vmatprep.subr.mxu0 0.0
        %700 = vmatpush1.msra.mxu0 0.0
        %701 = vmatprep.subr.mxu0 0.0
        %702 = vmatpush1.msra.mxu0 0.0
        %703 = vmatprep.subr.mxu0 0.0
        %704 = vmatpush1.msra.mxu0 0.0
        %705 = vmatprep.subr.mxu0 0.0
        %706 = vmatpush1.msra.mxu0 0.0
        %707 = vmatprep.subr.mxu0 0.0
        %708 = vmatpush1.msra.mxu0 0.0
        %709 = vmatprep.subr.mxu0 0.0
        %710 = vmatpush1.msra.mxu0 0.0
        %711 = vmatprep.subr.mxu0 0.0
        %712 = vmatpush1.msra.mxu0 0.0
        %713 = vmatprep.subr.mxu0 0.0
        %714 = vmatpush1.msra.mxu0 0.0
        %715 = vmatprep.subr.mxu0 0.0
        %716 = vmatpush1.msra.mxu0 0.0
        %717 = vmatprep.subr.mxu0 0.0
        %718 = vmatpush1.msra.mxu0 0.0
        %719 = vmatprep.subr.mxu0 0.0
        %720 = vmatpush1.msra.mxu0 0.0
        %721 = vmatprep.subr.mxu0 0.0
        %722 = vmatpush1.msra.mxu0 0.0
        %723 = vmatprep.mubr.f32.mxu0 0.0
        %724 = vmatmul.mubr.f32.gmra.mrb[0].mxu0 %v420
        %v725 = vpop.f32.mrb[0].mxu0
        %v726 = vadd.f32 0.0, %v725
        %v727 = vpop.f32.mrb[0].mxu0
        %v728 = vadd.f32 0.0, %v727
        %729 = vdwg.mxu0
        %v730 = vadd.f32 %v414, %v584
        %v731 = vadd.f32 %v415, %v586
        %v732 = vadd.f32 %v416, %v655
        %v733 = vadd.f32 %v417, %v657
        %v734 = vadd.f32 %v418, %v726
        %v735 = vadd.f32 %v419, %v728
        %736 = vst [vmem:[#allocation2] sm:$0xff] %v730
        %737 = vst [vmem:[#allocation2 + $0x8] sm:$0xff] %v731
        %738 = vst [vmem:[#allocation2 + $0x10] sm:$0xff] %v732
        %739 = vst [vmem:[#allocation2 + $0x18] sm:$0xff] %v733
        %740 = vst [vmem:[#allocation2 + $0x20] sm:$0xff] %v734
        %741 = vst [vmem:[#allocation2 + $0x28] sm:$0xff] %v735
        // Predicated region
        $region77: #{tpu_custom_call.1} parent=51 // pred_check
          %p742 = pneg %p404
        $region78: #{tpu_custom_call.1} parent=51 // pred_check_branch
          %744 = sbr.rel (%p742) target = $region80
        $region79: #{tpu_custom_call.1} parent=51 // pred_region
          %v745 = vld [vmem:[#allocation2] sm:$0xff]
          %v746 = vld [vmem:[#allocation2 + $0x8] sm:$0xff]
          %v747 = vld [vmem:[#allocation2 + $0x10] sm:$0xff]
          %v748 = vld [vmem:[#allocation2 + $0x18] sm:$0xff]
          %v749 = vld [vmem:[#allocation2 + $0x20] sm:$0xff]
          %v750 = vld [vmem:[#allocation2 + $0x28] sm:$0xff]
          %v751 = vld [vmem:[%s2] sm:$0x3f]
          %v753 = vlaneseq
          %v754 = vshrl.u32 %v753, 7
          %v755 = vsub.s32 0, %v754
          %v756 = vrot.slane %v751, %v755
          %v757 = vlaneseq
          %v758 = vshrl.u32 %v757, 7
          %v759 = vsub.s32 1, %v758
          %v760 = vrot.slane %v751, %v759
          %v761 = vlaneseq
          %v762 = vshrl.u32 %v761, 7
          %v763 = vsub.s32 2, %v762
          %v764 = vrot.slane %v751, %v763
          %v765 = vlaneseq
          %v766 = vshrl.u32 %v765, 7
          %v767 = vsub.s32 3, %v766
          %v768 = vrot.slane %v751, %v767
          %v769 = vlaneseq
          %v770 = vshrl.u32 %v769, 7
          %v771 = vsub.s32 4, %v770
          %v772 = vrot.slane %v751, %v771
          %v773 = vlaneseq
          %v774 = vshrl.u32 %v773, 7
          %v775 = vsub.s32 5, %v774
          %v776 = vrot.slane %v751, %v775
          %v783 = vadd.f32 %v745, %v756
          %v784 = vadd.f32 %v746, %v760
          %v785 = vadd.f32 %v747, %v764
          %v786 = vadd.f32 %v748, %v768
          %v787 = vadd.f32 %v749, %v772
          %v788 = vadd.f32 %v750, %v776
          %v789 = vmul.f32 %v783, 0.5
          %v790 = vmul.f32 %v784, 0.5
          %v791 = vmul.f32 %v785, 0.5
          %v792 = vmul.f32 %v786, 0.5
          %v793 = vmul.f32 %v787, 0.5
          %v794 = vmul.f32 %v788, 0.5
          %v795 = vmul.f32 %v783, 0.044715
          %v796 = vmul.f32 %v784, 0.044715
          %v797 = vmul.f32 %v785, 0.044715
          %v798 = vmul.f32 %v786, 0.044715
          %v799 = vmul.f32 %v787, 0.044715
          %v800 = vmul.f32 %v788, 0.044715
          %v801 = vmul.f32 %v795, %v783
          %v802 = vmul.f32 %v796, %v784
          %v803 = vmul.f32 %v797, %v785
          %v804 = vmul.f32 %v798, %v786
          %v805 = vmul.f32 %v799, %v787
          %v806 = vmul.f32 %v800, %v788
          %v807 = vmul.f32 %v801, %v783
          %v808 = vmul.f32 %v802, %v784
          %v809 = vmul.f32 %v803, %v785
          %v810 = vmul.f32 %v804, %v786
          %v811 = vmul.f32 %v805, %v787
          %v812 = vmul.f32 %v806, %v788
          %v813 = vadd.f32 %v783, %v807
          %v814 = vadd.f32 %v784, %v808
          %v815 = vadd.f32 %v785, %v809
          %v816 = vadd.f32 %v786, %v810
          %v817 = vadd.f32 %v787, %v811
          %v818 = vadd.f32 %v788, %v812
          %v819 = vmul.f32 %v813, 0.7978846
          %v820 = vmul.f32 %v814, 0.7978846
          %v821 = vmul.f32 %v815, 0.7978846
          %v822 = vmul.f32 %v816, 0.7978846
          %v823 = vmul.f32 %v817, 0.7978846
          %v824 = vmul.f32 %v818, 0.7978846
          %v825 = vtanh.pop %v819
          %v826 = vtanh.pop %v820
          %v827 = vtanh.pop %v821
          %v828 = vtanh.pop %v822
          %v829 = vtanh.pop %v823
          %v830 = vtanh.pop %v824
          %v831 = vadd.f32 %v825, 1.0
          %v832 = vadd.f32 %v826, 1.0
          %v833 = vadd.f32 %v827, 1.0
          %v834 = vadd.f32 %v828, 1.0
          %v835 = vadd.f32 %v829, 1.0
          %v836 = vadd.f32 %v830, 1.0
          %v837 = vmul.f32 %v789, %v831
          %v838 = vmul.f32 %v790, %v832
          %v839 = vmul.f32 %v791, %v833
          %v840 = vmul.f32 %v792, %v834
          %v841 = vmul.f32 %v793, %v835
          %v842 = vmul.f32 %v794, %v836
          %v843 = vld [vmem:[#allocation8] sm:$0xff]
          %v844 = vld [vmem:[#allocation8 + $0x8] sm:$0xff]
          %v845 = vld [vmem:[#allocation8 + $0x10] sm:$0xff]
          %v846 = vld [vmem:[#allocation8 + $0x18] sm:$0xff]
          %v847 = vld [vmem:[#allocation8 + $0x20] sm:$0xff]
          %v848 = vld [vmem:[#allocation8 + $0x28] sm:$0xff]
          %v849 = vld [vmem:[#allocation8 + $0x30] sm:$0xff]
          %v850 = vld [vmem:[#allocation8 + $0x38] sm:$0xff]
          %v851 = vld [vmem:[#allocation8 + $0x40] sm:$0xff]
          %v852 = vld [vmem:[#allocation8 + $0x48] sm:$0xff]
          %v853 = vld [vmem:[#allocation8 + $0x50] sm:$0xff]
          %v854 = vld [vmem:[#allocation8 + $0x58] sm:$0xff]
          %v855 = vld [vmem:[#allocation8 + $0x60] sm:$0xff]
          %v856 = vld [vmem:[#allocation8 + $0x68] sm:$0xff]
          %v857 = vld [vmem:[#allocation8 + $0x70] sm:$0xff]
          %v858 = vld [vmem:[#allocation8 + $0x78] sm:$0xff]
          %v859 = vld [vmem:[#allocation8 + $0x80] sm:$0xff]
          %v860 = vld [vmem:[#allocation8 + $0x88] sm:$0xff]
          %v861 = vld [vmem:[#allocation8 + $0x90] sm:$0xff]
          %v862 = vld [vmem:[#allocation8 + $0x98] sm:$0xff]
          %v863 = vld [vmem:[#allocation8 + $0xa0] sm:$0xff]
          %v864 = vld [vmem:[#allocation8 + $0xa8] sm:$0xff]
          %v865 = vld [vmem:[#allocation8 + $0xb0] sm:$0xff]
          %v866 = vld [vmem:[#allocation8 + $0xb8] sm:$0xff]
          %v867 = vld [vmem:[#allocation8 + $0xc0] sm:$0xff]
          %v868 = vld [vmem:[#allocation8 + $0xc8] sm:$0xff]
          %v869 = vld [vmem:[#allocation8 + $0xd0] sm:$0xff]
          %v870 = vld [vmem:[#allocation8 + $0xd8] sm:$0xff]
          %v871 = vld [vmem:[#allocation8 + $0xe0] sm:$0xff]
          %v872 = vld [vmem:[#allocation8 + $0xe8] sm:$0xff]
          %v873 = vld [vmem:[#allocation8 + $0xf0] sm:$0xff]
          %v874 = vld [vmem:[#allocation8 + $0xf8] sm:$0xff]
          %v875 = vld [vmem:[#allocation8 + $0x100] sm:$0xff]
          %v876 = vld [vmem:[#allocation8 + $0x108] sm:$0xff]
          %v877 = vld [vmem:[#allocation8 + $0x110] sm:$0xff]
          %v878 = vld [vmem:[#allocation8 + $0x118] sm:$0xff]
          %v879 = vld [vmem:[#allocation8 + $0x120] sm:$0xff]
          %v880 = vld [vmem:[#allocation8 + $0x128] sm:$0xff]
          %v881 = vld [vmem:[#allocation8 + $0x130] sm:$0xff]
          %v882 = vld [vmem:[#allocation8 + $0x138] sm:$0xff]
          %v883 = vld [vmem:[#allocation8 + $0x140] sm:$0xff]
          %v884 = vld [vmem:[#allocation8 + $0x148] sm:$0xff]
          %v885 = vld [vmem:[#allocation8 + $0x150] sm:$0xff]
          %v886 = vld [vmem:[#allocation8 + $0x158] sm:$0xff]
          %v887 = vld [vmem:[#allocation8 + $0x160] sm:$0xff]
          %v888 = vld [vmem:[#allocation8 + $0x168] sm:$0xff]
          %v889 = vld [vmem:[#allocation8 + $0x170] sm:$0xff]
          %v890 = vld [vmem:[#allocation8 + $0x178] sm:$0xff]
          %v891 = vld [vmem:[#allocation8 + $0x180] sm:$0xff]
          %v892 = vld [vmem:[#allocation8 + $0x188] sm:$0xff]
          %v893 = vld [vmem:[#allocation8 + $0x190] sm:$0xff]
          %v894 = vld [vmem:[#allocation8 + $0x198] sm:$0xff]
          %v895 = vld [vmem:[#allocation8 + $0x1a0] sm:$0xff]
          %v896 = vld [vmem:[#allocation8 + $0x1a8] sm:$0xff]
          %v897 = vld [vmem:[#allocation8 + $0x1b0] sm:$0xff]
          %v898 = vld [vmem:[#allocation8 + $0x1b8] sm:$0xff]
          %v899 = vld [vmem:[#allocation8 + $0x1c0] sm:$0xff]
          %v900 = vld [vmem:[#allocation8 + $0x1c8] sm:$0xff]
          %v901 = vld [vmem:[#allocation8 + $0x1d0] sm:$0xff]
          %v902 = vld [vmem:[#allocation8 + $0x1d8] sm:$0xff]
          %v903 = vld [vmem:[#allocation8 + $0x1e0] sm:$0xff]
          %v904 = vld [vmem:[#allocation8 + $0x1e8] sm:$0xff]
          %v905 = vld [vmem:[#allocation8 + $0x1f0] sm:$0xff]
          %v906 = vld [vmem:[#allocation8 + $0x1f8] sm:$0xff]
          %v907 = vld [vmem:[#allocation8 + $0x200] sm:$0xff]
          %v908 = vld [vmem:[#allocation8 + $0x208] sm:$0xff]
          %v909 = vld [vmem:[#allocation8 + $0x210] sm:$0xff]
          %v910 = vld [vmem:[#allocation8 + $0x218] sm:$0xff]
          %v911 = vld [vmem:[#allocation8 + $0x220] sm:$0xff]
          %v912 = vld [vmem:[#allocation8 + $0x228] sm:$0xff]
          %v913 = vld [vmem:[#allocation8 + $0x230] sm:$0xff]
          %v914 = vld [vmem:[#allocation8 + $0x238] sm:$0xff]
          %v915 = vld [vmem:[#allocation8 + $0x240] sm:$0xff]
          %v916 = vld [vmem:[#allocation8 + $0x248] sm:$0xff]
          %v917 = vld [vmem:[#allocation8 + $0x250] sm:$0xff]
          %v918 = vld [vmem:[#allocation8 + $0x258] sm:$0xff]
          %v919 = vld [vmem:[#allocation8 + $0x260] sm:$0xff]
          %v920 = vld [vmem:[#allocation8 + $0x268] sm:$0xff]
          %v921 = vld [vmem:[#allocation8 + $0x270] sm:$0xff]
          %v922 = vld [vmem:[#allocation8 + $0x278] sm:$0xff]
          %v923 = vld [vmem:[#allocation8 + $0x280] sm:$0xff]
          %v924 = vld [vmem:[#allocation8 + $0x288] sm:$0xff]
          %v925 = vld [vmem:[#allocation8 + $0x290] sm:$0xff]
          %v926 = vld [vmem:[#allocation8 + $0x298] sm:$0xff]
          %v927 = vld [vmem:[#allocation8 + $0x2a0] sm:$0xff]
          %v928 = vld [vmem:[#allocation8 + $0x2a8] sm:$0xff]
          %v929 = vld [vmem:[#allocation8 + $0x2b0] sm:$0xff]
          %v930 = vld [vmem:[#allocation8 + $0x2b8] sm:$0xff]
          %v931 = vld [vmem:[#allocation8 + $0x2c0] sm:$0xff]
          %v932 = vld [vmem:[#allocation8 + $0x2c8] sm:$0xff]
          %v933 = vld [vmem:[#allocation8 + $0x2d0] sm:$0xff]
          %v934 = vld [vmem:[#allocation8 + $0x2d8] sm:$0xff]
          %v935 = vld [vmem:[#allocation8 + $0x2e0] sm:$0xff]
          %v936 = vld [vmem:[#allocation8 + $0x2e8] sm:$0xff]
          %v937 = vld [vmem:[#allocation8 + $0x2f0] sm:$0xff]
          %v938 = vld [vmem:[#allocation8 + $0x2f8] sm:$0xff]
          %v939 = vld [vmem:[#allocation8 + $0x300] sm:$0xff]
          %v940 = vld [vmem:[#allocation8 + $0x308] sm:$0xff]
          %v941 = vld [vmem:[#allocation8 + $0x310] sm:$0xff]
          %v942 = vld [vmem:[#allocation8 + $0x318] sm:$0xff]
          %v943 = vld [vmem:[#allocation8 + $0x320] sm:$0xff]
          %v944 = vld [vmem:[#allocation8 + $0x328] sm:$0xff]
          %v945 = vld [vmem:[#allocation8 + $0x330] sm:$0xff]
          %v946 = vld [vmem:[#allocation8 + $0x338] sm:$0xff]
          %v947 = vld [vmem:[#allocation8 + $0x340] sm:$0xff]
          %v948 = vld [vmem:[#allocation8 + $0x348] sm:$0xff]
          %v949 = vld [vmem:[#allocation8 + $0x350] sm:$0xff]
          %v950 = vld [vmem:[#allocation8 + $0x358] sm:$0xff]
          %v951 = vld [vmem:[#allocation8 + $0x360] sm:$0xff]
          %v952 = vld [vmem:[#allocation8 + $0x368] sm:$0xff]
          %v953 = vld [vmem:[#allocation8 + $0x370] sm:$0xff]
          %v954 = vld [vmem:[#allocation8 + $0x378] sm:$0xff]
          %v955 = vld [vmem:[#allocation8 + $0x380] sm:$0xff]
          %v956 = vld [vmem:[#allocation8 + $0x388] sm:$0xff]
          %v957 = vld [vmem:[#allocation8 + $0x390] sm:$0xff]
          %v958 = vld [vmem:[#allocation8 + $0x398] sm:$0xff]
          %v959 = vld [vmem:[#allocation8 + $0x3a0] sm:$0xff]
          %v960 = vld [vmem:[#allocation8 + $0x3a8] sm:$0xff]
          %v961 = vld [vmem:[#allocation8 + $0x3b0] sm:$0xff]
          %v962 = vld [vmem:[#allocation8 + $0x3b8] sm:$0xff]
          %v963 = vld [vmem:[#allocation8 + $0x3c0] sm:$0xff]
          %v964 = vld [vmem:[#allocation8 + $0x3c8] sm:$0xff]
          %v965 = vld [vmem:[#allocation8 + $0x3d0] sm:$0xff]
          %v966 = vld [vmem:[#allocation8 + $0x3d8] sm:$0xff]
          %v967 = vld [vmem:[#allocation8 + $0x3e0] sm:$0xff]
          %v968 = vld [vmem:[#allocation8 + $0x3e8] sm:$0xff]
          %v969 = vld [vmem:[#allocation8 + $0x3f0] sm:$0xff]
          %v970 = vld [vmem:[#allocation8 + $0x3f8] sm:$0xff]
          %v971 = vld [vmem:[%s4] sm:$0x3]
          %v973 = vlaneseq
          %v974 = vshrl.u32 %v973, 7
          %v975 = vsub.s32 0, %v974
          %v976 = vrot.slane %v971, %v975
          %v977 = vlaneseq
          %v978 = vshrl.u32 %v977, 7
          %v979 = vsub.s32 1, %v978
          %v980 = vrot.slane %v971, %v979
          %983 = vmatprep.subr.mxu0 %v844
          %984 = vmatpush1.msra.mxu0 %v843
          %985 = vmatprep.subr.mxu0 %v846
          %986 = vmatpush1.msra.mxu0 %v845
          %987 = vmatprep.subr.mxu0 %v848
          %988 = vmatpush1.msra.mxu0 %v847
          %989 = vmatprep.subr.mxu0 %v850
          %990 = vmatpush1.msra.mxu0 %v849
          %991 = vmatprep.subr.mxu0 %v852
          %992 = vmatpush1.msra.mxu0 %v851
          %993 = vmatprep.subr.mxu0 %v854
          %994 = vmatpush1.msra.mxu0 %v853
          %995 = vmatprep.subr.mxu0 %v856
          %996 = vmatpush1.msra.mxu0 %v855
          %997 = vmatprep.subr.mxu0 %v858
          %998 = vmatpush1.msra.mxu0 %v857
          %999 = vmatprep.subr.mxu0 %v860
          %1000 = vmatpush1.msra.mxu0 %v859
          %1001 = vmatprep.subr.mxu0 %v862
          %1002 = vmatpush1.msra.mxu0 %v861
          %1003 = vmatprep.subr.mxu0 %v864
          %1004 = vmatpush1.msra.mxu0 %v863
          %1005 = vmatprep.subr.mxu0 %v866
          %1006 = vmatpush1.msra.mxu0 %v865
          %1007 = vmatprep.subr.mxu0 %v868
          %1008 = vmatpush1.msra.mxu0 %v867
          %1009 = vmatprep.subr.mxu0 %v870
          %1010 = vmatpush1.msra.mxu0 %v869
          %1011 = vmatprep.subr.mxu0 %v872
          %1012 = vmatpush1.msra.mxu0 %v871
          %1013 = vmatprep.subr.mxu0 %v874
          %1014 = vmatpush1.msra.mxu0 %v873
          %1015 = vmatprep.subr.mxu0 %v876
          %1016 = vmatpush1.msra.mxu0 %v875
          %1017 = vmatprep.subr.mxu0 %v878
          %1018 = vmatpush1.msra.mxu0 %v877
          %1019 = vmatprep.subr.mxu0 %v880
          %1020 = vmatpush1.msra.mxu0 %v879
          %1021 = vmatprep.subr.mxu0 %v882
          %1022 = vmatpush1.msra.mxu0 %v881
          %1023 = vmatprep.subr.mxu0 %v884
          %1024 = vmatpush1.msra.mxu0 %v883
          %1025 = vmatprep.subr.mxu0 %v886
          %1026 = vmatpush1.msra.mxu0 %v885
          %1027 = vmatprep.subr.mxu0 %v888
          %1028 = vmatpush1.msra.mxu0 %v887
          %1029 = vmatprep.subr.mxu0 %v890
          %1030 = vmatpush1.msra.mxu0 %v889
          %1031 = vmatprep.subr.mxu0 %v892
          %1032 = vmatpush1.msra.mxu0 %v891
          %1033 = vmatprep.subr.mxu0 %v894
          %1034 = vmatpush1.msra.mxu0 %v893
          %1035 = vmatprep.subr.mxu0 %v896
          %1036 = vmatpush1.msra.mxu0 %v895
          %1037 = vmatprep.subr.mxu0 %v898
          %1038 = vmatpush1.msra.mxu0 %v897
          %1039 = vmatprep.subr.mxu0 %v900
          %1040 = vmatpush1.msra.mxu0 %v899
          %1041 = vmatprep.subr.mxu0 %v902
          %1042 = vmatpush1.msra.mxu0 %v901
          %1043 = vmatprep.subr.mxu0 %v904
          %1044 = vmatpush1.msra.mxu0 %v903
          %1045 = vmatprep.subr.mxu0 %v906
          %1046 = vmatpush1.msra.mxu0 %v905
          %1047 = vmatprep.mubr.f32.mxu0 %v838
          %1048 = vmatmul.mubr.f32.gmra.mrb[0].mxu0 %v837
          %v1049 = vpop.f32.mrb[0].mxu0
          %v1050 = vadd.f32 %v976, %v1049
          %v1051 = vpop.f32.mrb[0].mxu0
          %v1052 = vadd.f32 %v980, %v1051
          %1053 = vdwg.mxu0
          %1054 = vmatprep.subr.mxu0 %v908
          %1055 = vmatpush1.msra.mxu0 %v907
          %1056 = vmatprep.subr.mxu0 %v910
          %1057 = vmatpush1.msra.mxu0 %v909
          %1058 = vmatprep.subr.mxu0 %v912
          %1059 = vmatpush1.msra.mxu0 %v911
          %1060 = vmatprep.subr.mxu0 %v914
          %1061 = vmatpush1.msra.mxu0 %v913
          %1062 = vmatprep.subr.mxu0 %v916
          %1063 = vmatpush1.msra.mxu0 %v915
          %1064 = vmatprep.subr.mxu0 %v918
          %1065 = vmatpush1.msra.mxu0 %v917
          %1066 = vmatprep.subr.mxu0 %v920
          %1067 = vmatpush1.msra.mxu0 %v919
          %1068 = vmatprep.subr.mxu0 %v922
          %1069 = vmatpush1.msra.mxu0 %v921
          %1070 = vmatprep.subr.mxu0 %v924
          %1071 = vmatpush1.msra.mxu0 %v923
          %1072 = vmatprep.subr.mxu0 %v926
          %1073 = vmatpush1.msra.mxu0 %v925
          %1074 = vmatprep.subr.mxu0 %v928
          %1075 = vmatpush1.msra.mxu0 %v927
          %1076 = vmatprep.subr.mxu0 %v930
          %1077 = vmatpush1.msra.mxu0 %v929
          %1078 = vmatprep.subr.mxu0 %v932
          %1079 = vmatpush1.msra.mxu0 %v931
          %1080 = vmatprep.subr.mxu0 %v934
          %1081 = vmatpush1.msra.mxu0 %v933
          %1082 = vmatprep.subr.mxu0 %v936
          %1083 = vmatpush1.msra.mxu0 %v935
          %1084 = vmatprep.subr.mxu0 %v938
          %1085 = vmatpush1.msra.mxu0 %v937
          %1086 = vmatprep.subr.mxu0 %v940
          %1087 = vmatpush1.msra.mxu0 %v939
          %1088 = vmatprep.subr.mxu0 %v942
          %1089 = vmatpush1.msra.mxu0 %v941
          %1090 = vmatprep.subr.mxu0 %v944
          %1091 = vmatpush1.msra.mxu0 %v943
          %1092 = vmatprep.subr.mxu0 %v946
          %1093 = vmatpush1.msra.mxu0 %v945
          %1094 = vmatprep.subr.mxu0 %v948
          %1095 = vmatpush1.msra.mxu0 %v947
          %1096 = vmatprep.subr.mxu0 %v950
          %1097 = vmatpush1.msra.mxu0 %v949
          %1098 = vmatprep.subr.mxu0 %v952
          %1099 = vmatpush1.msra.mxu0 %v951
          %1100 = vmatprep.subr.mxu0 %v954
          %1101 = vmatpush1.msra.mxu0 %v953
          %1102 = vmatprep.subr.mxu0 %v956
          %1103 = vmatpush1.msra.mxu0 %v955
          %1104 = vmatprep.subr.mxu0 %v958
          %1105 = vmatpush1.msra.mxu0 %v957
          %1106 = vmatprep.subr.mxu0 %v960
          %1107 = vmatpush1.msra.mxu0 %v959
          %1108 = vmatprep.subr.mxu0 %v962
          %1109 = vmatpush1.msra.mxu0 %v961
          %1110 = vmatprep.subr.mxu0 %v964
          %1111 = vmatpush1.msra.mxu0 %v963
          %1112 = vmatprep.subr.mxu0 %v966
          %1113 = vmatpush1.msra.mxu0 %v965
          %1114 = vmatprep.subr.mxu0 %v968
          %1115 = vmatpush1.msra.mxu0 %v967
          %1116 = vmatprep.subr.mxu0 %v970
          %1117 = vmatpush1.msra.mxu0 %v969
          %1118 = vmatprep.mubr.f32.mxu0 %v840
          %1119 = vmatmul.mubr.f32.gmra.mrb[0].mxu0 %v839
          %v1120 = vpop.f32.mrb[0].mxu0
          %v1121 = vadd.f32 %v1050, %v1120
          %v1122 = vpop.f32.mrb[0].mxu0
          %v1123 = vadd.f32 %v1052, %v1122
          %1124 = vdwg.mxu0
          %v1125 = vmul.f32 %v1121, 0.5
          %v1126 = vmul.f32 %v1123, 0.5
          %v1127 = vmul.f32 %v1121, 0.044715
          %v1128 = vmul.f32 %v1123, 0.044715
          %v1129 = vmul.f32 %v1127, %v1121
          %v1130 = vmul.f32 %v1128, %v1123
          %v1131 = vmul.f32 %v1129, %v1121
          %v1132 = vmul.f32 %v1130, %v1123
          %v1133 = vadd.f32 %v1121, %v1131
          %v1134 = vadd.f32 %v1123, %v1132
          %v1135 = vmul.f32 %v1133, 0.7978846
          %v1136 = vmul.f32 %v1134, 0.7978846
          %v1137 = vtanh.pop %v1135
          %v1138 = vtanh.pop %v1136
          %v1139 = vadd.f32 %v1137, 1.0
          %v1140 = vadd.f32 %v1138, 1.0
          %v1141 = vmul.f32 %v1125, %v1139
          %v1142 = vmul.f32 %v1126, %v1140
          %v1143 = vld [vmem:[#allocation9] sm:$0xff]
          %v1144 = vld [vmem:[#allocation9 + $0x8] sm:$0xff]
          %v1145 = vld [vmem:[#allocation9 + $0x10] sm:$0xff]
          %v1146 = vld [vmem:[#allocation9 + $0x18] sm:$0xff]
          %v1147 = vld [vmem:[#allocation9 + $0x20] sm:$0xff]
          %v1148 = vld [vmem:[#allocation9 + $0x28] sm:$0xff]
          %v1149 = vld [vmem:[#allocation9 + $0x30] sm:$0xff]
          %v1150 = vld [vmem:[#allocation9 + $0x38] sm:$0xff]
          %v1151 = vld [vmem:[#allocation9 + $0x40] sm:$0xff]
          %v1152 = vld [vmem:[#allocation9 + $0x48] sm:$0xff]
          %v1153 = vld [vmem:[#allocation9 + $0x50] sm:$0xff]
          %v1154 = vld [vmem:[#allocation9 + $0x58] sm:$0xff]
          %v1155 = vld [vmem:[#allocation9 + $0x60] sm:$0xff]
          %v1156 = vld [vmem:[#allocation9 + $0x68] sm:$0xff]
          %v1157 = vld [vmem:[#allocation9 + $0x70] sm:$0xff]
          %v1158 = vld [vmem:[#allocation9 + $0x78] sm:$0xff]
          %v1159 = vld [vmem:[#allocation9 + $0x80] sm:$0xff]
          %v1160 = vld [vmem:[#allocation9 + $0x88] sm:$0xff]
          %v1161 = vld [vmem:[#allocation9 + $0x90] sm:$0xff]
          %v1162 = vld [vmem:[#allocation9 + $0x98] sm:$0xff]
          %v1163 = vld [vmem:[#allocation9 + $0xa0] sm:$0xff]
          %v1164 = vld [vmem:[#allocation9 + $0xa8] sm:$0xff]
          %v1165 = vld [vmem:[#allocation9 + $0xb0] sm:$0xff]
          %v1166 = vld [vmem:[#allocation9 + $0xb8] sm:$0xff]
          %v1167 = vld [vmem:[#allocation9 + $0xc0] sm:$0xff]
          %v1168 = vld [vmem:[#allocation9 + $0xc8] sm:$0xff]
          %v1169 = vld [vmem:[#allocation9 + $0xd0] sm:$0xff]
          %v1170 = vld [vmem:[#allocation9 + $0xd8] sm:$0xff]
          %v1171 = vld [vmem:[#allocation9 + $0xe0] sm:$0xff]
          %v1172 = vld [vmem:[#allocation9 + $0xe8] sm:$0xff]
          %v1173 = vld [vmem:[#allocation9 + $0xf0] sm:$0xff]
          %v1174 = vld [vmem:[#allocation9 + $0xf8] sm:$0xff]
          %v1175 = vld [vmem:[#allocation11] sm:$0xff]
          %v1176 = vld [vmem:[#allocation11 + $0x8] sm:$0xff]
          %v1177 = vld [vmem:[#allocation11 + $0x10] sm:$0xff]
          %v1178 = vld [vmem:[#allocation11 + $0x18] sm:$0xff]
          %v1179 = vld [vmem:[#allocation11 + $0x20] sm:$0xff]
          %v1180 = vld [vmem:[#allocation11 + $0x28] sm:$0xff]
          %v1181 = vld [vmem:[#allocation11 + $0x30] sm:$0xff]
          %v1182 = vld [vmem:[#allocation11 + $0x38] sm:$0xff]
          %v1183 = vld [vmem:[#allocation11 + $0x40] sm:$0xff]
          %v1184 = vld [vmem:[#allocation11 + $0x48] sm:$0xff]
          %v1185 = vld [vmem:[#allocation11 + $0x50] sm:$0xff]
          %v1186 = vld [vmem:[#allocation11 + $0x58] sm:$0xff]
          %v1187 = vld [vmem:[#allocation11 + $0x60] sm:$0xff]
          %v1188 = vld [vmem:[#allocation11 + $0x68] sm:$0xff]
          %v1189 = vld [vmem:[#allocation11 + $0x70] sm:$0xff]
          %v1190 = vld [vmem:[#allocation11 + $0x78] sm:$0xff]
          %v1191 = vld [vmem:[#allocation11 + $0x80] sm:$0xff]
          %v1192 = vld [vmem:[#allocation11 + $0x88] sm:$0xff]
          %v1193 = vld [vmem:[#allocation11 + $0x90] sm:$0xff]
          %v1194 = vld [vmem:[#allocation11 + $0x98] sm:$0xff]
          %v1195 = vld [vmem:[#allocation11 + $0xa0] sm:$0xff]
          %v1196 = vld [vmem:[#allocation11 + $0xa8] sm:$0xff]
          %v1197 = vld [vmem:[#allocation11 + $0xb0] sm:$0xff]
          %v1198 = vld [vmem:[#allocation11 + $0xb8] sm:$0xff]
          %v1199 = vld [vmem:[#allocation11 + $0xc0] sm:$0xff]
          %v1200 = vld [vmem:[#allocation11 + $0xc8] sm:$0xff]
          %v1201 = vld [vmem:[#allocation11 + $0xd0] sm:$0xff]
          %v1202 = vld [vmem:[#allocation11 + $0xd8] sm:$0xff]
          %v1203 = vld [vmem:[#allocation11 + $0xe0] sm:$0xff]
          %v1204 = vld [vmem:[#allocation11 + $0xe8] sm:$0xff]
          %v1205 = vld [vmem:[#allocation11 + $0xf0] sm:$0xff]
          %v1206 = vld [vmem:[#allocation11 + $0xf8] sm:$0xff]
          %1207 = vmatprep.subr.mxu0 0.0
          %1208 = vmatpush1.msra.mxu0 %v1175
          %1209 = vmatprep.subr.mxu0 0.0
          %1210 = vmatpush1.msra.mxu0 %v1176
          %1211 = vmatprep.subr.mxu0 0.0
          %1212 = vmatpush1.msra.mxu0 %v1177
          %1213 = vmatprep.subr.mxu0 0.0
          %1214 = vmatpush1.msra.mxu0 %v1178
          %1215 = vmatprep.subr.mxu0 0.0
          %1216 = vmatpush1.msra.mxu0 %v1179
          %1217 = vmatprep.subr.mxu0 0.0
          %1218 = vmatpush1.msra.mxu0 %v1180
          %1219 = vmatprep.subr.mxu0 0.0
          %1220 = vmatpush1.msra.mxu0 %v1181
          %1221 = vmatprep.subr.mxu0 0.0
          %1222 = vmatpush1.msra.mxu0 %v1182
          %1223 = vmatprep.subr.mxu0 0.0
          %1224 = vmatpush1.msra.mxu0 %v1183
          %1225 = vmatprep.subr.mxu0 0.0
          %1226 = vmatpush1.msra.mxu0 %v1184
          %1227 = vmatprep.subr.mxu0 0.0
          %1228 = vmatpush1.msra.mxu0 %v1185
          %1229 = vmatprep.subr.mxu0 0.0
          %1230 = vmatpush1.msra.mxu0 %v1186
          %1231 = vmatprep.subr.mxu0 0.0
          %1232 = vmatpush1.msra.mxu0 %v1187
          %1233 = vmatprep.subr.mxu0 0.0
          %1234 = vmatpush1.msra.mxu0 %v1188
          %1235 = vmatprep.subr.mxu0 0.0
          %1236 = vmatpush1.msra.mxu0 %v1189
          %1237 = vmatprep.subr.mxu0 0.0
          %1238 = vmatpush1.msra.mxu0 %v1190
          %1239 = vmatprep.subr.mxu0 0.0
          %1240 = vmatpush1.msra.mxu0 %v1191
          %1241 = vmatprep.subr.mxu0 0.0
          %1242 = vmatpush1.msra.mxu0 %v1192
          %1243 = vmatprep.subr.mxu0 0.0
          %1244 = vmatpush1.msra.mxu0 %v1193
          %1245 = vmatprep.subr.mxu0 0.0
          %1246 = vmatpush1.msra.mxu0 %v1194
          %1247 = vmatprep.subr.mxu0 0.0
          %1248 = vmatpush1.msra.mxu0 %v1195
          %1249 = vmatprep.subr.mxu0 0.0
          %1250 = vmatpush1.msra.mxu0 %v1196
          %1251 = vmatprep.subr.mxu0 0.0
          %1252 = vmatpush1.msra.mxu0 %v1197
          %1253 = vmatprep.subr.mxu0 0.0
          %1254 = vmatpush1.msra.mxu0 %v1198
          %1255 = vmatprep.subr.mxu0 0.0
          %1256 = vmatpush1.msra.mxu0 %v1199
          %1257 = vmatprep.subr.mxu0 0.0
          %1258 = vmatpush1.msra.mxu0 %v1200
          %1259 = vmatprep.subr.mxu0 0.0
          %1260 = vmatpush1.msra.mxu0 %v1201
          %1261 = vmatprep.subr.mxu0 0.0
          %1262 = vmatpush1.msra.mxu0 %v1202
          %1263 = vmatprep.subr.mxu0 0.0
          %1264 = vmatpush1.msra.mxu0 %v1203
          %1265 = vmatprep.subr.mxu0 0.0
          %1266 = vmatpush1.msra.mxu0 %v1204
          %1267 = vmatprep.subr.mxu0 0.0
          %1268 = vmatpush1.msra.mxu0 %v1205
          %1269 = vmatprep.subr.mxu0 0.0
          %1270 = vmatpush1.msra.mxu0 %v1206
          %1271 = vmatprep.mubr.f32.mxu0 %v842
          %1272 = vmatmul.mubr.f32.gmra.mrb[0].mxu0 %v841
          %v1273 = vpop.f32.mrb[0].mxu0
          %v1274 = vadd.f32 0.0, %v1273
          %v1275 = vpop.f32.mrb[0].mxu0
          %1276 = vdwg.mxu0
          %1277 = vmatprep.subr.mxu0 0.0
          %1278 = vmatpush1.msra.mxu0 %v1143
          %1279 = vmatprep.subr.mxu0 0.0
          %1280 = vmatpush1.msra.mxu0 %v1144
          %1281 = vmatprep.subr.mxu0 0.0
          %1282 = vmatpush1.msra.mxu0 %v1145
          %1283 = vmatprep.subr.mxu0 0.0
          %1284 = vmatpush1.msra.mxu0 %v1146
          %1285 = vmatprep.subr.mxu0 0.0
          %1286 = vmatpush1.msra.mxu0 %v1147
          %1287 = vmatprep.subr.mxu0 0.0
          %1288 = vmatpush1.msra.mxu0 %v1148
          %1289 = vmatprep.subr.mxu0 0.0
          %1290 = vmatpush1.msra.mxu0 %v1149
          %1291 = vmatprep.subr.mxu0 0.0
          %1292 = vmatpush1.msra.mxu0 %v1150
          %1293 = vmatprep.subr.mxu0 0.0
          %1294 = vmatpush1.msra.mxu0 %v1151
          %1295 = vmatprep.subr.mxu0 0.0
          %1296 = vmatpush1.msra.mxu0 %v1152
          %1297 = vmatprep.subr.mxu0 0.0
          %1298 = vmatpush1.msra.mxu0 %v1153
          %1299 = vmatprep.subr.mxu0 0.0
          %1300 = vmatpush1.msra.mxu0 %v1154
          %1301 = vmatprep.subr.mxu0 0.0
          %1302 = vmatpush1.msra.mxu0 %v1155
          %1303 = vmatprep.subr.mxu0 0.0
          %1304 = vmatpush1.msra.mxu0 %v1156
          %1305 = vmatprep.subr.mxu0 0.0
          %1306 = vmatpush1.msra.mxu0 %v1157
          %1307 = vmatprep.subr.mxu0 0.0
          %1308 = vmatpush1.msra.mxu0 %v1158
          %1309 = vmatprep.subr.mxu0 0.0
          %1310 = vmatpush1.msra.mxu0 %v1159
          %1311 = vmatprep.subr.mxu0 0.0
          %1312 = vmatpush1.msra.mxu0 %v1160
          %1313 = vmatprep.subr.mxu0 0.0
          %1314 = vmatpush1.msra.mxu0 %v1161
          %1315 = vmatprep.subr.mxu0 0.0
          %1316 = vmatpush1.msra.mxu0 %v1162
          %1317 = vmatprep.subr.mxu0 0.0
          %1318 = vmatpush1.msra.mxu0 %v1163
          %1319 = vmatprep.subr.mxu0 0.0
          %1320 = vmatpush1.msra.mxu0 %v1164
          %1321 = vmatprep.subr.mxu0 0.0
          %1322 = vmatpush1.msra.mxu0 %v1165
          %1323 = vmatprep.subr.mxu0 0.0
          %1324 = vmatpush1.msra.mxu0 %v1166
          %1325 = vmatprep.subr.mxu0 0.0
          %1326 = vmatpush1.msra.mxu0 %v1167
          %1327 = vmatprep.subr.mxu0 0.0
          %1328 = vmatpush1.msra.mxu0 %v1168
          %1329 = vmatprep.subr.mxu0 0.0
          %1330 = vmatpush1.msra.mxu0 %v1169
          %1331 = vmatprep.subr.mxu0 0.0
          %1332 = vmatpush1.msra.mxu0 %v1170
          %1333 = vmatprep.subr.mxu0 0.0
          %1334 = vmatpush1.msra.mxu0 %v1171
          %1335 = vmatprep.subr.mxu0 0.0
          %1336 = vmatpush1.msra.mxu0 %v1172
          %1337 = vmatprep.subr.mxu0 0.0
          %1338 = vmatpush1.msra.mxu0 %v1173
          %1339 = vmatprep.subr.mxu0 0.0
          %1340 = vmatpush1.msra.mxu0 %v1174
          %1341 = vmatprep.mubr.f32.mxu0 %v1142
          %1342 = vmatmul.mubr.f32.gmra.mrb[0].mxu0 %v1141
          %v1343 = vpop.f32.mrb[0].mxu0
          %v1344 = vadd.f32 %v1274, %v1343
          %v1345 = vpop.f32.mrb[0].mxu0
          %1346 = vdwg.mxu0
          %v1347 = vld [vmem:[%s7] sm:$0x1]
          %v1349 = vlaneseq
          %v1350 = vshrl.u32 %v1349, 7
          %v1351 = vsub.s32 0, %v1350
          %v1352 = vrot.slane %v1347, %v1351
          %v1354 = vadd.f32 %v1344, %v1352
          %1355 = vst [vmem:[%s402] sm:$0xff] %v1354
        $region80: #{tpu_custom_call.1} parent=51 // pred_fallthru
          _
        %s1356 = sand.u32 %s227, 1
        %s1357 = scalar_lea.sflag [#allocation5], %s1356
        %s1358 = sand.u32 %s227, 1
        %s1359 = smul.addr %s1358, 8
        %s1360 = scalar_lea.vmem [#allocation12], %s1359
        // Predicated region
        $region81: #{tpu_custom_call.1} parent=51 // pred_check
          %p1361 = pneg %p237
        $region82: #{tpu_custom_call.1} parent=51 // pred_check_branch
          %1363 = sbr.rel (%p1361) target = $region84
        $region83: #{tpu_custom_call.1} parent=51 // pred_region
          %s1365 = ssub.s32 128, 128
          %1366 = vsyncadd %s1357, %s1365
          %s1367 = smul.addr %s31, 128
          %s1368 = scalar_lea.hbm %s8, %s1367
          %s1370 = sshll.u32 %s1360, 4
          %s1371 = int_to_ptr.vmem [resolvable:$true] %s1370
          %1373 = dma.vmem_to_hbm [thread:$0]  %s1371, 128, %s1368, %s1357
        $region84: #{tpu_custom_call.1} parent=51 // pred_fallthru
          _
      $region52: #{tpu_custom_call.1} parent=5 // pred_fallthru
        _
      %p1374 = scmp.le.s32.totalorder 2, %s22
      // Predicated region
      $region85: #{tpu_custom_call.1} parent=5 // pred_check
        %p1375 = pneg %p1374
      $region86: #{tpu_custom_call.1} parent=5 // pred_check_branch
        %1377 = sbr.rel (%p1375) target = $region88
      $region87: #{tpu_custom_call.1} parent=5 // pred_region
        %s1378 = ssub.s32 %s22, 2
        // Predicated region
        $region89: #{tpu_custom_call.1} parent=87 // pred_check
          %p1379 = pneg %p243
        $region90: #{tpu_custom_call.1} parent=87 // pred_check_branch
          %1381 = sbr.rel (%p1379) target = $region92
        $region91: #{tpu_custom_call.1} parent=87 // pred_region
          %s1382 = sand.u32 %s228, 1
          %s1383 = scalar_lea.sflag [#allocation5], %s1382
          %s1384 = sand.u32 %s228, 1
          %s1385 = smul.addr %s1384, 8
          %s1386 = scalar_lea.vmem [#allocation12], %s1385
          %1387 = dma.done %s1383, 128
        $region92: #{tpu_custom_call.1} parent=87 // pred_fallthru
          _
      $region88: #{tpu_custom_call.1} parent=5 // pred_fallthru
        _
    $region6: #{tpu_custom_call.1} parent=1 // loop_footer
      %s26 = sadd.s32 1, %s22
    $region7: #{tpu_custom_call.1} parent=1 // loop_footer_branch
      %21 = sbr.rel target = $region3
    $region8: #{tpu_custom_call.1} parent=1 // loop_exit
      _
    %1388 = vsyncpa [#allocation4], 1
    %s1389 = scalar_lea.sflag [#allocation4], 1
    %1390 = vsyncpa %s1389, 1
    %1391 = vsyncpa [#allocation7], 1
    %1392 = vsyncpa [#allocation10], 1
    %1393 = vsyncpa [#allocation5], 1
    %s1394 = scalar_lea.sflag [#allocation5], 1
    %1395 = vsyncpa %s1394, 1

// kernel: tpu_custom_call.1
$region0: #{tpu_custom_call.1}
  #allocation0 [shape = 'u32[]', space=smem, size = 0x4, offset = 0x4, fixed_abs, tag = 'smem constant byte address 0x4 - core index']
  #allocation1 [shape = 'u32[144,128]{1,0:T(1,128)}', space=vmem, size = 0x12000, scoped, tag = 'internal scratch']
  #allocation2 [shape = 'f32[8,768]{1,0:T(8,128)}', space=vmem, size = 0x6000, scoped, tag = 'scratch operand']
  %s0 = inlined_call_operand.hbm [shape: f32[16,128], index: 0, kind: input, shape index: {}]
  %s1 = inlined_call_operand.hbm [shape: f32[128,768], index: 1, kind: input, shape index: {}]
  %s2 = inlined_call_operand.vmem [shape: f32[1,768], index: 2, kind: input, shape index: {}]
  %s3 = inlined_call_operand.hbm [shape: f32[512,256], index: 3, kind: input, shape index: {}]
  %s4 = inlined_call_operand.vmem [shape: f32[1,256], index: 4, kind: input, shape index: {}]
  %s5 = inlined_call_operand.hbm [shape: f32[256,128], index: 5, kind: input, shape index: {}]
  %s6 = inlined_call_operand.hbm [shape: f32[256,128], index: 6, kind: input, shape index: {}]
  %s7 = inlined_call_operand.vmem [shape: f32[1,128], index: 7, kind: input, shape index: {}]
  %s8 = inlined_call_operand.hbm [shape: f32[16,128], index: 8, kind: output, shape index: {}]
  %s9 = sld [smem:[#allocation0]]
  $region93: #{tpu_custom_call.1} parent=0
    _
  %s11 = ssub.s32 1, %s9
  %s12 = scalar_select 0, %s11, %s9
  $region1: #{tpu_custom_call.1} parent=0
    #allocation3 [shape = 'u8[8192]{0}', space=vmem, size = 0x2000, scoped, tag = 'input window, operand 0']
    #allocation4 [shape = 's32[2]{0}', space=sflag, size = 0x8, scoped, tag = 'scoped memory for tpu_custom_call.1']
    #allocation5 [shape = 's32[2]{0}', space=sflag, size = 0x8, scoped, tag = 'scoped memory for tpu_custom_call.1']
    #allocation6 [shape = 'u8[393216]{0}', space=vmem, size = 0x60000, scoped, tag = 'input window, operand 1, single buffered']
    #allocation7 [shape = 's32[1]{0}', space=sflag, size = 0x4, scoped, tag = 'scoped memory for tpu_custom_call.1']
    #allocation8 [shape = 'u8[524288]{0}', space=vmem, size = 0x80000, scoped, tag = 'input window, operand 3, single buffered']
    #allocation9 [shape = 'u8[131072]{0}', space=vmem, size = 0x20000, scoped, tag = 'input window, operand 5, single buffered']
    #allocation10 [shape = 's32[1]{0}', space=sflag, size = 0x4, scoped, tag = 'scoped memory for tpu_custom_call.1']
    #allocation11 [shape = 'u8[131072]{0}', space=vmem, size = 0x20000, scoped, tag = 'input window, operand 6, single buffered']
    #allocation12 [shape = 'u8[8192]{0}', space=vmem, size = 0x2000, scoped, tag = 'output window, operand 0']
    %13 = vsyncpa [#allocation4], 0
    %s14 = scalar_lea.sflag [#allocation4], 1
    %15 = vsyncpa %s14, 0
    %16 = vsyncpa [#allocation7], 0
    %17 = vsyncpa [#allocation10], 0
    %18 = vsyncpa [#allocation5], 0
    %s19 = scalar_lea.sflag [#allocation5], 1
    %20 = vsyncpa %s19, 0
    loop: start=0, step=1, limit=4
    $region2: #{tpu_custom_call.1} parent=1 // loop_pre_header
      _
    $region3: #{tpu_custom_call.1} parent=1 // loop_header
      %s22 = sphi 0, %s26
      %p23 = scmp.ge.s32.totalorder %s22, 4
      %s29 = sphi 0, %s41
      %s30 = sphi 0, %s37
      %s31 = sphi 0, %s29
      %s32 = sphi 0, %s30
      %s33 = sphi 0, %s31
      %s34 = sphi 0, %s32
      %s46 = sphi 0, %s48
      %s49 = sphi 0, %s46
      %s50 = sphi 0, %s49
      %s66 = sphi 0, %s50
      %s72 = sphi 0, %s74
      %s75 = sphi 0, %s72
      %s76 = sphi 0, %s75
      %s92 = sphi 0, %s76
      %s96 = sphi 0, %s96
      %s98 = sphi 0, %s96
      %s99 = sphi 0, %s98
      %s113 = sphi 0, %s99
      %s117 = sphi 0, %s117
      %s119 = sphi 0, %s117
      %s120 = sphi 0, %s119
      %s134 = sphi 0, %s120
      %s138 = sphi 0, %s138
      %s140 = sphi 0, %s138
      %s141 = sphi 0, %s140
      %s155 = sphi 0, %s141
      %s159 = sphi 0, %s159
      %s161 = sphi 0, %s159
      %s162 = sphi 0, %s161
      %s176 = sphi 0, %s162
      %s180 = sphi 0, %s180
      %s182 = sphi 0, %s180
      %s183 = sphi 0, %s182
      %s197 = sphi 0, %s183
      %s201 = sphi 0, %s201
      %s203 = sphi 0, %s201
      %s204 = sphi 0, %s203
      %s218 = sphi 0, %s204
      %s224 = sphi 0, %s226
      %s227 = sphi 0, %s224
      %s228 = sphi 0, %s227
      %s244 = sphi 0, %s228
    $region4: #{tpu_custom_call.1} parent=1 // loop_header_branch
      %25 = sbr.rel (%p23) target = $region8
    $region5: #{tpu_custom_call.1} parent=1 // loop_body
      %s27 = ssub.s32 %s22, 1
      %s28 = ssub.s32 %s22, 2
      %s35 = sadd.s32 1, %s30
      %p36 = scmp.ge.s32.totalorder %s35, 1
      %s37 = scalar_select %p36, 0, %s35
      %s38 = sadd.s32 1, %s29
      %s39 = scalar_select %p36, %s38, %s29
      %p40 = scmp.ge.s32.totalorder %s39, 2
      %s41 = scalar_select %p40, 0, %s39
      %s42 = ssub.s32 %s29, %s41
      %s43 = ssub.s32 %s30, %s37
      %s44 = sor.u32 %s42, %s43
      %p45 = scmp.eq.s32.totalorder %s44, 0
      %s47 = sadd.s32 %s46, 1
      %s48 = scalar_select %p45, %s46, %s47
      %p51 = pneg %p45
      %p52 = scmp.eq.s32.totalorder %s22, 1
      %p53 = por %p51, %p52
      %p54 = scmp.ne.s32.totalorder %s46, %s49
      %p55 = scmp.eq.s32.totalorder %s22, 0
      %p56 = por %p54, %p55
      %p57 = scmp.ne.s32.totalorder %s46, %s49
      %p58 = scmp.eq.s32.totalorder %s27, 1
      %p59 = por %p57, %p58
      %p60 = scmp.ne.s32.totalorder %s49, %s50
      %p61 = scmp.eq.s32.totalorder %s27, 0
      %p62 = por %p60, %p61
      %p63 = scmp.ne.s32.totalorder %s49, %s50
      %p64 = scmp.eq.s32.totalorder %s28, 1
      %p65 = por %p63, %p64
      %p67 = scmp.ne.s32.totalorder %s50, %s66
      %p68 = scmp.eq.s32.totalorder %s28, 0
      %p69 = por %p67, %p68
      %s70 = ssub.s32 %s30, %s37
      %p71 = scmp.eq.s32.totalorder %s70, 0
      %s73 = sadd.s32 %s72, 1
      %s74 = scalar_select %p71, %s72, %s73
      %p77 = pneg %p71
      %p78 = scmp.eq.s32.totalorder %s22, 1
      %p79 = por %p77, %p78
      %p80 = scmp.ne.s32.totalorder %s72, %s75
      %p81 = scmp.eq.s32.totalorder %s22, 0
      %p82 = por %p80, %p81
      %p83 = scmp.ne.s32.totalorder %s72, %s75
      %p84 = scmp.eq.s32.totalorder %s27, 1
      %p85 = por %p83, %p84
      %p86 = scmp.ne.s32.totalorder %s75, %s76
      %p87 = scmp.eq.s32.totalorder %s27, 0
      %p88 = por %p86, %p87
      %p89 = scmp.ne.s32.totalorder %s75, %s76
      %p90 = scmp.eq.s32.totalorder %s28, 1
      %p91 = por %p89, %p90
      %p93 = scmp.ne.s32.totalorder %s76, %s92
      %p94 = scmp.eq.s32.totalorder %s28, 0
      %p95 = por %p93, %p94
      %s97 = sadd.s32 %s96, 1
      %p100 = scmp.eq.s32.totalorder %s22, 1
      %p101 = scmp.ne.s32.totalorder %s96, %s98
      %p102 = scmp.eq.s32.totalorder %s22, 0
      %p103 = por %p101, %p102
      %p104 = scmp.ne.s32.totalorder %s96, %s98
      %p105 = scmp.eq.s32.totalorder %s27, 1
      %p106 = por %p104, %p105
      %p107 = scmp.ne.s32.totalorder %s98, %s99
      %p108 = scmp.eq.s32.totalorder %s27, 0
      %p109 = por %p107, %p108
      %p110 = scmp.ne.s32.totalorder %s98, %s99
      %p111 = scmp.eq.s32.totalorder %s28, 1
      %p112 = por %p110, %p111
      %p114 = scmp.ne.s32.totalorder %s99, %s113
      %p115 = scmp.eq.s32.totalorder %s28, 0
      %p116 = por %p114, %p115
      %s118 = sadd.s32 %s117, 1
      %p121 = scmp.eq.s32.totalorder %s22, 1
      %p122 = scmp.ne.s32.totalorder %s117, %s119
      %p123 = scmp.eq.s32.totalorder %s22, 0
      %p124 = por %p122, %p123
      %p125 = scmp.ne.s32.totalorder %s117, %s119
      %p126 = scmp.eq.s32.totalorder %s27, 1
      %p127 = por %p125, %p126
      %p128 = scmp.ne.s32.totalorder %s119, %s120
      %p129 = scmp.eq.s32.totalorder %s27, 0
      %p130 = por %p128, %p129
      %p131 = scmp.ne.s32.totalorder %s119, %s120
      %p132 = scmp.eq.s32.totalorder %s28, 1
      %p133 = por %p131, %p132
      %p135 = scmp.ne.s32.totalorder %s120, %s134
      %p136 = scmp.eq.s32.totalorder %s28, 0
      %p137 = por %p135, %p136
      %s139 = sadd.s32 %s138, 1
      %p142 = scmp.eq.s32.totalorder %s22, 1
      %p143 = scmp.ne.s32.totalorder %s138, %s140
      %p144 = scmp.eq.s32.totalorder %s22, 0
      %p145 = por %p143, %p144
      %p146 = scmp.ne.s32.totalorder %s138, %s140
      %p147 = scmp.eq.s32.totalorder %s27, 1
      %p148 = por %p146, %p147
      %p149 = scmp.ne.s32.totalorder %s140, %s141
      %p150 = scmp.eq.s32.totalorder %s27, 0
      %p151 = por %p149, %p150
      %p152 = scmp.ne.s32.totalorder %s140, %s141
      %p153 = scmp.eq.s32.totalorder %s28, 1
      %p154 = por %p152, %p153
      %p156 = scmp.ne.s32.totalorder %s141, %s155
      %p157 = scmp.eq.s32.totalorder %s28, 0
      %p158 = por %p156, %p157
      %s160 = sadd.s32 %s159, 1
      %p163 = scmp.eq.s32.totalorder %s22, 1
      %p164 = scmp.ne.s32.totalorder %s159, %s161
      %p165 = scmp.eq.s32.totalorder %s22, 0
      %p166 = por %p164, %p165
      %p167 = scmp.ne.s32.totalorder %s159, %s161
      %p168 = scmp.eq.s32.totalorder %s27, 1
      %p169 = por %p167, %p168
      %p170 = scmp.ne.s32.totalorder %s161, %s162
      %p171 = scmp.eq.s32.totalorder %s27, 0
      %p172 = por %p170, %p171
      %p173 = scmp.ne.s32.totalorder %s161, %s162
      %p174 = scmp.eq.s32.totalorder %s28, 1
      %p175 = por %p173, %p174
      %p177 = scmp.ne.s32.totalorder %s162, %s176
      %p178 = scmp.eq.s32.totalorder %s28, 0
      %p179 = por %p177, %p178
      %s181 = sadd.s32 %s180, 1
      %p184 = scmp.eq.s32.totalorder %s22, 1
      %p185 = scmp.ne.s32.totalorder %s180, %s182
      %p186 = scmp.eq.s32.totalorder %s22, 0
      %p187 = por %p185, %p186
      %p188 = scmp.ne.s32.totalorder %s180, %s182
      %p189 = scmp.eq.s32.totalorder %s27, 1
      %p190 = por %p188, %p189
      %p191 = scmp.ne.s32.totalorder %s182, %s183
      %p192 = scmp.eq.s32.totalorder %s27, 0
      %p193 = por %p191, %p192
      %p194 = scmp.ne.s32.totalorder %s182, %s183
      %p195 = scmp.eq.s32.totalorder %s28, 1
      %p196 = por %p194, %p195
      %p198 = scmp.ne.s32.totalorder %s183, %s197
      %p199 = scmp.eq.s32.totalorder %s28, 0
      %p200 = por %p198, %p199
      %s202 = sadd.s32 %s201, 1
      %p205 = scmp.eq.s32.totalorder %s22, 1
      %p206 = scmp.ne.s32.totalorder %s201, %s203
      %p207 = scmp.eq.s32.totalorder %s22, 0
      %p208 = por %p206, %p207
      %p209 = scmp.ne.s32.totalorder %s201, %s203
      %p210 = scmp.eq.s32.totalorder %s27, 1
      %p211 = por %p209, %p210
      %p212 = scmp.ne.s32.totalorder %s203, %s204
      %p213 = scmp.eq.s32.totalorder %s27, 0
      %p214 = por %p212, %p213
      %p215 = scmp.ne.s32.totalorder %s203, %s204
      %p216 = scmp.eq.s32.totalorder %s28, 1
      %p217 = por %p215, %p216
      %p219 = scmp.ne.s32.totalorder %s204, %s218
      %p220 = scmp.eq.s32.totalorder %s28, 0
      %p221 = por %p219, %p220
      %s222 = ssub.s32 %s29, %s41
      %p223 = scmp.eq.s32.totalorder %s222, 0
      %s225 = sadd.s32 %s224, 1
      %s226 = scalar_select %p223, %s224, %s225
      %p229 = pneg %p223
      %p230 = scmp.eq.s32.totalorder %s22, 1
      %p231 = por %p229, %p230
      %p232 = scmp.ne.s32.totalorder %s224, %s227
      %p233 = scmp.eq.s32.totalorder %s22, 0
      %p234 = por %p232, %p233
      %p235 = scmp.ne.s32.totalorder %s224, %s227
      %p236 = scmp.eq.s32.totalorder %s27, 1
      %p237 = por %p235, %p236
      %p238 = scmp.ne.s32.totalorder %s227, %s228
      %p239 = scmp.eq.s32.totalorder %s27, 0
      %p240 = por %p238, %p239
      %p241 = scmp.ne.s32.totalorder %s227, %s228
      %p242 = scmp.eq.s32.totalorder %s28, 1
      %p243 = por %p241, %p242
      %p245 = scmp.ne.s32.totalorder %s228, %s244
      %p246 = scmp.eq.s32.totalorder %s28, 0
      %p247 = por %p245, %p246
      %p248 = scmp.le.s32.totalorder 1, %s22
      %p249 = scmp.lt.s32.totalorder %s22, 3
      %p250 = pnand %p248, %p249
      %p251 = pneg %p250
      // Predicated region
      $region9: #{tpu_custom_call.1} parent=5 // pred_check
        _
      $region10: #{tpu_custom_call.1} parent=5 // pred_check_branch
        %253 = sbr.rel (%p250) target = $region12
      $region11: #{tpu_custom_call.1} parent=5 // pred_region
        %s254 = ssub.s32 %s22, 1
        // Predicated region
        $region13: #{tpu_custom_call.1} parent=11 // pred_check
          %p255 = pneg %p88
        $region14: #{tpu_custom_call.1} parent=11 // pred_check_branch
          %257 = sbr.rel (%p255) target = $region16
        $region15: #{tpu_custom_call.1} parent=11 // pred_region
          %s258 = smul.u32 16, %s32
          %s260 = ssub.s32 12288, 12288
          %261 = vsyncadd [#allocation7], %s260
          %s262 = smul.addr %s258, 6
          %s263 = smul.addr %s262, 128
          %s264 = scalar_lea.hbm %s1, %s263
          %s265 = sshll.u32 [#allocation6], 4
          %s266 = int_to_ptr.vmem [resolvable:$true] %s265
          %271 = dma.hbm_to_vmem [thread:$0]  %s264, 12288, %s266, [#allocation7], 768, 768, 48
        $region16: #{tpu_custom_call.1} parent=11 // pred_fallthru
          _
        // Predicated region
        $region17: #{tpu_custom_call.1} parent=11 // pred_check
          %p272 = pneg %p109
        $region18: #{tpu_custom_call.1} parent=11 // pred_check_branch
          %274 = sbr.rel (%p272) target = $region20
        $region19: #{tpu_custom_call.1} parent=11 // pred_region
          _
        $region20: #{tpu_custom_call.1} parent=11 // pred_fallthru
          _
        // Predicated region
        $region21: #{tpu_custom_call.1} parent=11 // pred_check
          %p275 = pneg %p130
        $region22: #{tpu_custom_call.1} parent=11 // pred_check_branch
          %277 = sbr.rel (%p275) target = $region24
        $region23: #{tpu_custom_call.1} parent=11 // pred_region
          %s279 = ssub.s32 16384, 16384
          %280 = vsyncadd [#allocation7], %s279
          %s281 = sshll.u32 [#allocation8], 4
          %s282 = int_to_ptr.vmem [resolvable:$true] %s281
          %287 = dma.hbm_to_vmem [thread:$0]  %s3, 16384, %s282, [#allocation7], 256, 256, 16
        $region24: #{tpu_custom_call.1} parent=11 // pred_fallthru
          _
        // Predicated region
        $region25: #{tpu_custom_call.1} parent=11 // pred_check
          %p288 = pneg %p151
        $region26: #{tpu_custom_call.1} parent=11 // pred_check_branch
          %290 = sbr.rel (%p288) target = $region28
        $region27: #{tpu_custom_call.1} parent=11 // pred_region
          _
        $region28: #{tpu_custom_call.1} parent=11 // pred_fallthru
          _
        // Predicated region
        $region29: #{tpu_custom_call.1} parent=11 // pred_check
          %p291 = pneg %p172
        $region30: #{tpu_custom_call.1} parent=11 // pred_check_branch
          %293 = sbr.rel (%p291) target = $region32
        $region31: #{tpu_custom_call.1} parent=11 // pred_region
          %s295 = ssub.s32 4096, 4096
          %296 = vsyncadd [#allocation10], %s295
          %s297 = sshll.u32 [#allocation9], 4
          %s298 = int_to_ptr.vmem [resolvable:$true] %s297
          %303 = dma.hbm_to_vmem [thread:$0]  %s5, 4096, %s298, [#allocation10], 128, 128, 8
        $region32: #{tpu_custom_call.1} parent=11 // pred_fallthru
          _
        // Predicated region
        $region33: #{tpu_custom_call.1} parent=11 // pred_check
          %p304 = pneg %p193
        $region34: #{tpu_custom_call.1} parent=11 // pred_check_branch
          %306 = sbr.rel (%p304) target = $region36
        $region35: #{tpu_custom_call.1} parent=11 // pred_region
          %s308 = ssub.s32 4096, 4096
          %309 = vsyncadd [#allocation10], %s308
          %s310 = sshll.u32 [#allocation11], 4
          %s311 = int_to_ptr.vmem [resolvable:$true] %s310
          %316 = dma.hbm_to_vmem [thread:$0]  %s6, 4096, %s311, [#allocation10], 128, 128, 8
        $region36: #{tpu_custom_call.1} parent=11 // pred_fallthru
          _
        // Predicated region
        $region37: #{tpu_custom_call.1} parent=11 // pred_check
          %p317 = pneg %p214
        $region38: #{tpu_custom_call.1} parent=11 // pred_check_branch
          %319 = sbr.rel (%p317) target = $region40
        $region39: #{tpu_custom_call.1} parent=11 // pred_region
          _
        $region40: #{tpu_custom_call.1} parent=11 // pred_fallthru
          _
      $region12: #{tpu_custom_call.1} parent=5 // pred_fallthru
        _
      %p320 = scmp.lt.s32.totalorder %s22, 2
      // Predicated region
      $region41: #{tpu_custom_call.1} parent=5 // pred_check
        %p321 = pneg %p320
      $region42: #{tpu_custom_call.1} parent=5 // pred_check_branch
        %323 = sbr.rel (%p321) target = $region44
      $region43: #{tpu_custom_call.1} parent=5 // pred_region
        // Predicated region
        $region45: #{tpu_custom_call.1} parent=43 // pred_check
          %p324 = pneg %p56
        $region46: #{tpu_custom_call.1} parent=43 // pred_check_branch
          %326 = sbr.rel (%p324) target = $region48
        $region47: #{tpu_custom_call.1} parent=43 // pred_region
          %s327 = sand.u32 %s46, 1
          %s328 = scalar_lea.sflag [#allocation4], %s327
          %s329 = sand.u32 %s46, 1
          %s330 = smul.addr %s329, 8
          %s331 = scalar_lea.vmem [#allocation3], %s330
          %s333 = ssub.s32 128, 128
          %334 = vsyncadd %s328, %s333
          %s335 = sadd.s32 %s30, %s29
          %s336 = smul.addr %s335, 128
          %s337 = scalar_lea.hbm %s0, %s336
          %s339 = sshll.u32 %s331, 4
          %s340 = int_to_ptr.vmem [resolvable:$true] %s339
          %342 = dma.hbm_to_vmem [thread:$0]  %s337, 128, %s340, %s328
        $region48: #{tpu_custom_call.1} parent=43 // pred_fallthru
          _
      $region44: #{tpu_custom_call.1} parent=5 // pred_fallthru
        _
      %p343 = scmp.le.s32.totalorder 1, %s22
      %p344 = scmp.lt.s32.totalorder %s22, 3
      %p345 = pnand %p343, %p344
      %p346 = pneg %p345
      // Predicated region
      $region49: #{tpu_custom_call.1} parent=5 // pred_check
        _
      $region50: #{tpu_custom_call.1} parent=5 // pred_check_branch
        %348 = sbr.rel (%p345) target = $region52
      $region51: #{tpu_custom_call.1} parent=5 // pred_region
        %s349 = ssub.s32 %s22, 1
        %s350 = sand.u32 %s49, 1
        %s351 = scalar_lea.sflag [#allocation4], %s350
        %s352 = sand.u32 %s49, 1
        %s353 = smul.addr %s352, 8
        %s354 = scalar_lea.vmem [#allocation3], %s353
        // Predicated region
        $region53: #{tpu_custom_call.1} parent=51 // pred_check
          %p355 = pneg %p62
        $region54: #{tpu_custom_call.1} parent=51 // pred_check_branch
          %357 = sbr.rel (%p355) target = $region56
        $region55: #{tpu_custom_call.1} parent=51 // pred_region
          %358 = dma.done %s351, 128
        $region56: #{tpu_custom_call.1} parent=51 // pred_fallthru
          _
        // Predicated region
        $region57: #{tpu_custom_call.1} parent=51 // pred_check
          %p359 = pneg %p88
        $region58: #{tpu_custom_call.1} parent=51 // pred_check_branch
          %361 = sbr.rel (%p359) target = $region60
        $region59: #{tpu_custom_call.1} parent=51 // pred_region
          %362 = dma.done [#allocation7], 12288
        $region60: #{tpu_custom_call.1} parent=51 // pred_fallthru
          _
        // Predicated region
        $region61: #{tpu_custom_call.1} parent=51 // pred_check
          %p363 = pneg %p130
        $region62: #{tpu_custom_call.1} parent=51 // pred_check_branch
          %365 = sbr.rel (%p363) target = $region64
        $region63: #{tpu_custom_call.1} parent=51 // pred_region
          %366 = dma.done [#allocation7], 16384
        $region64: #{tpu_custom_call.1} parent=51 // pred_fallthru
          _
        // Predicated region
        $region65: #{tpu_custom_call.1} parent=51 // pred_check
          %p367 = pneg %p172
        $region66: #{tpu_custom_call.1} parent=51 // pred_check_branch
          %369 = sbr.rel (%p367) target = $region68
        $region67: #{tpu_custom_call.1} parent=51 // pred_region
          %370 = dma.done [#allocation10], 4096
        $region68: #{tpu_custom_call.1} parent=51 // pred_fallthru
          _
        // Predicated region
        $region69: #{tpu_custom_call.1} parent=51 // pred_check
          %p371 = pneg %p193
        $region70: #{tpu_custom_call.1} parent=51 // pred_check_branch
          %373 = sbr.rel (%p371) target = $region72
        $region71: #{tpu_custom_call.1} parent=51 // pred_region
          %374 = dma.done [#allocation10], 4096
        $region72: #{tpu_custom_call.1} parent=51 // pred_fallthru
          _
        %s375 = sand.u32 %s49, 1
        %s376 = scalar_lea.sflag [#allocation4], %s375
        %s377 = sand.u32 %s49, 1
        %s378 = smul.addr %s377, 8
        %s379 = scalar_lea.vmem [#allocation3], %s378
        %p380 = pneg %p62
        %p381 = pneg %p59
        %p382 = pneg %p88
        %p383 = pneg %p85
        %p384 = pneg %p109
        %p385 = pneg %p106
        %p386 = pneg %p130
        %p387 = pneg %p127
        %p388 = pneg %p151
        %p389 = pneg %p148
        %p390 = pneg %p172
        %p391 = pneg %p169
        %p392 = pneg %p193
        %p393 = pneg %p190
        %p394 = pneg %p214
        %p395 = pneg %p211
        %p396 = pneg %p240
        %p397 = pneg %p237
        %s398 = sand.u32 %s227, 1
        %s399 = scalar_lea.sflag [#allocation5], %s398
        %s400 = sand.u32 %s227, 1
        %s401 = smul.addr %s400, 8
        %s402 = scalar_lea.vmem [#allocation12], %s401
        %s403 = smul.u32 16, %s32
        %p404 = scmp.eq.s32.totalorder %s32, 0
        // Predicated region
        $region73: #{tpu_custom_call.1} parent=51 // pred_check
          %p405 = pneg %p404
        $region74: #{tpu_custom_call.1} parent=51 // pred_check_branch
          %407 = sbr.rel (%p405) target = $region76
        $region75: #{tpu_custom_call.1} parent=51 // pred_region
          %408 = vst [vmem:[#allocation2] sm:$0xff] 0.0
          %409 = vst [vmem:[#allocation2 + $0x8] sm:$0xff] 0.0
          %410 = vst [vmem:[#allocation2 + $0x10] sm:$0xff] 0.0
          %411 = vst [vmem:[#allocation2 + $0x18] sm:$0xff] 0.0
          %412 = vst [vmem:[#allocation2 + $0x20] sm:$0xff] 0.0
          %413 = vst [vmem:[#allocation2 + $0x28] sm:$0xff] 0.0
        $region76: #{tpu_custom_call.1} parent=51 // pred_fallthru
          _
        %v414 = vld [vmem:[#allocation2] sm:$0xff]
        %v415 = vld [vmem:[#allocation2 + $0x8] sm:$0xff]
        %v416 = vld [vmem:[#allocation2 + $0x10] sm:$0xff]
        %v417 = vld [vmem:[#allocation2 + $0x18] sm:$0xff]
        %v418 = vld [vmem:[#allocation2 + $0x20] sm:$0xff]
        %v419 = vld [vmem:[#allocation2 + $0x28] sm:$0xff]
        %v420 = vld [vmem:[%s354] sm:$0xff]
        %v421 = vld [vmem:[#allocation6] sm:$0xff]
        %v422 = vld [vmem:[#allocation6 + $0x8] sm:$0xff]
        %v423 = vld [vmem:[#allocation6 + $0x10] sm:$0xff]
        %v424 = vld [vmem:[#allocation6 + $0x18] sm:$0xff]
        %v425 = vld [vmem:[#allocation6 + $0x20] sm:$0xff]
        %v426 = vld [vmem:[#allocation6 + $0x28] sm:$0xff]
        %v427 = vld [vmem:[#allocation6 + $0x30] sm:$0xff]
        %v428 = vld [vmem:[#allocation6 + $0x38] sm:$0xff]
        %v429 = vld [vmem:[#allocation6 + $0x40] sm:$0xff]
        %v430 = vld [vmem:[#allocation6 + $0x48] sm:$0xff]
        %v431 = vld [vmem:[#allocation6 + $0x50] sm:$0xff]
        %v432 = vld [vmem:[#allocation6 + $0x58] sm:$0xff]
        %v433 = vld [vmem:[#allocation6 + $0x60] sm:$0xff]
        %v434 = vld [vmem:[#allocation6 + $0x68] sm:$0xff]
        %v435 = vld [vmem:[#allocation6 + $0x70] sm:$0xff]
        %v436 = vld [vmem:[#allocation6 + $0x78] sm:$0xff]
        %v437 = vld [vmem:[#allocation6 + $0x80] sm:$0xff]
        %v438 = vld [vmem:[#allocation6 + $0x88] sm:$0xff]
        %v439 = vld [vmem:[#allocation6 + $0x90] sm:$0xff]
        %v440 = vld [vmem:[#allocation6 + $0x98] sm:$0xff]
        %v441 = vld [vmem:[#allocation6 + $0xa0] sm:$0xff]
        %v442 = vld [vmem:[#allocation6 + $0xa8] sm:$0xff]
        %v443 = vld [vmem:[#allocation6 + $0xb0] sm:$0xff]
        %v444 = vld [vmem:[#allocation6 + $0xb8] sm:$0xff]
        %v445 = vld [vmem:[#allocation6 + $0xc0] sm:$0xff]
        %v446 = vld [vmem:[#allocation6 + $0xc8] sm:$0xff]
        %v447 = vld [vmem:[#allocation6 + $0xd0] sm:$0xff]
        %v448 = vld [vmem:[#allocation6 + $0xd8] sm:$0xff]
        %v449 = vld [vmem:[#allocation6 + $0xe0] sm:$0xff]
        %v450 = vld [vmem:[#allocation6 + $0xe8] sm:$0xff]
        %v451 = vld [vmem:[#allocation6 + $0xf0] sm:$0xff]
        %v452 = vld [vmem:[#allocation6 + $0xf8] sm:$0xff]
        %v453 = vld [vmem:[#allocation6 + $0x100] sm:$0xff]
        %v454 = vld [vmem:[#allocation6 + $0x108] sm:$0xff]
        %v455 = vld [vmem:[#allocation6 + $0x110] sm:$0xff]
        %v456 = vld [vmem:[#allocation6 + $0x118] sm:$0xff]
        %v457 = vld [vmem:[#allocation6 + $0x120] sm:$0xff]
        %v458 = vld [vmem:[#allocation6 + $0x128] sm:$0xff]
        %v459 = vld [vmem:[#allocation6 + $0x130] sm:$0xff]
        %v460 = vld [vmem:[#allocation6 + $0x138] sm:$0xff]
        %v461 = vld [vmem:[#allocation6 + $0x140] sm:$0xff]
        %v462 = vld [vmem:[#allocation6 + $0x148] sm:$0xff]
        %v463 = vld [vmem:[#allocation6 + $0x150] sm:$0xff]
        %v464 = vld [vmem:[#allocation6 + $0x158] sm:$0xff]
        %v465 = vld [vmem:[#allocation6 + $0x160] sm:$0xff]
        %v466 = vld [vmem:[#allocation6 + $0x168] sm:$0xff]
        %v467 = vld [vmem:[#allocation6 + $0x170] sm:$0xff]
        %v468 = vld [vmem:[#allocation6 + $0x178] sm:$0xff]
        %v469 = vld [vmem:[#allocation6 + $0x180] sm:$0xff]
        %v470 = vld [vmem:[#allocation6 + $0x188] sm:$0xff]
        %v471 = vld [vmem:[#allocation6 + $0x190] sm:$0xff]
        %v472 = vld [vmem:[#allocation6 + $0x198] sm:$0xff]
        %v473 = vld [vmem:[#allocation6 + $0x1a0] sm:$0xff]
        %v474 = vld [vmem:[#allocation6 + $0x1a8] sm:$0xff]
        %v475 = vld [vmem:[#allocation6 + $0x1b0] sm:$0xff]
        %v476 = vld [vmem:[#allocation6 + $0x1b8] sm:$0xff]
        %v477 = vld [vmem:[#allocation6 + $0x1c0] sm:$0xff]
        %v478 = vld [vmem:[#allocation6 + $0x1c8] sm:$0xff]
        %v479 = vld [vmem:[#allocation6 + $0x1d0] sm:$0xff]
        %v480 = vld [vmem:[#allocation6 + $0x1d8] sm:$0xff]
        %v481 = vld [vmem:[#allocation6 + $0x1e0] sm:$0xff]
        %v482 = vld [vmem:[#allocation6 + $0x1e8] sm:$0xff]
        %v483 = vld [vmem:[#allocation6 + $0x1f0] sm:$0xff]
        %v484 = vld [vmem:[#allocation6 + $0x1f8] sm:$0xff]
        %v485 = vld [vmem:[#allocation6 + $0x200] sm:$0xff]
        %v486 = vld [vmem:[#allocation6 + $0x208] sm:$0xff]
        %v487 = vld [vmem:[#allocation6 + $0x210] sm:$0xff]
        %v488 = vld [vmem:[#allocation6 + $0x218] sm:$0xff]
        %v489 = vld [vmem:[#allocation6 + $0x220] sm:$0xff]
        %v490 = vld [vmem:[#allocation6 + $0x228] sm:$0xff]
        %v491 = vld [vmem:[#allocation6 + $0x230] sm:$0xff]
        %v492 = vld [vmem:[#allocation6 + $0x238] sm:$0xff]
        %v493 = vld [vmem:[#allocation6 + $0x240] sm:$0xff]
        %v494 = vld [vmem:[#allocation6 + $0x248] sm:$0xff]
        %v495 = vld [vmem:[#allocation6 + $0x250] sm:$0xff]
        %v496 = vld [vmem:[#allocation6 + $0x258] sm:$0xff]
        %v497 = vld [vmem:[#allocation6 + $0x260] sm:$0xff]
        %v498 = vld [vmem:[#allocation6 + $0x268] sm:$0xff]
        %v499 = vld [vmem:[#allocation6 + $0x270] sm:$0xff]
        %v500 = vld [vmem:[#allocation6 + $0x278] sm:$0xff]
        %v501 = vld [vmem:[#allocation6 + $0x280] sm:$0xff]
        %v502 = vld [vmem:[#allocation6 + $0x288] sm:$0xff]
        %v503 = vld [vmem:[#allocation6 + $0x290] sm:$0xff]
        %v504 = vld [vmem:[#allocation6 + $0x298] sm:$0xff]
        %v505 = vld [vmem:[#allocation6 + $0x2a0] sm:$0xff]
        %v506 = vld [vmem:[#allocation6 + $0x2a8] sm:$0xff]
        %v507 = vld [vmem:[#allocation6 + $0x2b0] sm:$0xff]
        %v508 = vld [vmem:[#allocation6 + $0x2b8] sm:$0xff]
        %v509 = vld [vmem:[#allocation6 + $0x2c0] sm:$0xff]
        %v510 = vld [vmem:[#allocation6 + $0x2c8] sm:$0xff]
        %v511 = vld [vmem:[#allocation6 + $0x2d0] sm:$0xff]
        %v512 = vld [vmem:[#allocation6 + $0x2d8] sm:$0xff]
        %v513 = vld [vmem:[#allocation6 + $0x2e0] sm:$0xff]
        %v514 = vld [vmem:[#allocation6 + $0x2e8] sm:$0xff]
        %v515 = vld [vmem:[#allocation6 + $0x2f0] sm:$0xff]
        %v516 = vld [vmem:[#allocation6 + $0x2f8] sm:$0xff]
        %517 = vmatprep.subr.mxu0 %v422
        %518 = vmatpush1.msra.mxu0 %v421
        %519 = vmatprep.subr.mxu0 %v428
        %520 = vmatpush1.msra.mxu0 %v427
        %521 = vmatprep.subr.mxu0 %v434
        %522 = vmatpush1.msra.mxu0 %v433
        %523 = vmatprep.subr.mxu0 %v440
        %524 = vmatpush1.msra.mxu0 %v439
        %525 = vmatprep.subr.mxu0 %v446
        %526 = vmatpush1.msra.mxu0 %v445
        %527 = vmatprep.subr.mxu0 %v452
        %528 = vmatpush1.msra.mxu0 %v451
        %529 = vmatprep.subr.mxu0 %v458
        %530 = vmatpush1.msra.mxu0 %v457
        %531 = vmatprep.subr.mxu0 %v464
        %532 = vmatpush1.msra.mxu0 %v463
        %533 = vmatprep.subr.mxu0 %v470
        %534 = vmatpush1.msra.mxu0 %v469
        %535 = vmatprep.subr.mxu0 %v476
        %536 = vmatpush1.msra.mxu0 %v475
        %537 = vmatprep.subr.mxu0 %v482
        %538 = vmatpush1.msra.mxu0 %v481
        %539 = vmatprep.subr.mxu0 %v488
        %540 = vmatpush1.msra.mxu0 %v487
        %541 = vmatprep.subr.mxu0 %v494
        %542 = vmatpush1.msra.mxu0 %v493
        %543 = vmatprep.subr.mxu0 %v500
        %544 = vmatpush1.msra.mxu0 %v499
        %545 = vmatprep.subr.mxu0 %v506
        %546 = vmatpush1.msra.mxu0 %v505
        %547 = vmatprep.subr.mxu0 %v512
        %548 = vmatpush1.msra.mxu0 %v511
        %549 = vmatprep.subr.mxu0 0.0
        %550 = vmatpush1.msra.mxu0 0.0
        %551 = vmatprep.subr.mxu0 0.0
        %552 = vmatpush1.msra.mxu0 0.0
        %553 = vmatprep.subr.mxu0 0.0
        %554 = vmatpush1.msra.mxu0 0.0
        %555 = vmatprep.subr.mxu0 0.0
        %556 = vmatpush1.msra.mxu0 0.0
        %557 = vmatprep.subr.mxu0 0.0
        %558 = vmatpush1.msra.mxu0 0.0
        %559 = vmatprep.subr.mxu0 0.0
        %560 = vmatpush1.msra.mxu0 0.0
        %561 = vmatprep.subr.mxu0 0.0
        %562 = vmatpush1.msra.mxu0 0.0
        %563 = vmatprep.subr.mxu0 0.0
        %564 = vmatpush1.msra.mxu0 0.0
        %565 = vmatprep.subr.mxu0 0.0
        %566 = vmatpush1.msra.mxu0 0.0
        %567 = vmatprep.subr.mxu0 0.0
        %568 = vmatpush1.msra.mxu0 0.0
        %569 = vmatprep.subr.mxu0 0.0
        %570 = vmatpush1.msra.mxu0 0.0
        %571 = vmatprep.subr.mxu0 0.0
        %572 = vmatpush1.msra.mxu0 0.0
        %573 = vmatprep.subr.mxu0 0.0
        %574 = vmatpush1.msra.mxu0 0.0
        %575 = vmatprep.subr.mxu0 0.0
        %576 = vmatpush1.msra.mxu0 0.0
        %577 = vmatprep.subr.mxu0 0.0
        %578 = vmatpush1.msra.mxu0 0.0
        %579 = vmatprep.subr.mxu0 0.0
        %580 = vmatpush1.msra.mxu0 0.0
        %581 = vmatprep.mubr.f32.mxu0 0.0
        %582 = vmatmul.mubr.f32.gmra.mrb[0].mxu0 %v420
        %v583 = vpop.f32.mrb[0].mxu0
        %v584 = vadd.f32 0.0, %v583
        %v585 = vpop.f32.mrb[0].mxu0
        %v586 = vadd.f32 0.0, %v585
        %587 = vdwg.mxu0
        %588 = vmatprep.subr.mxu0 %v424
        %589 = vmatpush1.msra.mxu0 %v423
        %590 = vmatprep.subr.mxu0 %v430
        %591 = vmatpush1.msra.mxu0 %v429
        %592 = vmatprep.subr.mxu0 %v436
        %593 = vmatpush1.msra.mxu0 %v435
        %594 = vmatprep.subr.mxu0 %v442
        %595 = vmatpush1.msra.mxu0 %v441
        %596 = vmatprep.subr.mxu0 %v448
        %597 = vmatpush1.msra.mxu0 %v447
        %598 = vmatprep.subr.mxu0 %v454
        %599 = vmatpush1.msra.mxu0 %v453
        %600 = vmatprep.subr.mxu0 %v460
        %601 = vmatpush1.msra.mxu0 %v459
        %602 = vmatprep.subr.mxu0 %v466
        %603 = vmatpush1.msra.mxu0 %v465
        %604 = vmatprep.subr.mxu0 %v472
        %605 = vmatpush1.msra.mxu0 %v471
        %606 = vmatprep.subr.mxu0 %v478
        %607 = vmatpush1.msra.mxu0 %v477
        %608 = vmatprep.subr.mxu0 %v484
        %609 = vmatpush1.msra.mxu0 %v483
        %610 = vmatprep.subr.mxu0 %v490
        %611 = vmatpush1.msra.mxu0 %v489
        %612 = vmatprep.subr.mxu0 %v496
        %613 = vmatpush1.msra.mxu0 %v495
        %614 = vmatprep.subr.mxu0 %v502
        %615 = vmatpush1.msra.mxu0 %v501
        %616 = vmatprep.subr.mxu0 %v508
        %617 = vmatpush1.msra.mxu0 %v507
        %618 = vmatprep.subr.mxu0 %v514
        %619 = vmatpush1.msra.mxu0 %v513
        %620 = vmatprep.subr.mxu0 0.0
        %621 = vmatpush1.msra.mxu0 0.0
        %622 = vmatprep.subr.mxu0 0.0
        %623 = vmatpush1.msra.mxu0 0.0
        %624 = vmatprep.subr.mxu0 0.0
        %625 = vmatpush1.msra.mxu0 0.0
        %626 = vmatprep.subr.mxu0 0.0
        %627 = vmatpush1.msra.mxu0 0.0
        %628 = vmatprep.subr.mxu0 0.0
        %629 = vmatpush1.msra.mxu0 0.0
        %630 = vmatprep.subr.mxu0 0.0
        %631 = vmatpush1.msra.mxu0 0.0
        %632 = vmatprep.subr.mxu0 0.0
        %633 = vmatpush1.msra.mxu0 0.0
        %634 = vmatprep.subr.mxu0 0.0
        %635 = vmatpush1.msra.mxu0 0.0
        %636 = vmatprep.subr.mxu0 0.0
        %637 = vmatpush1.msra.mxu0 0.0
        %638 = vmatprep.subr.mxu0 0.0
        %639 = vmatpush1.msra.mxu0 0.0
        %640 = vmatprep.subr.mxu0 0.0
        %641 = vmatpush1.msra.mxu0 0.0
        %642 = vmatprep.subr.mxu0 0.0
        %643 = vmatpush1.msra.mxu0 0.0
        %644 = vmatprep.subr.mxu0 0.0
        %645 = vmatpush1.msra.mxu0 0.0
        %646 = vmatprep.subr.mxu0 0.0
        %647 = vmatpush1.msra.mxu0 0.0
        %648 = vmatprep.subr.mxu0 0.0
        %649 = vmatpush1.msra.mxu0 0.0
        %650 = vmatprep.subr.mxu0 0.0
        %651 = vmatpush1.msra.mxu0 0.0
        %652 = vmatprep.mubr.f32.mxu0 0.0
        %653 = vmatmul.mubr.f32.gmra.mrb[0].mxu0 %v420
        %v654 = vpop.f32.mrb[0].mxu0
        %v655 = vadd.f32 0.0, %v654
        %v656 = vpop.f32.mrb[0].mxu0
        %v657 = vadd.f32 0.0, %v656
        %658 = vdwg.mxu0
        %659 = vmatprep.subr.mxu0 %v426
        %660 = vmatpush1.msra.mxu0 %v425
        %661 = vmatprep.subr.mxu0 %v432
        %662 = vmatpush1.msra.mxu0 %v431
        %663 = vmatprep.subr.mxu0 %v438
        %664 = vmatpush1.msra.mxu0 %v437
        %665 = vmatprep.subr.mxu0 %v444
        %666 = vmatpush1.msra.mxu0 %v443
        %667 = vmatprep.subr.mxu0 %v450
        %668 = vmatpush1.msra.mxu0 %v449
        %669 = vmatprep.subr.mxu0 %v456
        %670 = vmatpush1.msra.mxu0 %v455
        %671 = vmatprep.subr.mxu0 %v462
        %672 = vmatpush1.msra.mxu0 %v461
        %673 = vmatprep.subr.mxu0 %v468
        %674 = vmatpush1.msra.mxu0 %v467
        %675 = vmatprep.subr.mxu0 %v474
        %676 = vmatpush1.msra.mxu0 %v473
        %677 = vmatprep.subr.mxu0 %v480
        %678 = vmatpush1.msra.mxu0 %v479
        %679 = vmatprep.subr.mxu0 %v486
        %680 = vmatpush1.msra.mxu0 %v485
        %681 = vmatprep.subr.mxu0 %v492
        %682 = vmatpush1.msra.mxu0 %v491
        %683 = vmatprep.subr.mxu0 %v498
        %684 = vmatpush1.msra.mxu0 %v497
        %685 = vmatprep.subr.mxu0 %v504
        %686 = vmatpush1.msra.mxu0 %v503
        %687 = vmatprep.subr.mxu0 %v510
        %688 = vmatpush1.msra.mxu0 %v509
        %689 = vmatprep.subr.mxu0 %v516
        %690 = vmatpush1.msra.mxu0 %v515
        %691 = vmatprep.subr.mxu0 0.0
        %692 = vmatpush1.msra.mxu0 0.0
        %693 = vmatprep.subr.mxu0 0.0
        %694 = vmatpush1.msra.mxu0 0.0
        %695 = vmatprep.subr.mxu0 0.0
        %696 = vmatpush1.msra.mxu0 0.0
        %697 = vmatprep.subr.mxu0 0.0
        %698 = vmatpush1.msra.mxu0 0.0
        %699 = vmatprep.subr.mxu0 0.0
        %700 = vmatpush1.msra.mxu0 0.0
        %701 = vmatprep.subr.mxu0 0.0
        %702 = vmatpush1.msra.mxu0 0.0
        %703 = vmatprep.subr.mxu0 0.0
        %704 = vmatpush1.msra.mxu0 0.0
        %705 = vmatprep.subr.mxu0 0.0
        %706 = vmatpush1.msra.mxu0 0.0
        %707 = vmatprep.subr.mxu0 0.0
        %708 = vmatpush1.msra.mxu0 0.0
        %709 = vmatprep.subr.mxu0 0.0
        %710 = vmatpush1.msra.mxu0 0.0
        %711 = vmatprep.subr.mxu0 0.0
        %712 = vmatpush1.msra.mxu0 0.0
        %713 = vmatprep.subr.mxu0 0.0
        %714 = vmatpush1.msra.mxu0 0.0
        %715 = vmatprep.subr.mxu0 0.0
        %716 = vmatpush1.msra.mxu0 0.0
        %717 = vmatprep.subr.mxu0 0.0
        %718 = vmatpush1.msra.mxu0 0.0
        %719 = vmatprep.subr.mxu0 0.0
        %720 = vmatpush1.msra.mxu0 0.0
        %721 = vmatprep.subr.mxu0 0.0
        %722 = vmatpush1.msra.mxu0 0.0
        %723 = vmatprep.mubr.f32.mxu0 0.0
        %724 = vmatmul.mubr.f32.gmra.mrb[0].mxu0 %v420
        %v725 = vpop.f32.mrb[0].mxu0
        %v726 = vadd.f32 0.0, %v725
        %v727 = vpop.f32.mrb[0].mxu0
        %v728 = vadd.f32 0.0, %v727
        %729 = vdwg.mxu0
        %v730 = vadd.f32 %v414, %v584
        %v731 = vadd.f32 %v415, %v586
        %v732 = vadd.f32 %v416, %v655
        %v733 = vadd.f32 %v417, %v657
        %v734 = vadd.f32 %v418, %v726
        %v735 = vadd.f32 %v419, %v728
        %736 = vst [vmem:[#allocation2] sm:$0xff] %v730
        %737 = vst [vmem:[#allocation2 + $0x8] sm:$0xff] %v731
        %738 = vst [vmem:[#allocation2 + $0x10] sm:$0xff] %v732
        %739 = vst [vmem:[#allocation2 + $0x18] sm:$0xff] %v733
        %740 = vst [vmem:[#allocation2 + $0x20] sm:$0xff] %v734
        %741 = vst [vmem:[#allocation2 + $0x28] sm:$0xff] %v735
        // Predicated region
        $region77: #{tpu_custom_call.1} parent=51 // pred_check
          %p742 = pneg %p404
        $region78: #{tpu_custom_call.1} parent=51 // pred_check_branch
          %744 = sbr.rel (%p742) target = $region80
        $region79: #{tpu_custom_call.1} parent=51 // pred_region
          %v745 = vld [vmem:[#allocation2] sm:$0xff]
          %v746 = vld [vmem:[#allocation2 + $0x8] sm:$0xff]
          %v747 = vld [vmem:[#allocation2 + $0x10] sm:$0xff]
          %v748 = vld [vmem:[#allocation2 + $0x18] sm:$0xff]
          %v749 = vld [vmem:[#allocation2 + $0x20] sm:$0xff]
          %v750 = vld [vmem:[#allocation2 + $0x28] sm:$0xff]
          %v751 = vld [vmem:[%s2] sm:$0x3f]
          %v753 = vlaneseq
          %v754 = vshrl.u32 %v753, 7
          %v755 = vsub.s32 0, %v754
          %v756 = vrot.slane %v751, %v755
          %v757 = vlaneseq
          %v758 = vshrl.u32 %v757, 7
          %v759 = vsub.s32 1, %v758
          %v760 = vrot.slane %v751, %v759
          %v761 = vlaneseq
          %v762 = vshrl.u32 %v761, 7
          %v763 = vsub.s32 2, %v762
          %v764 = vrot.slane %v751, %v763
          %v765 = vlaneseq
          %v766 = vshrl.u32 %v765, 7
          %v767 = vsub.s32 3, %v766
          %v768 = vrot.slane %v751, %v767
          %v769 = vlaneseq
          %v770 = vshrl.u32 %v769, 7
          %v771 = vsub.s32 4, %v770
          %v772 = vrot.slane %v751, %v771
          %v773 = vlaneseq
          %v774 = vshrl.u32 %v773, 7
          %v775 = vsub.s32 5, %v774
          %v776 = vrot.slane %v751, %v775
          %v783 = vadd.f32 %v745, %v756
          %v784 = vadd.f32 %v746, %v760
          %v785 = vadd.f32 %v747, %v764
          %v786 = vadd.f32 %v748, %v768
          %v787 = vadd.f32 %v749, %v772
          %v788 = vadd.f32 %v750, %v776
          %v789 = vmul.f32 %v783, 0.5
          %v790 = vmul.f32 %v784, 0.5
          %v791 = vmul.f32 %v785, 0.5
          %v792 = vmul.f32 %v786, 0.5
          %v793 = vmul.f32 %v787, 0.5
          %v794 = vmul.f32 %v788, 0.5
          %v795 = vmul.f32 %v783, 0.044715
          %v796 = vmul.f32 %v784, 0.044715
          %v797 = vmul.f32 %v785, 0.044715
          %v798 = vmul.f32 %v786, 0.044715
          %v799 = vmul.f32 %v787, 0.044715
          %v800 = vmul.f32 %v788, 0.044715
          %v801 = vmul.f32 %v795, %v783
          %v802 = vmul.f32 %v796, %v784
          %v803 = vmul.f32 %v797, %v785
          %v804 = vmul.f32 %v798, %v786
          %v805 = vmul.f32 %v799, %v787
          %v806 = vmul.f32 %v800, %v788
          %v807 = vmul.f32 %v801, %v783
          %v808 = vmul.f32 %v802, %v784
          %v809 = vmul.f32 %v803, %v785
          %v810 = vmul.f32 %v804, %v786
          %v811 = vmul.f32 %v805, %v787
          %v812 = vmul.f32 %v806, %v788
          %v813 = vadd.f32 %v783, %v807
          %v814 = vadd.f32 %v784, %v808
          %v815 = vadd.f32 %v785, %v809
          %v816 = vadd.f32 %v786, %v810
          %v817 = vadd.f32 %v787, %v811
          %v818 = vadd.f32 %v788, %v812
          %v819 = vmul.f32 %v813, 0.7978846
          %v820 = vmul.f32 %v814, 0.7978846
          %v821 = vmul.f32 %v815, 0.7978846
          %v822 = vmul.f32 %v816, 0.7978846
          %v823 = vmul.f32 %v817, 0.7978846
          %v824 = vmul.f32 %v818, 0.7978846
          %v825 = vtanh.pop %v819
          %v826 = vtanh.pop %v820
          %v827 = vtanh.pop %v821
          %v828 = vtanh.pop %v822
          %v829 = vtanh.pop %v823
          %v830 = vtanh.pop %v824
          %v831 = vadd.f32 %v825, 1.0
          %v832 = vadd.f32 %v826, 1.0
          %v833 = vadd.f32 %v827, 1.0
          %v834 = vadd.f32 %v828, 1.0
          %v835 = vadd.f32 %v829, 1.0
          %v836 = vadd.f32 %v830, 1.0
          %v837 = vmul.f32 %v789, %v831
          %v838 = vmul.f32 %v790, %v832
          %v839 = vmul.f32 %v791, %v833
          %v840 = vmul.f32 %v792, %v834
          %v841 = vmul.f32 %v793, %v835
          %v842 = vmul.f32 %v794, %v836
          %v843 = vld [vmem:[#allocation8] sm:$0xff]
          %v844 = vld [vmem:[#allocation8 + $0x8] sm:$0xff]
          %v845 = vld [vmem:[#allocation8 + $0x10] sm:$0xff]
          %v846 = vld [vmem:[#allocation8 + $0x18] sm:$0xff]
          %v847 = vld [vmem:[#allocation8 + $0x20] sm:$0xff]
          %v848 = vld [vmem:[#allocation8 + $0x28] sm:$0xff]
          %v849 = vld [vmem:[#allocation8 + $0x30] sm:$0xff]
          %v850 = vld [vmem:[#allocation8 + $0x38] sm:$0xff]
          %v851 = vld [vmem:[#allocation8 + $0x40] sm:$0xff]
          %v852 = vld [vmem:[#allocation8 + $0x48] sm:$0xff]
          %v853 = vld [vmem:[#allocation8 + $0x50] sm:$0xff]
          %v854 = vld [vmem:[#allocation8 + $0x58] sm:$0xff]
          %v855 = vld [vmem:[#allocation8 + $0x60] sm:$0xff]
          %v856 = vld [vmem:[#allocation8 + $0x68] sm:$0xff]
          %v857 = vld [vmem:[#allocation8 + $0x70] sm:$0xff]
          %v858 = vld [vmem:[#allocation8 + $0x78] sm:$0xff]
          %v859 = vld [vmem:[#allocation8 + $0x80] sm:$0xff]
          %v860 = vld [vmem:[#allocation8 + $0x88] sm:$0xff]
          %v861 = vld [vmem:[#allocation8 + $0x90] sm:$0xff]
          %v862 = vld [vmem:[#allocation8 + $0x98] sm:$0xff]
          %v863 = vld [vmem:[#allocation8 + $0xa0] sm:$0xff]
          %v864 = vld [vmem:[#allocation8 + $0xa8] sm:$0xff]
          %v865 = vld [vmem:[#allocation8 + $0xb0] sm:$0xff]
          %v866 = vld [vmem:[#allocation8 + $0xb8] sm:$0xff]
          %v867 = vld [vmem:[#allocation8 + $0xc0] sm:$0xff]
          %v868 = vld [vmem:[#allocation8 + $0xc8] sm:$0xff]
          %v869 = vld [vmem:[#allocation8 + $0xd0] sm:$0xff]
          %v870 = vld [vmem:[#allocation8 + $0xd8] sm:$0xff]
          %v871 = vld [vmem:[#allocation8 + $0xe0] sm:$0xff]
          %v872 = vld [vmem:[#allocation8 + $0xe8] sm:$0xff]
          %v873 = vld [vmem:[#allocation8 + $0xf0] sm:$0xff]
          %v874 = vld [vmem:[#allocation8 + $0xf8] sm:$0xff]
          %v875 = vld [vmem:[#allocation8 + $0x100] sm:$0xff]
          %v876 = vld [vmem:[#allocation8 + $0x108] sm:$0xff]
          %v877 = vld [vmem:[#allocation8 + $0x110] sm:$0xff]
          %v878 = vld [vmem:[#allocation8 + $0x118] sm:$0xff]
          %v879 = vld [vmem:[#allocation8 + $0x120] sm:$0xff]
          %v880 = vld [vmem:[#allocation8 + $0x128] sm:$0xff]
          %v881 = vld [vmem:[#allocation8 + $0x130] sm:$0xff]
          %v882 = vld [vmem:[#allocation8 + $0x138] sm:$0xff]
          %v883 = vld [vmem:[#allocation8 + $0x140] sm:$0xff]
          %v884 = vld [vmem:[#allocation8 + $0x148] sm:$0xff]
          %v885 = vld [vmem:[#allocation8 + $0x150] sm:$0xff]
          %v886 = vld [vmem:[#allocation8 + $0x158] sm:$0xff]
          %v887 = vld [vmem:[#allocation8 + $0x160] sm:$0xff]
          %v888 = vld [vmem:[#allocation8 + $0x168] sm:$0xff]
          %v889 = vld [vmem:[#allocation8 + $0x170] sm:$0xff]
          %v890 = vld [vmem:[#allocation8 + $0x178] sm:$0xff]
          %v891 = vld [vmem:[#allocation8 + $0x180] sm:$0xff]
          %v892 = vld [vmem:[#allocation8 + $0x188] sm:$0xff]
          %v893 = vld [vmem:[#allocation8 + $0x190] sm:$0xff]
          %v894 = vld [vmem:[#allocation8 + $0x198] sm:$0xff]
          %v895 = vld [vmem:[#allocation8 + $0x1a0] sm:$0xff]
          %v896 = vld [vmem:[#allocation8 + $0x1a8] sm:$0xff]
          %v897 = vld [vmem:[#allocation8 + $0x1b0] sm:$0xff]
          %v898 = vld [vmem:[#allocation8 + $0x1b8] sm:$0xff]
          %v899 = vld [vmem:[#allocation8 + $0x1c0] sm:$0xff]
          %v900 = vld [vmem:[#allocation8 + $0x1c8] sm:$0xff]
          %v901 = vld [vmem:[#allocation8 + $0x1d0] sm:$0xff]
          %v902 = vld [vmem:[#allocation8 + $0x1d8] sm:$0xff]
          %v903 = vld [vmem:[#allocation8 + $0x1e0] sm:$0xff]
          %v904 = vld [vmem:[#allocation8 + $0x1e8] sm:$0xff]
          %v905 = vld [vmem:[#allocation8 + $0x1f0] sm:$0xff]
          %v906 = vld [vmem:[#allocation8 + $0x1f8] sm:$0xff]
          %v907 = vld [vmem:[#allocation8 + $0x200] sm:$0xff]
          %v908 = vld [vmem:[#allocation8 + $0x208] sm:$0xff]
          %v909 = vld [vmem:[#allocation8 + $0x210] sm:$0xff]
          %v910 = vld [vmem:[#allocation8 + $0x218] sm:$0xff]
          %v911 = vld [vmem:[#allocation8 + $0x220] sm:$0xff]
          %v912 = vld [vmem:[#allocation8 + $0x228] sm:$0xff]
          %v913 = vld [vmem:[#allocation8 + $0x230] sm:$0xff]
          %v914 = vld [vmem:[#allocation8 + $0x238] sm:$0xff]
          %v915 = vld [vmem:[#allocation8 + $0x240] sm:$0xff]
          %v916 = vld [vmem:[#allocation8 + $0x248] sm:$0xff]
          %v917 = vld [vmem:[#allocation8 + $0x250] sm:$0xff]
          %v918 = vld [vmem:[#allocation8 + $0x258] sm:$0xff]
          %v919 = vld [vmem:[#allocation8 + $0x260] sm:$0xff]
          %v920 = vld [vmem:[#allocation8 + $0x268] sm:$0xff]
          %v921 = vld [vmem:[#allocation8 + $0x270] sm:$0xff]
          %v922 = vld [vmem:[#allocation8 + $0x278] sm:$0xff]
          %v923 = vld [vmem:[#allocation8 + $0x280] sm:$0xff]
          %v924 = vld [vmem:[#allocation8 + $0x288] sm:$0xff]
          %v925 = vld [vmem:[#allocation8 + $0x290] sm:$0xff]
          %v926 = vld [vmem:[#allocation8 + $0x298] sm:$0xff]
          %v927 = vld [vmem:[#allocation8 + $0x2a0] sm:$0xff]
          %v928 = vld [vmem:[#allocation8 + $0x2a8] sm:$0xff]
          %v929 = vld [vmem:[#allocation8 + $0x2b0] sm:$0xff]
          %v930 = vld [vmem:[#allocation8 + $0x2b8] sm:$0xff]
          %v931 = vld [vmem:[#allocation8 + $0x2c0] sm:$0xff]
          %v932 = vld [vmem:[#allocation8 + $0x2c8] sm:$0xff]
          %v933 = vld [vmem:[#allocation8 + $0x2d0] sm:$0xff]
          %v934 = vld [vmem:[#allocation8 + $0x2d8] sm:$0xff]
          %v935 = vld [vmem:[#allocation8 + $0x2e0] sm:$0xff]
          %v936 = vld [vmem:[#allocation8 + $0x2e8] sm:$0xff]
          %v937 = vld [vmem:[#allocation8 + $0x2f0] sm:$0xff]
          %v938 = vld [vmem:[#allocation8 + $0x2f8] sm:$0xff]
          %v939 = vld [vmem:[#allocation8 + $0x300] sm:$0xff]
          %v940 = vld [vmem:[#allocation8 + $0x308] sm:$0xff]
          %v941 = vld [vmem:[#allocation8 + $0x310] sm:$0xff]
          %v942 = vld [vmem:[#allocation8 + $0x318] sm:$0xff]
          %v943 = vld [vmem:[#allocation8 + $0x320] sm:$0xff]
          %v944 = vld [vmem:[#allocation8 + $0x328] sm:$0xff]
          %v945 = vld [vmem:[#allocation8 + $0x330] sm:$0xff]
          %v946 = vld [vmem:[#allocation8 + $0x338] sm:$0xff]
          %v947 = vld [vmem:[#allocation8 + $0x340] sm:$0xff]
          %v948 = vld [vmem:[#allocation8 + $0x348] sm:$0xff]
          %v949 = vld [vmem:[#allocation8 + $0x350] sm:$0xff]
          %v950 = vld [vmem:[#allocation8 + $0x358] sm:$0xff]
          %v951 = vld [vmem:[#allocation8 + $0x360] sm:$0xff]
          %v952 = vld [vmem:[#allocation8 + $0x368] sm:$0xff]
          %v953 = vld [vmem:[#allocation8 + $0x370] sm:$0xff]
          %v954 = vld [vmem:[#allocation8 + $0x378] sm:$0xff]
          %v955 = vld [vmem:[#allocation8 + $0x380] sm:$0xff]
          %v956 = vld [vmem:[#allocation8 + $0x388] sm:$0xff]
          %v957 = vld [vmem:[#allocation8 + $0x390] sm:$0xff]
          %v958 = vld [vmem:[#allocation8 + $0x398] sm:$0xff]
          %v959 = vld [vmem:[#allocation8 + $0x3a0] sm:$0xff]
          %v960 = vld [vmem:[#allocation8 + $0x3a8] sm:$0xff]
          %v961 = vld [vmem:[#allocation8 + $0x3b0] sm:$0xff]
          %v962 = vld [vmem:[#allocation8 + $0x3b8] sm:$0xff]
          %v963 = vld [vmem:[#allocation8 + $0x3c0] sm:$0xff]
          %v964 = vld [vmem:[#allocation8 + $0x3c8] sm:$0xff]
          %v965 = vld [vmem:[#allocation8 + $0x3d0] sm:$0xff]
          %v966 = vld [vmem:[#allocation8 + $0x3d8] sm:$0xff]
          %v967 = vld [vmem:[#allocation8 + $0x3e0] sm:$0xff]
          %v968 = vld [vmem:[#allocation8 + $0x3e8] sm:$0xff]
          %v969 = vld [vmem:[#allocation8 + $0x3f0] sm:$0xff]
          %v970 = vld [vmem:[#allocation8 + $0x3f8] sm:$0xff]
          %v971 = vld [vmem:[%s4] sm:$0x3]
          %v973 = vlaneseq
          %v974 = vshrl.u32 %v973, 7
          %v975 = vsub.s32 0, %v974
          %v976 = vrot.slane %v971, %v975
          %v977 = vlaneseq
          %v978 = vshrl.u32 %v977, 7
          %v979 = vsub.s32 1, %v978
          %v980 = vrot.slane %v971, %v979
          %983 = vmatprep.subr.mxu0 %v844
          %984 = vmatpush1.msra.mxu0 %v843
          %985 = vmatprep.subr.mxu0 %v846
          %986 = vmatpush1.msra.mxu0 %v845
          %987 = vmatprep.subr.mxu0 %v848
          %988 = vmatpush1.msra.mxu0 %v847
          %989 = vmatprep.subr.mxu0 %v850
          %990 = vmatpush1.msra.mxu0 %v849
          %991 = vmatprep.subr.mxu0 %v852
          %992 = vmatpush1.msra.mxu0 %v851
          %993 = vmatprep.subr.mxu0 %v854
          %994 = vmatpush1.msra.mxu0 %v853
          %995 = vmatprep.subr.mxu0 %v856
          %996 = vmatpush1.msra.mxu0 %v855
          %997 = vmatprep.subr.mxu0 %v858
          %998 = vmatpush1.msra.mxu0 %v857
          %999 = vmatprep.subr.mxu0 %v860
          %1000 = vmatpush1.msra.mxu0 %v859
          %1001 = vmatprep.subr.mxu0 %v862
          %1002 = vmatpush1.msra.mxu0 %v861
          %1003 = vmatprep.subr.mxu0 %v864
          %1004 = vmatpush1.msra.mxu0 %v863
          %1005 = vmatprep.subr.mxu0 %v866
          %1006 = vmatpush1.msra.mxu0 %v865
          %1007 = vmatprep.subr.mxu0 %v868
          %1008 = vmatpush1.msra.mxu0 %v867
          %1009 = vmatprep.subr.mxu0 %v870
          %1010 = vmatpush1.msra.mxu0 %v869
          %1011 = vmatprep.subr.mxu0 %v872
          %1012 = vmatpush1.msra.mxu0 %v871
          %1013 = vmatprep.subr.mxu0 %v874
          %1014 = vmatpush1.msra.mxu0 %v873
          %1015 = vmatprep.subr.mxu0 %v876
          %1016 = vmatpush1.msra.mxu0 %v875
          %1017 = vmatprep.subr.mxu0 %v878
          %1018 = vmatpush1.msra.mxu0 %v877
          %1019 = vmatprep.subr.mxu0 %v880
          %1020 = vmatpush1.msra.mxu0 %v879
          %1021 = vmatprep.subr.mxu0 %v882
          %1022 = vmatpush1.msra.mxu0 %v881
          %1023 = vmatprep.subr.mxu0 %v884
          %1024 = vmatpush1.msra.mxu0 %v883
          %1025 = vmatprep.subr.mxu0 %v886
          %1026 = vmatpush1.msra.mxu0 %v885
          %1027 = vmatprep.subr.mxu0 %v888
          %1028 = vmatpush1.msra.mxu0 %v887
          %1029 = vmatprep.subr.mxu0 %v890
          %1030 = vmatpush1.msra.mxu0 %v889
          %1031 = vmatprep.subr.mxu0 %v892
          %1032 = vmatpush1.msra.mxu0 %v891
          %1033 = vmatprep.subr.mxu0 %v894
          %1034 = vmatpush1.msra.mxu0 %v893
          %1035 = vmatprep.subr.mxu0 %v896
          %1036 = vmatpush1.msra.mxu0 %v895
          %1037 = vmatprep.subr.mxu0 %v898
          %1038 = vmatpush1.msra.mxu0 %v897
          %1039 = vmatprep.subr.mxu0 %v900
          %1040 = vmatpush1.msra.mxu0 %v899
          %1041 = vmatprep.subr.mxu0 %v902
          %1042 = vmatpush1.msra.mxu0 %v901
          %1043 = vmatprep.subr.mxu0 %v904
          %1044 = vmatpush1.msra.mxu0 %v903
          %1045 = vmatprep.subr.mxu0 %v906
          %1046 = vmatpush1.msra.mxu0 %v905
          %1047 = vmatprep.mubr.f32.mxu0 %v838
          %1048 = vmatmul.mubr.f32.gmra.mrb[0].mxu0 %v837
          %v1049 = vpop.f32.mrb[0].mxu0
          %v1050 = vadd.f32 %v976, %v1049
          %v1051 = vpop.f32.mrb[0].mxu0
          %v1052 = vadd.f32 %v980, %v1051
          %1053 = vdwg.mxu0
          %1054 = vmatprep.subr.mxu0 %v908
          %1055 = vmatpush1.msra.mxu0 %v907
          %1056 = vmatprep.subr.mxu0 %v910
          %1057 = vmatpush1.msra.mxu0 %v909
          %1058 = vmatprep.subr.mxu0 %v912
          %1059 = vmatpush1.msra.mxu0 %v911
          %1060 = vmatprep.subr.mxu0 %v914
          %1061 = vmatpush1.msra.mxu0 %v913
          %1062 = vmatprep.subr.mxu0 %v916
          %1063 = vmatpush1.msra.mxu0 %v915
          %1064 = vmatprep.subr.mxu0 %v918
          %1065 = vmatpush1.msra.mxu0 %v917
          %1066 = vmatprep.subr.mxu0 %v920
          %1067 = vmatpush1.msra.mxu0 %v919
          %1068 = vmatprep.subr.mxu0 %v922
          %1069 = vmatpush1.msra.mxu0 %v921
          %1070 = vmatprep.subr.mxu0 %v924
          %1071 = vmatpush1.msra.mxu0 %v923
          %1072 = vmatprep.subr.mxu0 %v926
          %1073 = vmatpush1.msra.mxu0 %v925
          %1074 = vmatprep.subr.mxu0 %v928
          %1075 = vmatpush1.msra.mxu0 %v927
          %1076 = vmatprep.subr.mxu0 %v930
          %1077 = vmatpush1.msra.mxu0 %v929
          %1078 = vmatprep.subr.mxu0 %v932
          %1079 = vmatpush1.msra.mxu0 %v931
          %1080 = vmatprep.subr.mxu0 %v934
          %1081 = vmatpush1.msra.mxu0 %v933
          %1082 = vmatprep.subr.mxu0 %v936
          %1083 = vmatpush1.msra.mxu0 %v935
          %1084 = vmatprep.subr.mxu0 %v938
          %1085 = vmatpush1.msra.mxu0 %v937
          %1086 = vmatprep.subr.mxu0 %v940
          %1087 = vmatpush1.msra.mxu0 %v939
          %1088 = vmatprep.subr.mxu0 %v942
          %1089 = vmatpush1.msra.mxu0 %v941
          %1090 = vmatprep.subr.mxu0 %v944
          %1091 = vmatpush1.msra.mxu0 %v943
          %1092 = vmatprep.subr.mxu0 %v946
          %1093 = vmatpush1.msra.mxu0 %v945
          %1094 = vmatprep.subr.mxu0 %v948
          %1095 = vmatpush1.msra.mxu0 %v947
          %1096 = vmatprep.subr.mxu0 %v950
          %1097 = vmatpush1.msra.mxu0 %v949
          %1098 = vmatprep.subr.mxu0 %v952
          %1099 = vmatpush1.msra.mxu0 %v951
          %1100 = vmatprep.subr.mxu0 %v954
          %1101 = vmatpush1.msra.mxu0 %v953
          %1102 = vmatprep.subr.mxu0 %v956
          %1103 = vmatpush1.msra.mxu0 %v955
          %1104 = vmatprep.subr.mxu0 %v958
          %1105 = vmatpush1.msra.mxu0 %v957
          %1106 = vmatprep.subr.mxu0 %v960
          %1107 = vmatpush1.msra.mxu0 %v959
          %1108 = vmatprep.subr.mxu0 %v962
          %1109 = vmatpush1.msra.mxu0 %v961
          %1110 = vmatprep.subr.mxu0 %v964
          %1111 = vmatpush1.msra.mxu0 %v963
          %1112 = vmatprep.subr.mxu0 %v966
          %1113 = vmatpush1.msra.mxu0 %v965
          %1114 = vmatprep.subr.mxu0 %v968
          %1115 = vmatpush1.msra.mxu0 %v967
          %1116 = vmatprep.subr.mxu0 %v970
          %1117 = vmatpush1.msra.mxu0 %v969
          %1118 = vmatprep.mubr.f32.mxu0 %v840
          %1119 = vmatmul.mubr.f32.gmra.mrb[0].mxu0 %v839
          %v1120 = vpop.f32.mrb[0].mxu0
          %v1121 = vadd.f32 %v1050, %v1120
          %v1122 = vpop.f32.mrb[0].mxu0
          %v1123 = vadd.f32 %v1052, %v1122
          %1124 = vdwg.mxu0
          %v1125 = vmul.f32 %v1121, 0.5
          %v1126 = vmul.f32 %v1123, 0.5
          %v1127 = vmul.f32 %v1121, 0.044715
          %v1128 = vmul.f32 %v1123, 0.044715
          %v1129 = vmul.f32 %v1127, %v1121
          %v1130 = vmul.f32 %v1128, %v1123
          %v1131 = vmul.f32 %v1129, %v1121
          %v1132 = vmul.f32 %v1130, %v1123
          %v1133 = vadd.f32 %v1121, %v1131
          %v1134 = vadd.f32 %v1123, %v1132
          %v1135 = vmul.f32 %v1133, 0.7978846
          %v1136 = vmul.f32 %v1134, 0.7978846
          %v1137 = vtanh.pop %v1135
          %v1138 = vtanh.pop %v1136
          %v1139 = vadd.f32 %v1137, 1.0
          %v1140 = vadd.f32 %v1138, 1.0
          %v1141 = vmul.f32 %v1125, %v1139
          %v1142 = vmul.f32 %v1126, %v1140
          %v1143 = vld [vmem:[#allocation9] sm:$0xff]
          %v1144 = vld [vmem:[#allocation9 + $0x8] sm:$0xff]
          %v1145 = vld [vmem:[#allocation9 + $0x10] sm:$0xff]
          %v1146 = vld [vmem:[#allocation9 + $0x18] sm:$0xff]
          %v1147 = vld [vmem:[#allocation9 + $0x20] sm:$0xff]
          %v1148 = vld [vmem:[#allocation9 + $0x28] sm:$0xff]
          %v1149 = vld [vmem:[#allocation9 + $0x30] sm:$0xff]
          %v1150 = vld [vmem:[#allocation9 + $0x38] sm:$0xff]
          %v1151 = vld [vmem:[#allocation9 + $0x40] sm:$0xff]
          %v1152 = vld [vmem:[#allocation9 + $0x48] sm:$0xff]
          %v1153 = vld [vmem:[#allocation9 + $0x50] sm:$0xff]
          %v1154 = vld [vmem:[#allocation9 + $0x58] sm:$0xff]
          %v1155 = vld [vmem:[#allocation9 + $0x60] sm:$0xff]
          %v1156 = vld [vmem:[#allocation9 + $0x68] sm:$0xff]
          %v1157 = vld [vmem:[#allocation9 + $0x70] sm:$0xff]
          %v1158 = vld [vmem:[#allocation9 + $0x78] sm:$0xff]
          %v1159 = vld [vmem:[#allocation9 + $0x80] sm:$0xff]
          %v1160 = vld [vmem:[#allocation9 + $0x88] sm:$0xff]
          %v1161 = vld [vmem:[#allocation9 + $0x90] sm:$0xff]
          %v1162 = vld [vmem:[#allocation9 + $0x98] sm:$0xff]
          %v1163 = vld [vmem:[#allocation9 + $0xa0] sm:$0xff]
          %v1164 = vld [vmem:[#allocation9 + $0xa8] sm:$0xff]
          %v1165 = vld [vmem:[#allocation9 + $0xb0] sm:$0xff]
          %v1166 = vld [vmem:[#allocation9 + $0xb8] sm:$0xff]
          %v1167 = vld [vmem:[#allocation9 + $0xc0] sm:$0xff]
          %v1168 = vld [vmem:[#allocation9 + $0xc8] sm:$0xff]
          %v1169 = vld [vmem:[#allocation9 + $0xd0] sm:$0xff]
          %v1170 = vld [vmem:[#allocation9 + $0xd8] sm:$0xff]
          %v1171 = vld [vmem:[#allocation9 + $0xe0] sm:$0xff]
          %v1172 = vld [vmem:[#allocation9 + $0xe8] sm:$0xff]
          %v1173 = vld [vmem:[#allocation9 + $0xf0] sm:$0xff]
          %v1174 = vld [vmem:[#allocation9 + $0xf8] sm:$0xff]
          %v1175 = vld [vmem:[#allocation11] sm:$0xff]
          %v1176 = vld [vmem:[#allocation11 + $0x8] sm:$0xff]
          %v1177 = vld [vmem:[#allocation11 + $0x10] sm:$0xff]
          %v1178 = vld [vmem:[#allocation11 + $0x18] sm:$0xff]
          %v1179 = vld [vmem:[#allocation11 + $0x20] sm:$0xff]
          %v1180 = vld [vmem:[#allocation11 + $0x28] sm:$0xff]
          %v1181 = vld [vmem:[#allocation11 + $0x30] sm:$0xff]
          %v1182 = vld [vmem:[#allocation11 + $0x38] sm:$0xff]
          %v1183 = vld [vmem:[#allocation11 + $0x40] sm:$0xff]
          %v1184 = vld [vmem:[#allocation11 + $0x48] sm:$0xff]
          %v1185 = vld [vmem:[#allocation11 + $0x50] sm:$0xff]
          %v1186 = vld [vmem:[#allocation11 + $0x58] sm:$0xff]
          %v1187 = vld [vmem:[#allocation11 + $0x60] sm:$0xff]
          %v1188 = vld [vmem:[#allocation11 + $0x68] sm:$0xff]
          %v1189 = vld [vmem:[#allocation11 + $0x70] sm:$0xff]
          %v1190 = vld [vmem:[#allocation11 + $0x78] sm:$0xff]
          %v1191 = vld [vmem:[#allocation11 + $0x80] sm:$0xff]
          %v1192 = vld [vmem:[#allocation11 + $0x88] sm:$0xff]
          %v1193 = vld [vmem:[#allocation11 + $0x90] sm:$0xff]
          %v1194 = vld [vmem:[#allocation11 + $0x98] sm:$0xff]
          %v1195 = vld [vmem:[#allocation11 + $0xa0] sm:$0xff]
          %v1196 = vld [vmem:[#allocation11 + $0xa8] sm:$0xff]
          %v1197 = vld [vmem:[#allocation11 + $0xb0] sm:$0xff]
          %v1198 = vld [vmem:[#allocation11 + $0xb8] sm:$0xff]
          %v1199 = vld [vmem:[#allocation11 + $0xc0] sm:$0xff]
          %v1200 = vld [vmem:[#allocation11 + $0xc8] sm:$0xff]
          %v1201 = vld [vmem:[#allocation11 + $0xd0] sm:$0xff]
          %v1202 = vld [vmem:[#allocation11 + $0xd8] sm:$0xff]
          %v1203 = vld [vmem:[#allocation11 + $0xe0] sm:$0xff]
          %v1204 = vld [vmem:[#allocation11 + $0xe8] sm:$0xff]
          %v1205 = vld [vmem:[#allocation11 + $0xf0] sm:$0xff]
          %v1206 = vld [vmem:[#allocation11 + $0xf8] sm:$0xff]
          %1207 = vmatprep.subr.mxu0 0.0
          %1208 = vmatpush1.msra.mxu0 %v1175
          %1209 = vmatprep.subr.mxu0 0.0
          %1210 = vmatpush1.msra.mxu0 %v1176
          %1211 = vmatprep.subr.mxu0 0.0
          %1212 = vmatpush1.msra.mxu0 %v1177
          %1213 = vmatprep.subr.mxu0 0.0
          %1214 = vmatpush1.msra.mxu0 %v1178
          %1215 = vmatprep.subr.mxu0 0.0
          %1216 = vmatpush1.msra.mxu0 %v1179
          %1217 = vmatprep.subr.mxu0 0.0
          %1218 = vmatpush1.msra.mxu0 %v1180
          %1219 = vmatprep.subr.mxu0 0.0
          %1220 = vmatpush1.msra.mxu0 %v1181
          %1221 = vmatprep.subr.mxu0 0.0
          %1222 = vmatpush1.msra.mxu0 %v1182
          %1223 = vmatprep.subr.mxu0 0.0
          %1224 = vmatpush1.msra.mxu0 %v1183
          %1225 = vmatprep.subr.mxu0 0.0
          %1226 = vmatpush1.msra.mxu0 %v1184
          %1227 = vmatprep.subr.mxu0 0.0
          %1228 = vmatpush1.msra.mxu0 %v1185
          %1229 = vmatprep.subr.mxu0 0.0
          %1230 = vmatpush1.msra.mxu0 %v1186
          %1231 = vmatprep.subr.mxu0 0.0
          %1232 = vmatpush1.msra.mxu0 %v1187
          %1233 = vmatprep.subr.mxu0 0.0
          %1234 = vmatpush1.msra.mxu0 %v1188
          %1235 = vmatprep.subr.mxu0 0.0
          %1236 = vmatpush1.msra.mxu0 %v1189
          %1237 = vmatprep.subr.mxu0 0.0
          %1238 = vmatpush1.msra.mxu0 %v1190
          %1239 = vmatprep.subr.mxu0 0.0
          %1240 = vmatpush1.msra.mxu0 %v1191
          %1241 = vmatprep.subr.mxu0 0.0
          %1242 = vmatpush1.msra.mxu0 %v1192
          %1243 = vmatprep.subr.mxu0 0.0
          %1244 = vmatpush1.msra.mxu0 %v1193
          %1245 = vmatprep.subr.mxu0 0.0
          %1246 = vmatpush1.msra.mxu0 %v1194
          %1247 = vmatprep.subr.mxu0 0.0
          %1248 = vmatpush1.msra.mxu0 %v1195
          %1249 = vmatprep.subr.mxu0 0.0
          %1250 = vmatpush1.msra.mxu0 %v1196
          %1251 = vmatprep.subr.mxu0 0.0
          %1252 = vmatpush1.msra.mxu0 %v1197
          %1253 = vmatprep.subr.mxu0 0.0
          %1254 = vmatpush1.msra.mxu0 %v1198
          %1255 = vmatprep.subr.mxu0 0.0
          %1256 = vmatpush1.msra.mxu0 %v1199
          %1257 = vmatprep.subr.mxu0 0.0
          %1258 = vmatpush1.msra.mxu0 %v1200
          %1259 = vmatprep.subr.mxu0 0.0
          %1260 = vmatpush1.msra.mxu0 %v1201
          %1261 = vmatprep.subr.mxu0 0.0
          %1262 = vmatpush1.msra.mxu0 %v1202
          %1263 = vmatprep.subr.mxu0 0.0
          %1264 = vmatpush1.msra.mxu0 %v1203
          %1265 = vmatprep.subr.mxu0 0.0
          %1266 = vmatpush1.msra.mxu0 %v1204
          %1267 = vmatprep.subr.mxu0 0.0
          %1268 = vmatpush1.msra.mxu0 %v1205
          %1269 = vmatprep.subr.mxu0 0.0
          %1270 = vmatpush1.msra.mxu0 %v1206
          %1271 = vmatprep.mubr.f32.mxu0 %v842
          %1272 = vmatmul.mubr.f32.gmra.mrb[0].mxu0 %v841
          %v1273 = vpop.f32.mrb[0].mxu0
          %v1274 = vadd.f32 0.0, %v1273
          %v1275 = vpop.f32.mrb[0].mxu0
          %1276 = vdwg.mxu0
          %1277 = vmatprep.subr.mxu0 0.0
          %1278 = vmatpush1.msra.mxu0 %v1143
          %1279 = vmatprep.subr.mxu0 0.0
          %1280 = vmatpush1.msra.mxu0 %v1144
          %1281 = vmatprep.subr.mxu0 0.0
          %1282 = vmatpush1.msra.mxu0 %v1145
          %1283 = vmatprep.subr.mxu0 0.0
          %1284 = vmatpush1.msra.mxu0 %v1146
          %1285 = vmatprep.subr.mxu0 0.0
          %1286 = vmatpush1.msra.mxu0 %v1147
          %1287 = vmatprep.subr.mxu0 0.0
          %1288 = vmatpush1.msra.mxu0 %v1148
          %1289 = vmatprep.subr.mxu0 0.0
          %1290 = vmatpush1.msra.mxu0 %v1149
          %1291 = vmatprep.subr.mxu0 0.0
          %1292 = vmatpush1.msra.mxu0 %v1150
          %1293 = vmatprep.subr.mxu0 0.0
          %1294 = vmatpush1.msra.mxu0 %v1151
          %1295 = vmatprep.subr.mxu0 0.0
          %1296 = vmatpush1.msra.mxu0 %v1152
          %1297 = vmatprep.subr.mxu0 0.0
          %1298 = vmatpush1.msra.mxu0 %v1153
          %1299 = vmatprep.subr.mxu0 0.0
          %1300 = vmatpush1.msra.mxu0 %v1154
          %1301 = vmatprep.subr.mxu0 0.0
          %1302 = vmatpush1.msra.mxu0 %v1155
          %1303 = vmatprep.subr.mxu0 0.0
          %1304 = vmatpush1.msra.mxu0 %v1156
          %1305 = vmatprep.subr.mxu0 0.0
          %1306 = vmatpush1.msra.mxu0 %v1157
          %1307 = vmatprep.subr.mxu0 0.0
          %1308 = vmatpush1.msra.mxu0 %v1158
          %1309 = vmatprep.subr.mxu0 0.0
          %1310 = vmatpush1.msra.mxu0 %v1159
          %1311 = vmatprep.subr.mxu0 0.0
          %1312 = vmatpush1.msra.mxu0 %v1160
          %1313 = vmatprep.subr.mxu0 0.0
          %1314 = vmatpush1.msra.mxu0 %v1161
          %1315 = vmatprep.subr.mxu0 0.0
          %1316 = vmatpush1.msra.mxu0 %v1162
          %1317 = vmatprep.subr.mxu0 0.0
          %1318 = vmatpush1.msra.mxu0 %v1163
          %1319 = vmatprep.subr.mxu0 0.0
          %1320 = vmatpush1.msra.mxu0 %v1164
          %1321 = vmatprep.subr.mxu0 0.0
          %1322 = vmatpush1.msra.mxu0 %v1165
          %1323 = vmatprep.subr.mxu0 0.0
          %1324 = vmatpush1.msra.mxu0 %v1166
          %1325 = vmatprep.subr.mxu0 0.0
          %1326 = vmatpush1.msra.mxu0 %v1167
          %1327 = vmatprep.subr.mxu0 0.0
          %1328 = vmatpush1.msra.mxu0 %v1168
          %1329 = vmatprep.subr.mxu0 0.0
          %1330 = vmatpush1.msra.mxu0 %v1169
          %1331 = vmatprep.subr.mxu0 0.0
          %1332 = vmatpush1.msra.mxu0 %v1170
          %1333 = vmatprep.subr.mxu0 0.0
          %1334 = vmatpush1.msra.mxu0 %v1171
          %1335 = vmatprep.subr.mxu0 0.0
          %1336 = vmatpush1.msra.mxu0 %v1172
          %1337 = vmatprep.subr.mxu0 0.0
          %1338 = vmatpush1.msra.mxu0 %v1173
          %1339 = vmatprep.subr.mxu0 0.0
          %1340 = vmatpush1.msra.mxu0 %v1174
          %1341 = vmatprep.mubr.f32.mxu0 %v1142
          %1342 = vmatmul.mubr.f32.gmra.mrb[0].mxu0 %v1141
          %v1343 = vpop.f32.mrb[0].mxu0
          %v1344 = vadd.f32 %v1274, %v1343
          %v1345 = vpop.f32.mrb[0].mxu0
          %1346 = vdwg.mxu0
          %v1347 = vld [vmem:[%s7] sm:$0x1]
          %v1349 = vlaneseq
          %v1350 = vshrl.u32 %v1349, 7
          %v1351 = vsub.s32 0, %v1350
          %v1352 = vrot.slane %v1347, %v1351
          %v1354 = vadd.f32 %v1344, %v1352
          %1355 = vst [vmem:[%s402] sm:$0xff] %v1354
        $region80: #{tpu_custom_call.1} parent=51 // pred_fallthru
          _
        %s1356 = sand.u32 %s227, 1
        %s1357 = scalar_lea.sflag [#allocation5], %s1356
        %s1358 = sand.u32 %s227, 1
        %s1359 = smul.addr %s1358, 8
        %s1360 = scalar_lea.vmem [#allocation12], %s1359
        // Predicated region
        $region81: #{tpu_custom_call.1} parent=51 // pred_check
          %p1361 = pneg %p237
        $region82: #{tpu_custom_call.1} parent=51 // pred_check_branch
          %1363 = sbr.rel (%p1361) target = $region84
        $region83: #{tpu_custom_call.1} parent=51 // pred_region
          %s1365 = ssub.s32 128, 128
          %1366 = vsyncadd %s1357, %s1365
          %s1367 = smul.addr %s31, 128
          %s1368 = scalar_lea.hbm %s8, %s1367
          %s1370 = sshll.u32 %s1360, 4
          %s1371 = int_to_ptr.vmem [resolvable:$true] %s1370
          %1373 = dma.vmem_to_hbm [thread:$0]  %s1371, 128, %s1368, %s1357
        $region84: #{tpu_custom_call.1} parent=51 // pred_fallthru
          _
      $region52: #{tpu_custom_call.1} parent=5 // pred_fallthru
        _
      %p1374 = scmp.le.s32.totalorder 2, %s22
      // Predicated region
      $region85: #{tpu_custom_call.1} parent=5 // pred_check
        %p1375 = pneg %p1374
      $region86: #{tpu_custom_call.1} parent=5 // pred_check_branch
        %1377 = sbr.rel (%p1375) target = $region88
      $region87: #{tpu_custom_call.1} parent=5 // pred_region
        %s1378 = ssub.s32 %s22, 2
        // Predicated region
        $region89: #{tpu_custom_call.1} parent=87 // pred_check
          %p1379 = pneg %p243
        $region90: #{tpu_custom_call.1} parent=87 // pred_check_branch
          %1381 = sbr.rel (%p1379) target = $region92
        $region91: #{tpu_custom_call.1} parent=87 // pred_region
          %s1382 = sand.u32 %s228, 1
          %s1383 = scalar_lea.sflag [#allocation5], %s1382
          %s1384 = sand.u32 %s228, 1
          %s1385 = smul.addr %s1384, 8
          %s1386 = scalar_lea.vmem [#allocation12], %s1385
          %1387 = dma.done %s1383, 128
        $region92: #{tpu_custom_call.1} parent=87 // pred_fallthru
          _
      $region88: #{tpu_custom_call.1} parent=5 // pred_fallthru
        _
    $region6: #{tpu_custom_call.1} parent=1 // loop_footer
      %s26 = sadd.s32 1, %s22
    $region7: #{tpu_custom_call.1} parent=1 // loop_footer_branch
      %21 = sbr.rel target = $region3
    $region8: #{tpu_custom_call.1} parent=1 // loop_exit
      _
    %1388 = vsyncpa [#allocation4], 1
    %s1389 = scalar_lea.sflag [#allocation4], 1
    %1390 = vsyncpa %s1389, 1
    %1391 = vsyncpa [#allocation7], 1
    %1392 = vsyncpa [#allocation10], 1
    %1393 = vsyncpa [#allocation5], 1
    %s1394 = scalar_lea.sflag [#allocation5], 1
    %1395 = vsyncpa %s1394, 1

</llo_original>
